<compile_context>
chip_gen: v7x
topology: tpu7x:2x2x1
jax: 0.10.0
libtpu: 0.0.40
codegen_flags: <defaults>
</compile_context>

<pallas_src>
import math

import numpy as np
import jax
import jax.numpy as jnp
from jax.experimental import pallas as pl
from jax.experimental.pallas import tpu as pltpu


def _round_up(x, m):
    return ((x + m - 1) // m) * m


# ------------------------------ Pallas kernel --------------------------------

def _make_kernel(dim_sizes, hidden_dim, eps):
    """Kernel over one row tile.

    Inputs : h (TN, D); one (TN, s_l*D) block per l; 8 weight/bias blocks.
    Outputs: h_out (TN, D); one (TN, s_l*D) block per l.
    """
    num_x = len(dim_sizes)
    n_in = 1 + num_x + 8
    D = hidden_dim
    f32 = jnp.float32

    def kernel(*refs):
        h_ref = refs[0]
        x_refs = refs[1:1 + num_x]
        (wvu_ref, w1h_ref, w1n_ref, b1_ref,
         w2a_ref, b2a_ref, w2b_ref, b2b_ref) = refs[1 + num_x:n_in]
        h_out_ref = refs[n_in]
        x_out_refs = refs[n_in + 1:]

        wvu = wvu_ref[...]                           # (D, D), storage dtype
        h = h_ref[...].astype(f32)                   # (TN, D)
        TN = h.shape[0]

        # X_p = W_vu(X): one small 2-D MXU matmul per spherical component.
        xs, xps = [], []
        sumsq = jnp.zeros((TN, D), f32)
        for x_ref, s in zip(x_refs, dim_sizes):
            x = x_ref[...]                           # (TN, s*D), storage dtype
            xp_l = []
            for j in range(s):
                xj = x[:, j * D:(j + 1) * D]         # (TN, D) static lane slice
                xpj = jnp.dot(xj, wvu, preferred_element_type=f32)
                sumsq = sumsq + xpj * xpj
                xp_l.append(xpj)
            xs.append(x)
            xps.append(xp_l)

        # X_pn = sqrt(sum over all components of X_p^2 + eps)
        xpn = jnp.sqrt(sumsq + eps)                  # (TN, D)

        # gamma_m MLP with pre-split weights:
        #   y1 = SiLU(h @ w1h + X_pn @ w1n + b1); m1 = y1 @ w2a + b2a; m2 = ...
        pre = (jnp.dot(h, w1h_ref[...], preferred_element_type=f32)
               + jnp.dot(xpn, w1n_ref[...], preferred_element_type=f32)
               + b1_ref[...])
        y1 = pre * jax.nn.sigmoid(pre)               # SiLU
        m1 = jnp.dot(y1, w2a_ref[...], preferred_element_type=f32) + b2a_ref[...]
        m2 = jnp.dot(y1, w2b_ref[...], preferred_element_type=f32) + b2b_ref[...]

        # h <- h + m1 ;  X_l <- X_l + m2 * X_p_l
        h_out_ref[...] = (h + m1).astype(h_out_ref.dtype)
        for x, xp_l, x_out_ref, s in zip(xs, xps, x_out_refs, dim_sizes):
            pieces = [(x[:, j * D:(j + 1) * D].astype(f32)
                       + m2 * xp_l[j]).astype(x_out_ref.dtype)
                      for j in range(s)]
            x_out_ref[...] = jnp.concatenate(pieces, axis=-1)

    return kernel


# --------------------------------- wrapper -----------------------------------

def eqff_forward(h, X_list, params, *, eps=1e-8, row_tile=1024):
    """EQFF forward.  h: (B, N, D); X_list: list of (B, N, 2l+1, D), l=1..lmax."""
    wvu_T, w1_T, b1, w2_T, b2 = params
    B, N, D = h.shape
    dim_sizes = [int(x.shape[-2]) for x in X_list]
    M = sum(dim_sizes)
    BN = B * N
    dt = h.dtype
    bytes_s = jnp.dtype(dt).itemsize

    # Pre-split gamma weights (aligned halves); W_vu in storage dtype so the
    # big contraction runs as a bf16 MXU matmul (f32 acc) when inputs are bf16.
    w1h, w1n = w1_T[:D, :], w1_T[D:, :]              # (D, D) each, f32
    w2a, w2b = w2_T[:, :D], w2_T[:, D:]              # (D, D) each, f32
    b2a, b2b = b2[:, :D], b2[:, D:]                  # (1, D) each, f32
    wvu = wvu_T.astype(dt)
    weights = (wvu, w1h, w1n, b1, w2a, b2a, w2b, b2b)

    # Free (dim-merging) reshapes only -- no concat, no split, no pad.
    h2 = h.reshape(BN, D)
    X2 = [x.reshape(BN, s * D) for x, s in zip(X_list, dim_sizes)]

    # --------------------- row-tile / VMEM policy ----------------------------
    row_align = 8 if bytes_s >= 4 else (16 if bytes_s == 2 else 32)
    try:
        vmem_cap = int(pltpu.get_tpu_info().vmem_capacity_bytes)
    except Exception:
        vmem_cap = 64 * 1024 * 1024                  # v7x per-core VMEM
    vmem_limit = int(0.75 * vmem_cap)                # leave compiler headroom

    def est_vmem(tn):
        stream = 2 * 2 * tn * D * (1 + M) * bytes_s  # h + X, in + out, dbl-buf
        wbytes = 2 * (D * D * bytes_s + (4 * D * D + 3 * D) * 4)
        interm = 4 * tn * D * (2 * M + 8)            # xp (f32), x copies, temps
        return stream + wbytes + interm

    TN = min(_round_up(max(int(row_tile), row_align), row_align),
             _round_up(BN, row_align))
    # Keep >=2 grid steps (>=4 when BN allows) so v7x's 2nd TensorCore has work.
    if BN >= 4 * row_align:
        TN = min(TN, _round_up(pl.cdiv(BN, 4), row_align))
    elif BN > row_align:
        TN = min(TN, _round_up(pl.cdiv(BN, 2), row_align))
    while TN > row_align and est_vmem(TN) > 0.9 * vmem_limit:
        nxt = max(row_align, (TN // 2) // row_align * row_align)
        if nxt >= TN:
            break
        TN = nxt
    grid = (pl.cdiv(BN, TN),)

    kernel = _make_kernel(dim_sizes, D, eps)

    flops = (2 * BN * M * D * D + 2 * BN * (2 * D) * D + 2 * BN * D * (2 * D)
             + 6 * BN * M * D + 8 * BN * D)
    cost = pl.CostEstimate(
        flops=int(flops),
        transcendentals=int(2 * BN * D),
        bytes_accessed=int(2 * BN * D * (1 + M) * bytes_s
                           + (5 * D * D + 5 * D) * 4))

    def _call(weight_pipeline_mode):
        def wspec(shape):
            if weight_pipeline_mode is None:
                return pl.BlockSpec(shape, lambda i: (0,) * len(shape))
            return pl.BlockSpec(shape, lambda i: (0,) * len(shape),
                                pipeline_mode=weight_pipeline_mode)

        in_specs = ([pl.BlockSpec((TN, D), lambda i: (i, 0))]
                    + [pl.BlockSpec((TN, s * D), lambda i: (i, 0))
                       for s in dim_sizes]
                    + [wspec(tuple(w.shape)) for w in weights])
        out_specs = ([pl.BlockSpec((TN, D), lambda i: (i, 0))]
                     + [pl.BlockSpec((TN, s * D), lambda i: (i, 0))
                        for s in dim_sizes])
        out_shape = tuple([jax.ShapeDtypeStruct((BN, D), dt)]
                          + [jax.ShapeDtypeStruct((BN, s * D), dt)
                             for s in dim_sizes])
        return pl.pallas_call(
            kernel,
            out_shape=out_shape,
            grid_spec=pltpu.PrefetchScalarGridSpec(
                num_scalar_prefetch=0,
                grid=grid,
                in_specs=in_specs,
                out_specs=out_specs),
            compiler_params=pltpu.CompilerParams(
                dimension_semantics=("parallel",),
                vmem_limit_bytes=vmem_limit),
            cost_estimate=cost,
        )(h2, *X2, *weights)

    try:
        # Weight blocks never change across grid steps -> single buffer.
        outs = _call(pl.Buffered(1))
    except Exception:
        # TODO(synk): pipeline_mode=pl.Buffered(1) rejected on this jax
        # version; fall back to default double-buffered weight blocks.
        outs = _call(None)

    h_out = outs[0].reshape(B, N, D)
    X_out = [o.reshape(B, N, s, D) for o, s in zip(outs[1:], dim_sizes)]
    return h_out, X_out


# ----------------------- deterministic parameter init ------------------------

def xavier_uniform(key, shape_out_in):
    out_dim, in_dim = shape_out_in
    a = math.sqrt(6.0 / (in_dim + out_dim))
    return jax.random.uniform(key, (out_dim, in_dim), jnp.float32,
                              minval=-a, maxval=a)


def make_params(key, hidden_dim):
    d = hidden_dim
    k1, k2, k3 = jax.random.split(key, 3)
    # torch Linear stores weight as (out, in); forward is x @ W.T + b.
    W_vu = xavier_uniform(k1, (d, d))                # Dense(d, d, bias=False)
    W1 = xavier_uniform(k2, (d, 2 * d))              # Dense(2d, d, silu)
    W2 = xavier_uniform(k3, (2 * d, d))              # Dense(d, 2d)
    b1 = jnp.zeros((1, d), jnp.float32)
    b2 = jnp.zeros((1, 2 * d), jnp.float32)
    return (W_vu.T, W1.T, b1, W2.T, b2)


# ------------------------------- pure-JAX ref ---------------------------------

def eqff_ref(h, X_list, params, eps=1e-8):
    wvu_T, w1_T, b1, w2_T, b2 = params
    dim_sizes = [x.shape[-2] for x in X_list]
    h4 = h[:, :, None, :]
    Xc = jnp.concatenate(X_list, axis=-2)
    Xp = Xc @ wvu_T
    Xpn = jnp.sqrt(jnp.sum(Xp ** 2, axis=-2, keepdims=True) + eps)
    ctx = jnp.concatenate([h4, Xpn], axis=-1)
    y1 = jax.nn.silu(ctx @ w1_T + b1[0])
    y2 = y1 @ w2_T + b2[0]
    d = h.shape[-1]
    m1, m2 = y2[..., :d], y2[..., d:]
    h_out = (h4 + m1)[:, :, 0, :]
    Xc_out = Xc + m2 * Xp
    offs = np.cumsum([0] + dim_sizes)
    X_out = [Xc_out[:, :, offs[i]:offs[i + 1], :]
             for i in range(len(dim_sizes))]
    return h_out, X_out


# ----------------------------------- main -------------------------------------

if __name__ == "__main__":
    eps = 1e-8
    root_key = jax.random.PRNGKey(0)

    def run_case(case_id, B, N, hidden_dim, lmax, row_tile,
                 dtype=jnp.float32, rtol=1e-5, atol=1e-5):
        dim_sizes = [2 * l + 1 for l in range(1, lmax + 1)]
        key = jax.random.fold_in(root_key, case_id)
        kp, kh, *kx = jax.random.split(key, 2 + lmax)

        params = make_params(kp, hidden_dim)
        h = jax.random.normal(kh, (B, N, hidden_dim), jnp.float32).astype(dtype)
        X = [jax.random.normal(k, (B, N, s, hidden_dim), jnp.float32).astype(dtype)
             for k, s in zip(kx, dim_sizes)]

        h_out, X_out = eqff_forward(h, X, params, eps=eps, row_tile=row_tile)
        h_out = jax.block_until_ready(h_out)
        X_out = [jax.block_until_ready(x) for x in X_out]

        # Reference on the same storage-rounded inputs / W_vu, f32 math.
        wvu_T, w1_T, b1, w2_T, b2 = params
        ref_params = (wvu_T.astype(dtype).astype(jnp.float32), w1_T, b1, w2_T, b2)
        h_ref, X_ref = eqff_ref(h.astype(jnp.float32),
                                [x.astype(jnp.float32) for x in X],
                                ref_params, eps=eps)

        assert h_out.shape == h_ref.shape and h_out.dtype == dtype
        assert jnp.allclose(h_out.astype(jnp.float32), h_ref, rtol=rtol, atol=atol)
        for a, b in zip(X_out, X_ref):
            assert a.shape == b.shape and a.dtype == dtype
            assert jnp.allclose(a.astype(jnp.float32), b, rtol=rtol, atol=atol)

    # multi-step grid, larger row tile
    run_case(0, B=8, N=16, hidden_dim=32, lmax=2, row_tile=256)
    # minimal row tile (exercises the software pipeline)
    run_case(1, B=2, N=8, hidden_dim=32, lmax=2, row_tile=8)
    # BN not a multiple of the tile (ragged last block, no padding)
    run_case(2, B=2, N=9, hidden_dim=32, lmax=2, row_tile=256)
    # lmax=1 (single X tensor) with a ragged tail
    run_case(3, B=1, N=12, hidden_dim=32, lmax=1, row_tile=64)
    # bf16 storage (halved HBM traffic), f32 math inside the kernel
    run_case(4, B=4, N=8, hidden_dim=32, lmax=2, row_tile=256,
             dtype=jnp.bfloat16, rtol=2e-2, atol=2e-2)

    print("KERNEL_OK")
</pallas_src>

<mosaic_0001>
module attributes {stable_mosaic.version = 11 : i64} {
  func.func @kernel(%arg0: i32, %arg1: memref<32x32xf32, #tpu.memory_space<vmem>>, %arg2: memref<32x96xf32, #tpu.memory_space<vmem>>, %arg3: memref<32x160xf32, #tpu.memory_space<vmem>>, %arg4: memref<32x32xf32, #tpu.memory_space<vmem>>, %arg5: memref<32x32xf32, #tpu.memory_space<vmem>>, %arg6: memref<32x32xf32, #tpu.memory_space<vmem>>, %arg7: memref<1x32xf32, #tpu.memory_space<vmem>>, %arg8: memref<32x32xf32, #tpu.memory_space<vmem>>, %arg9: memref<1x32xf32, #tpu.memory_space<vmem>>, %arg10: memref<32x32xf32, #tpu.memory_space<vmem>>, %arg11: memref<1x32xf32, #tpu.memory_space<vmem>>, %arg12: memref<32x32xf32, #tpu.memory_space<vmem>>, %arg13: memref<32x96xf32, #tpu.memory_space<vmem>>, %arg14: memref<32x160xf32, #tpu.memory_space<vmem>>) attributes {dimension_semantics = [#tpu.dimension_semantics<parallel>], iteration_bounds = array<i64: 4>, scalar_prefetch = 0 : i64, scratch_operands = 0 : i64, tpu.core_type = #tpu.core_type<tc>, window_params = [{transform_indices = @transform_0, window_bounds = array<i64: 32, 32>}, {transform_indices = @transform_1, window_bounds = array<i64: 32, 96>}, {transform_indices = @transform_2, window_bounds = array<i64: 32, 160>}, {pipeline_mode = #tpu.pipeline_mode<synchronous>, transform_indices = @transform_3, window_bounds = array<i64: 32, 32>}, {pipeline_mode = #tpu.pipeline_mode<synchronous>, transform_indices = @transform_4, window_bounds = array<i64: 32, 32>}, {pipeline_mode = #tpu.pipeline_mode<synchronous>, transform_indices = @transform_5, window_bounds = array<i64: 32, 32>}, {pipeline_mode = #tpu.pipeline_mode<synchronous>, transform_indices = @transform_6, window_bounds = array<i64: 1, 32>}, {pipeline_mode = #tpu.pipeline_mode<synchronous>, transform_indices = @transform_7, window_bounds = array<i64: 32, 32>}, {pipeline_mode = #tpu.pipeline_mode<synchronous>, transform_indices = @transform_8, window_bounds = array<i64: 1, 32>}, {pipeline_mode = #tpu.pipeline_mode<synchronous>, transform_indices = @transform_9, window_bounds = array<i64: 32, 32>}, {pipeline_mode = #tpu.pipeline_mode<synchronous>, transform_indices = @transform_10, window_bounds = array<i64: 1, 32>}, {transform_indices = @transform_11, window_bounds = array<i64: 32, 32>}, {transform_indices = @transform_12, window_bounds = array<i64: 32, 96>}, {transform_indices = @transform_13, window_bounds = array<i64: 32, 160>}]} {
    %c0 = arith.constant 0 : index
    %c0_0 = arith.constant 0 : index
    %0 = vector.load %arg4[%c0, %c0_0] : memref<32x32xf32, #tpu.memory_space<vmem>>, vector<32x32xf32>
    %c0_1 = arith.constant 0 : index
    %c0_2 = arith.constant 0 : index
    %1 = vector.load %arg1[%c0_1, %c0_2] : memref<32x32xf32, #tpu.memory_space<vmem>>, vector<32x32xf32>
    %cst = arith.constant 0.000000e+00 : f32
    %2 = vector.broadcast %cst : f32 to vector<32x32xf32>
    %c0_3 = arith.constant 0 : index
    %c0_4 = arith.constant 0 : index
    %3 = vector.load %arg2[%c0_3, %c0_4] : memref<32x96xf32, #tpu.memory_space<vmem>>, vector<32x96xf32>
    %4 = vector.extract_strided_slice %3 {offsets = [0, 0], sizes = [32, 32], strides = [1, 1]} : vector<32x96xf32> to vector<32x32xf32>
    %cst_5 = arith.constant dense<0.000000e+00> : vector<32x32xf32>
    %5 = tpu.matmul %4, %0, %cst_5 {dimension_numbers = #tpu.dot_dimension_numbers<[1], [0], [0], [1], [0, 0, 1, 1], [], []>} : vector<32x32xf32>, vector<32x32xf32>, vector<32x32xf32> -> vector<32x32xf32>
    %6 = arith.mulf %5, %5 : vector<32x32xf32>
    %7 = arith.addf %2, %6 : vector<32x32xf32>
    %8 = vector.extract_strided_slice %3 {offsets = [0, 32], sizes = [32, 32], strides = [1, 1]} : vector<32x96xf32> to vector<32x32xf32>
    %cst_6 = arith.constant dense<0.000000e+00> : vector<32x32xf32>
    %9 = tpu.matmul %8, %0, %cst_6 {dimension_numbers = #tpu.dot_dimension_numbers<[1], [0], [0], [1], [0, 0, 1, 1], [], []>} : vector<32x32xf32>, vector<32x32xf32>, vector<32x32xf32> -> vector<32x32xf32>
    %10 = arith.mulf %9, %9 : vector<32x32xf32>
    %11 = arith.addf %7, %10 : vector<32x32xf32>
    %12 = vector.extract_strided_slice %3 {offsets = [0, 64], sizes = [32, 32], strides = [1, 1]} : vector<32x96xf32> to vector<32x32xf32>
    %cst_7 = arith.constant dense<0.000000e+00> : vector<32x32xf32>
    %13 = tpu.matmul %12, %0, %cst_7 {dimension_numbers = #tpu.dot_dimension_numbers<[1], [0], [0], [1], [0, 0, 1, 1], [], []>} : vector<32x32xf32>, vector<32x32xf32>, vector<32x32xf32> -> vector<32x32xf32>
    %14 = arith.mulf %13, %13 : vector<32x32xf32>
    %15 = arith.addf %11, %14 : vector<32x32xf32>
    %c0_8 = arith.constant 0 : index
    %c0_9 = arith.constant 0 : index
    %16 = vector.load %arg3[%c0_8, %c0_9] : memref<32x160xf32, #tpu.memory_space<vmem>>, vector<32x160xf32>
    %17 = vector.extract_strided_slice %16 {offsets = [0, 0], sizes = [32, 32], strides = [1, 1]} : vector<32x160xf32> to vector<32x32xf32>
    %cst_10 = arith.constant dense<0.000000e+00> : vector<32x32xf32>
    %18 = tpu.matmul %17, %0, %cst_10 {dimension_numbers = #tpu.dot_dimension_numbers<[1], [0], [0], [1], [0, 0, 1, 1], [], []>} : vector<32x32xf32>, vector<32x32xf32>, vector<32x32xf32> -> vector<32x32xf32>
    %19 = arith.mulf %18, %18 : vector<32x32xf32>
    %20 = arith.addf %15, %19 : vector<32x32xf32>
    %21 = vector.extract_strided_slice %16 {offsets = [0, 32], sizes = [32, 32], strides = [1, 1]} : vector<32x160xf32> to vector<32x32xf32>
    %cst_11 = arith.constant dense<0.000000e+00> : vector<32x32xf32>
    %22 = tpu.matmul %21, %0, %cst_11 {dimension_numbers = #tpu.dot_dimension_numbers<[1], [0], [0], [1], [0, 0, 1, 1], [], []>} : vector<32x32xf32>, vector<32x32xf32>, vector<32x32xf32> -> vector<32x32xf32>
    %23 = arith.mulf %22, %22 : vector<32x32xf32>
    %24 = arith.addf %20, %23 : vector<32x32xf32>
    %25 = vector.extract_strided_slice %16 {offsets = [0, 64], sizes = [32, 32], strides = [1, 1]} : vector<32x160xf32> to vector<32x32xf32>
    %cst_12 = arith.constant dense<0.000000e+00> : vector<32x32xf32>
    %26 = tpu.matmul %25, %0, %cst_12 {dimension_numbers = #tpu.dot_dimension_numbers<[1], [0], [0], [1], [0, 0, 1, 1], [], []>} : vector<32x32xf32>, vector<32x32xf32>, vector<32x32xf32> -> vector<32x32xf32>
    %27 = arith.mulf %26, %26 : vector<32x32xf32>
    %28 = arith.addf %24, %27 : vector<32x32xf32>
    %29 = vector.extract_strided_slice %16 {offsets = [0, 96], sizes = [32, 32], strides = [1, 1]} : vector<32x160xf32> to vector<32x32xf32>
    %cst_13 = arith.constant dense<0.000000e+00> : vector<32x32xf32>
    %30 = tpu.matmul %29, %0, %cst_13 {dimension_numbers = #tpu.dot_dimension_numbers<[1], [0], [0], [1], [0, 0, 1, 1], [], []>} : vector<32x32xf32>, vector<32x32xf32>, vector<32x32xf32> -> vector<32x32xf32>
    %31 = arith.mulf %30, %30 : vector<32x32xf32>
    %32 = arith.addf %28, %31 : vector<32x32xf32>
    %33 = vector.extract_strided_slice %16 {offsets = [0, 128], sizes = [32, 32], strides = [1, 1]} : vector<32x160xf32> to vector<32x32xf32>
    %cst_14 = arith.constant dense<0.000000e+00> : vector<32x32xf32>
    %34 = tpu.matmul %33, %0, %cst_14 {dimension_numbers = #tpu.dot_dimension_numbers<[1], [0], [0], [1], [0, 0, 1, 1], [], []>} : vector<32x32xf32>, vector<32x32xf32>, vector<32x32xf32> -> vector<32x32xf32>
    %35 = arith.mulf %34, %34 : vector<32x32xf32>
    %36 = arith.addf %32, %35 : vector<32x32xf32>
    %cst_15 = arith.constant 9.99999993E-9 : f32
    %37 = vector.broadcast %cst_15 : f32 to vector<32x32xf32>
    %38 = arith.addf %36, %37 : vector<32x32xf32>
    %39 = math.sqrt %38 : vector<32x32xf32>
    %c0_16 = arith.constant 0 : index
    %c0_17 = arith.constant 0 : index
    %40 = vector.load %arg5[%c0_16, %c0_17] : memref<32x32xf32, #tpu.memory_space<vmem>>, vector<32x32xf32>
    %cst_18 = arith.constant dense<0.000000e+00> : vector<32x32xf32>
    %41 = tpu.matmul %1, %40, %cst_18 {dimension_numbers = #tpu.dot_dimension_numbers<[1], [0], [0], [1], [0, 0, 1, 1], [], []>} : vector<32x32xf32>, vector<32x32xf32>, vector<32x32xf32> -> vector<32x32xf32>
    %c0_19 = arith.constant 0 : index
    %c0_20 = arith.constant 0 : index
    %42 = vector.load %arg6[%c0_19, %c0_20] : memref<32x32xf32, #tpu.memory_space<vmem>>, vector<32x32xf32>
    %cst_21 = arith.constant dense<0.000000e+00> : vector<32x32xf32>
    %43 = tpu.matmul %39, %42, %cst_21 {dimension_numbers = #tpu.dot_dimension_numbers<[1], [0], [0], [1], [0, 0, 1, 1], [], []>} : vector<32x32xf32>, vector<32x32xf32>, vector<32x32xf32> -> vector<32x32xf32>
    %44 = arith.addf %41, %43 : vector<32x32xf32>
    %c0_22 = arith.constant 0 : index
    %c0_23 = arith.constant 0 : index
    %45 = vector.load %arg7[%c0_22, %c0_23] : memref<1x32xf32, #tpu.memory_space<vmem>>, vector<1x32xf32>
    %46 = vector.broadcast %45 : vector<1x32xf32> to vector<32x32xf32>
    %47 = arith.addf %44, %46 : vector<32x32xf32>
    %48 = arith.negf %47 : vector<32x32xf32>
    %49 = math.exp %48 : vector<32x32xf32>
    %cst_24 = arith.constant 1.000000e+00 : f32
    %50 = vector.broadcast %cst_24 : f32 to vector<32x32xf32>
    %51 = arith.addf %50, %49 : vector<32x32xf32>
    %52 = arith.divf %50, %51 : vector<32x32xf32>
    %53 = arith.mulf %47, %52 : vector<32x32xf32>
    %c0_25 = arith.constant 0 : index
    %c0_26 = arith.constant 0 : index
    %54 = vector.load %arg8[%c0_25, %c0_26] : memref<32x32xf32, #tpu.memory_space<vmem>>, vector<32x32xf32>
    %cst_27 = arith.constant dense<0.000000e+00> : vector<32x32xf32>
    %55 = tpu.matmul %53, %54, %cst_27 {dimension_numbers = #tpu.dot_dimension_numbers<[1], [0], [0], [1], [0, 0, 1, 1], [], []>} : vector<32x32xf32>, vector<32x32xf32>, vector<32x32xf32> -> vector<32x32xf32>
    %c0_28 = arith.constant 0 : index
    %c0_29 = arith.constant 0 : index
    %56 = vector.load %arg9[%c0_28, %c0_29] : memref<1x32xf32, #tpu.memory_space<vmem>>, vector<1x32xf32>
    %57 = vector.broadcast %56 : vector<1x32xf32> to vector<32x32xf32>
    %58 = arith.addf %55, %57 : vector<32x32xf32>
    %c0_30 = arith.constant 0 : index
    %c0_31 = arith.constant 0 : index
    %59 = vector.load %arg10[%c0_30, %c0_31] : memref<32x32xf32, #tpu.memory_space<vmem>>, vector<32x32xf32>
    %cst_32 = arith.constant dense<0.000000e+00> : vector<32x32xf32>
    %60 = tpu.matmul %53, %59, %cst_32 {dimension_numbers = #tpu.dot_dimension_numbers<[1], [0], [0], [1], [0, 0, 1, 1], [], []>} : vector<32x32xf32>, vector<32x32xf32>, vector<32x32xf32> -> vector<32x32xf32>
    %c0_33 = arith.constant 0 : index
    %c0_34 = arith.constant 0 : index
    %61 = vector.load %arg11[%c0_33, %c0_34] : memref<1x32xf32, #tpu.memory_space<vmem>>, vector<1x32xf32>
    %62 = vector.broadcast %61 : vector<1x32xf32> to vector<32x32xf32>
    %63 = arith.addf %60, %62 : vector<32x32xf32>
    %64 = arith.addf %1, %58 : vector<32x32xf32>
    %c0_35 = arith.constant 0 : index
    %c0_36 = arith.constant 0 : index
    %65 = vector.load %arg12[%c0_35, %c0_36] : memref<32x32xf32, #tpu.memory_space<vmem>>, vector<32x32xf32>
    tpu.vector_store %arg12[%c0_35, %c0_36], %64 {strides = array<i32>} : memref<32x32xf32, #tpu.memory_space<vmem>>, vector<32x32xf32>,
    %66 = vector.extract_strided_slice %3 {offsets = [0, 0], sizes = [32, 32], strides = [1, 1]} : vector<32x96xf32> to vector<32x32xf32>
    %67 = arith.mulf %63, %5 : vector<32x32xf32>
    %68 = arith.addf %66, %67 : vector<32x32xf32>
    %69 = vector.extract_strided_slice %3 {offsets = [0, 32], sizes = [32, 32], strides = [1, 1]} : vector<32x96xf32> to vector<32x32xf32>
    %70 = arith.mulf %63, %9 : vector<32x32xf32>
    %71 = arith.addf %69, %70 : vector<32x32xf32>
    %72 = vector.extract_strided_slice %3 {offsets = [0, 64], sizes = [32, 32], strides = [1, 1]} : vector<32x96xf32> to vector<32x32xf32>
    %73 = arith.mulf %63, %13 : vector<32x32xf32>
    %74 = arith.addf %72, %73 : vector<32x32xf32>
    %75 = tpu.concatenate %68, %71, %74 in 1 : vector<32x32xf32>, vector<32x32xf32>, vector<32x32xf32> -> vector<32x96xf32>
    %c0_37 = arith.constant 0 : index
    %c0_38 = arith.constant 0 : index
    %76 = vector.load %arg13[%c0_37, %c0_38] : memref<32x96xf32, #tpu.memory_space<vmem>>, vector<32x96xf32>
    tpu.vector_store %arg13[%c0_37, %c0_38], %75 {strides = array<i32>} : memref<32x96xf32, #tpu.memory_space<vmem>>, vector<32x96xf32>,
    %77 = vector.extract_strided_slice %16 {offsets = [0, 0], sizes = [32, 32], strides = [1, 1]} : vector<32x160xf32> to vector<32x32xf32>
    %78 = arith.mulf %63, %18 : vector<32x32xf32>
    %79 = arith.addf %77, %78 : vector<32x32xf32>
    %80 = vector.extract_strided_slice %16 {offsets = [0, 32], sizes = [32, 32], strides = [1, 1]} : vector<32x160xf32> to vector<32x32xf32>
    %81 = arith.mulf %63, %22 : vector<32x32xf32>
    %82 = arith.addf %80, %81 : vector<32x32xf32>
    %83 = vector.extract_strided_slice %16 {offsets = [0, 64], sizes = [32, 32], strides = [1, 1]} : vector<32x160xf32> to vector<32x32xf32>
    %84 = arith.mulf %63, %26 : vector<32x32xf32>
    %85 = arith.addf %83, %84 : vector<32x32xf32>
    %86 = vector.extract_strided_slice %16 {offsets = [0, 96], sizes = [32, 32], strides = [1, 1]} : vector<32x160xf32> to vector<32x32xf32>
    %87 = arith.mulf %63, %30 : vector<32x32xf32>
    %88 = arith.addf %86, %87 : vector<32x32xf32>
    %89 = vector.extract_strided_slice %16 {offsets = [0, 128], sizes = [32, 32], strides = [1, 1]} : vector<32x160xf32> to vector<32x32xf32>
    %90 = arith.mulf %63, %34 : vector<32x32xf32>
    %91 = arith.addf %89, %90 : vector<32x32xf32>
    %92 = tpu.concatenate %79, %82, %85, %88, %91 in 1 : vector<32x32xf32>, vector<32x32xf32>, vector<32x32xf32>, vector<32x32xf32>, vector<32x32xf32> -> vector<32x160xf32>
    %c0_39 = arith.constant 0 : index
    %c0_40 = arith.constant 0 : index
    %93 = vector.load %arg14[%c0_39, %c0_40] : memref<32x160xf32, #tpu.memory_space<vmem>>, vector<32x160xf32>
    tpu.vector_store %arg14[%c0_39, %c0_40], %92 {strides = array<i32>} : memref<32x160xf32, #tpu.memory_space<vmem>>, vector<32x160xf32>,
    return
  }
  func.func @transform_0(%arg0: i32) -> (i32, i32) {
    %c0_i32 = arith.constant 0 : i32
    %c0_i32_0 = arith.constant 0 : i32
    return %arg0, %c0_i32 : i32, i32
  }
  func.func @transform_1(%arg0: i32) -> (i32, i32) {
    %c0_i32 = arith.constant 0 : i32
    %c0_i32_0 = arith.constant 0 : i32
    return %arg0, %c0_i32 : i32, i32
  }
  func.func @transform_2(%arg0: i32) -> (i32, i32) {
    %c0_i32 = arith.constant 0 : i32
    %c0_i32_0 = arith.constant 0 : i32
    return %arg0, %c0_i32 : i32, i32
  }
  func.func @transform_3(%arg0: i32) -> (i32, i32) {
    %c0_i32 = arith.constant 0 : i32
    %c0_i32_0 = arith.constant 0 : i32
    %c0_i32_1 = arith.constant 0 : i32
    return %c0_i32, %c0_i32_0 : i32, i32
  }
  func.func @transform_4(%arg0: i32) -> (i32, i32) {
    %c0_i32 = arith.constant 0 : i32
    %c0_i32_0 = arith.constant 0 : i32
    %c0_i32_1 = arith.constant 0 : i32
    return %c0_i32, %c0_i32_0 : i32, i32
  }
  func.func @transform_5(%arg0: i32) -> (i32, i32) {
    %c0_i32 = arith.constant 0 : i32
    %c0_i32_0 = arith.constant 0 : i32
    %c0_i32_1 = arith.constant 0 : i32
    return %c0_i32, %c0_i32_0 : i32, i32
  }
  func.func @transform_6(%arg0: i32) -> (i32, i32) {
    %c0_i32 = arith.constant 0 : i32
    %c0_i32_0 = arith.constant 0 : i32
    %c0_i32_1 = arith.constant 0 : i32
    return %c0_i32, %c0_i32_0 : i32, i32
  }
  func.func @transform_7(%arg0: i32) -> (i32, i32) {
    %c0_i32 = arith.constant 0 : i32
    %c0_i32_0 = arith.constant 0 : i32
    %c0_i32_1 = arith.constant 0 : i32
    return %c0_i32, %c0_i32_0 : i32, i32
  }
  func.func @transform_8(%arg0: i32) -> (i32, i32) {
    %c0_i32 = arith.constant 0 : i32
    %c0_i32_0 = arith.constant 0 : i32
    %c0_i32_1 = arith.constant 0 : i32
    return %c0_i32, %c0_i32_0 : i32, i32
  }
  func.func @transform_9(%arg0: i32) -> (i32, i32) {
    %c0_i32 = arith.constant 0 : i32
    %c0_i32_0 = arith.constant 0 : i32
    %c0_i32_1 = arith.constant 0 : i32
    return %c0_i32, %c0_i32_0 : i32, i32
  }
  func.func @transform_10(%arg0: i32) -> (i32, i32) {
    %c0_i32 = arith.constant 0 : i32
    %c0_i32_0 = arith.constant 0 : i32
    %c0_i32_1 = arith.constant 0 : i32
    return %c0_i32, %c0_i32_0 : i32, i32
  }
  func.func @transform_11(%arg0: i32) -> (i32, i32) {
    %c0_i32 = arith.constant 0 : i32
    %c0_i32_0 = arith.constant 0 : i32
    return %arg0, %c0_i32 : i32, i32
  }
  func.func @transform_12(%arg0: i32) -> (i32, i32) {
    %c0_i32 = arith.constant 0 : i32
    %c0_i32_0 = arith.constant 0 : i32
    return %arg0, %c0_i32 : i32, i32
  }
  func.func @transform_13(%arg0: i32) -> (i32, i32) {
    %c0_i32 = arith.constant 0 : i32
    %c0_i32_0 = arith.constant 0 : i32
    return %arg0, %c0_i32 : i32, i32
  }
}

module attributes {stable_mosaic.version = 11 : i64} {
  func.func @kernel(%arg0: i32, %arg1: memref<32x32xf32, #tpu.memory_space<vmem>>, %arg2: memref<32x96xf32, #tpu.memory_space<vmem>>, %arg3: memref<32x160xf32, #tpu.memory_space<vmem>>, %arg4: memref<32x32xf32, #tpu.memory_space<vmem>>, %arg5: memref<32x32xf32, #tpu.memory_space<vmem>>, %arg6: memref<32x32xf32, #tpu.memory_space<vmem>>, %arg7: memref<1x32xf32, #tpu.memory_space<vmem>>, %arg8: memref<32x32xf32, #tpu.memory_space<vmem>>, %arg9: memref<1x32xf32, #tpu.memory_space<vmem>>, %arg10: memref<32x32xf32, #tpu.memory_space<vmem>>, %arg11: memref<1x32xf32, #tpu.memory_space<vmem>>, %arg12: memref<32x32xf32, #tpu.memory_space<vmem>>, %arg13: memref<32x96xf32, #tpu.memory_space<vmem>>, %arg14: memref<32x160xf32, #tpu.memory_space<vmem>>) attributes {dimension_semantics = [#tpu.dimension_semantics<parallel>], iteration_bounds = array<i64: 4>, scalar_prefetch = 0 : i64, scratch_operands = 0 : i64, tpu.core_type = #tpu.core_type<tc>, window_params = [{transform_indices = @transform_0, window_bounds = array<i64: 32, 32>}, {transform_indices = @transform_1, window_bounds = array<i64: 32, 96>}, {transform_indices = @transform_2, window_bounds = array<i64: 32, 160>}, {pipeline_mode = #tpu.pipeline_mode<synchronous>, transform_indices = @transform_3, window_bounds = array<i64: 32, 32>}, {pipeline_mode = #tpu.pipeline_mode<synchronous>, transform_indices = @transform_4, window_bounds = array<i64: 32, 32>}, {pipeline_mode = #tpu.pipeline_mode<synchronous>, transform_indices = @transform_5, window_bounds = array<i64: 32, 32>}, {pipeline_mode = #tpu.pipeline_mode<synchronous>, transform_indices = @transform_6, window_bounds = array<i64: 1, 32>}, {pipeline_mode = #tpu.pipeline_mode<synchronous>, transform_indices = @transform_7, window_bounds = array<i64: 32, 32>}, {pipeline_mode = #tpu.pipeline_mode<synchronous>, transform_indices = @transform_8, window_bounds = array<i64: 1, 32>}, {pipeline_mode = #tpu.pipeline_mode<synchronous>, transform_indices = @transform_9, window_bounds = array<i64: 32, 32>}, {pipeline_mode = #tpu.pipeline_mode<synchronous>, transform_indices = @transform_10, window_bounds = array<i64: 1, 32>}, {transform_indices = @transform_11, window_bounds = array<i64: 32, 32>}, {transform_indices = @transform_12, window_bounds = array<i64: 32, 96>}, {transform_indices = @transform_13, window_bounds = array<i64: 32, 160>}]} {
    %c0 = arith.constant 0 : index
    %c0_0 = arith.constant 0 : index
    %0 = vector.load %arg4[%c0, %c0_0] : memref<32x32xf32, #tpu.memory_space<vmem>>, vector<32x32xf32>
    %c0_1 = arith.constant 0 : index
    %c0_2 = arith.constant 0 : index
    %1 = vector.load %arg1[%c0_1, %c0_2] : memref<32x32xf32, #tpu.memory_space<vmem>>, vector<32x32xf32>
    %cst = arith.constant 0.000000e+00 : f32
    %2 = vector.broadcast %cst : f32 to vector<32x32xf32>
    %c0_3 = arith.constant 0 : index
    %c0_4 = arith.constant 0 : index
    %3 = vector.load %arg2[%c0_3, %c0_4] : memref<32x96xf32, #tpu.memory_space<vmem>>, vector<32x96xf32>
    %4 = vector.extract_strided_slice %3 {offsets = [0, 0], sizes = [32, 32], strides = [1, 1]} : vector<32x96xf32> to vector<32x32xf32>
    %cst_5 = arith.constant dense<0.000000e+00> : vector<32x32xf32>
    %5 = tpu.matmul %4, %0, %cst_5 {dimension_numbers = #tpu.dot_dimension_numbers<[1], [0], [0], [1], [0, 0, 1, 1], [], []>} : vector<32x32xf32>, vector<32x32xf32>, vector<32x32xf32> -> vector<32x32xf32>
    %6 = arith.mulf %5, %5 : vector<32x32xf32>
    %7 = arith.addf %2, %6 : vector<32x32xf32>
    %8 = vector.extract_strided_slice %3 {offsets = [0, 32], sizes = [32, 32], strides = [1, 1]} : vector<32x96xf32> to vector<32x32xf32>
    %cst_6 = arith.constant dense<0.000000e+00> : vector<32x32xf32>
    %9 = tpu.matmul %8, %0, %cst_6 {dimension_numbers = #tpu.dot_dimension_numbers<[1], [0], [0], [1], [0, 0, 1, 1], [], []>} : vector<32x32xf32>, vector<32x32xf32>, vector<32x32xf32> -> vector<32x32xf32>
    %10 = arith.mulf %9, %9 : vector<32x32xf32>
    %11 = arith.addf %7, %10 : vector<32x32xf32>
    %12 = vector.extract_strided_slice %3 {offsets = [0, 64], sizes = [32, 32], strides = [1, 1]} : vector<32x96xf32> to vector<32x32xf32>
    %cst_7 = arith.constant dense<0.000000e+00> : vector<32x32xf32>
    %13 = tpu.matmul %12, %0, %cst_7 {dimension_numbers = #tpu.dot_dimension_numbers<[1], [0], [0], [1], [0, 0, 1, 1], [], []>} : vector<32x32xf32>, vector<32x32xf32>, vector<32x32xf32> -> vector<32x32xf32>
    %14 = arith.mulf %13, %13 : vector<32x32xf32>
    %15 = arith.addf %11, %14 : vector<32x32xf32>
    %c0_8 = arith.constant 0 : index
    %c0_9 = arith.constant 0 : index
    %16 = vector.load %arg3[%c0_8, %c0_9] : memref<32x160xf32, #tpu.memory_space<vmem>>, vector<32x160xf32>
    %17 = vector.extract_strided_slice %16 {offsets = [0, 0], sizes = [32, 32], strides = [1, 1]} : vector<32x160xf32> to vector<32x32xf32>
    %cst_10 = arith.constant dense<0.000000e+00> : vector<32x32xf32>
    %18 = tpu.matmul %17, %0, %cst_10 {dimension_numbers = #tpu.dot_dimension_numbers<[1], [0], [0], [1], [0, 0, 1, 1], [], []>} : vector<32x32xf32>, vector<32x32xf32>, vector<32x32xf32> -> vector<32x32xf32>
    %19 = arith.mulf %18, %18 : vector<32x32xf32>
    %20 = arith.addf %15, %19 : vector<32x32xf32>
    %21 = vector.extract_strided_slice %16 {offsets = [0, 32], sizes = [32, 32], strides = [1, 1]} : vector<32x160xf32> to vector<32x32xf32>
    %cst_11 = arith.constant dense<0.000000e+00> : vector<32x32xf32>
    %22 = tpu.matmul %21, %0, %cst_11 {dimension_numbers = #tpu.dot_dimension_numbers<[1], [0], [0], [1], [0, 0, 1, 1], [], []>} : vector<32x32xf32>, vector<32x32xf32>, vector<32x32xf32> -> vector<32x32xf32>
    %23 = arith.mulf %22, %22 : vector<32x32xf32>
    %24 = arith.addf %20, %23 : vector<32x32xf32>
    %25 = vector.extract_strided_slice %16 {offsets = [0, 64], sizes = [32, 32], strides = [1, 1]} : vector<32x160xf32> to vector<32x32xf32>
    %cst_12 = arith.constant dense<0.000000e+00> : vector<32x32xf32>
    %26 = tpu.matmul %25, %0, %cst_12 {dimension_numbers = #tpu.dot_dimension_numbers<[1], [0], [0], [1], [0, 0, 1, 1], [], []>} : vector<32x32xf32>, vector<32x32xf32>, vector<32x32xf32> -> vector<32x32xf32>
    %27 = arith.mulf %26, %26 : vector<32x32xf32>
    %28 = arith.addf %24, %27 : vector<32x32xf32>
    %29 = vector.extract_strided_slice %16 {offsets = [0, 96], sizes = [32, 32], strides = [1, 1]} : vector<32x160xf32> to vector<32x32xf32>
    %cst_13 = arith.constant dense<0.000000e+00> : vector<32x32xf32>
    %30 = tpu.matmul %29, %0, %cst_13 {dimension_numbers = #tpu.dot_dimension_numbers<[1], [0], [0], [1], [0, 0, 1, 1], [], []>} : vector<32x32xf32>, vector<32x32xf32>, vector<32x32xf32> -> vector<32x32xf32>
    %31 = arith.mulf %30, %30 : vector<32x32xf32>
    %32 = arith.addf %28, %31 : vector<32x32xf32>
    %33 = vector.extract_strided_slice %16 {offsets = [0, 128], sizes = [32, 32], strides = [1, 1]} : vector<32x160xf32> to vector<32x32xf32>
    %cst_14 = arith.constant dense<0.000000e+00> : vector<32x32xf32>
    %34 = tpu.matmul %33, %0, %cst_14 {dimension_numbers = #tpu.dot_dimension_numbers<[1], [0], [0], [1], [0, 0, 1, 1], [], []>} : vector<32x32xf32>, vector<32x32xf32>, vector<32x32xf32> -> vector<32x32xf32>
    %35 = arith.mulf %34, %34 : vector<32x32xf32>
    %36 = arith.addf %32, %35 : vector<32x32xf32>
    %cst_15 = arith.constant 9.99999993E-9 : f32
    %37 = vector.broadcast %cst_15 : f32 to vector<32x32xf32>
    %38 = arith.addf %36, %37 : vector<32x32xf32>
    %39 = math.sqrt %38 : vector<32x32xf32>
    %c0_16 = arith.constant 0 : index
    %c0_17 = arith.constant 0 : index
    %40 = vector.load %arg5[%c0_16, %c0_17] : memref<32x32xf32, #tpu.memory_space<vmem>>, vector<32x32xf32>
    %cst_18 = arith.constant dense<0.000000e+00> : vector<32x32xf32>
    %41 = tpu.matmul %1, %40, %cst_18 {dimension_numbers = #tpu.dot_dimension_numbers<[1], [0], [0], [1], [0, 0, 1, 1], [], []>} : vector<32x32xf32>, vector<32x32xf32>, vector<32x32xf32> -> vector<32x32xf32>
    %c0_19 = arith.constant 0 : index
    %c0_20 = arith.constant 0 : index
    %42 = vector.load %arg6[%c0_19, %c0_20] : memref<32x32xf32, #tpu.memory_space<vmem>>, vector<32x32xf32>
    %cst_21 = arith.constant dense<0.000000e+00> : vector<32x32xf32>
    %43 = tpu.matmul %39, %42, %cst_21 {dimension_numbers = #tpu.dot_dimension_numbers<[1], [0], [0], [1], [0, 0, 1, 1], [], []>} : vector<32x32xf32>, vector<32x32xf32>, vector<32x32xf32> -> vector<32x32xf32>
    %44 = arith.addf %41, %43 : vector<32x32xf32>
    %c0_22 = arith.constant 0 : index
    %c0_23 = arith.constant 0 : index
    %45 = vector.load %arg7[%c0_22, %c0_23] : memref<1x32xf32, #tpu.memory_space<vmem>>, vector<1x32xf32>
    %46 = vector.broadcast %45 : vector<1x32xf32> to vector<32x32xf32>
    %47 = arith.addf %44, %46 : vector<32x32xf32>
    %48 = arith.negf %47 : vector<32x32xf32>
    %49 = math.exp %48 : vector<32x32xf32>
    %cst_24 = arith.constant 1.000000e+00 : f32
    %50 = vector.broadcast %cst_24 : f32 to vector<32x32xf32>
    %51 = arith.addf %50, %49 : vector<32x32xf32>
    %52 = arith.divf %50, %51 : vector<32x32xf32>
    %53 = arith.mulf %47, %52 : vector<32x32xf32>
    %c0_25 = arith.constant 0 : index
    %c0_26 = arith.constant 0 : index
    %54 = vector.load %arg8[%c0_25, %c0_26] : memref<32x32xf32, #tpu.memory_space<vmem>>, vector<32x32xf32>
    %cst_27 = arith.constant dense<0.000000e+00> : vector<32x32xf32>
    %55 = tpu.matmul %53, %54, %cst_27 {dimension_numbers = #tpu.dot_dimension_numbers<[1], [0], [0], [1], [0, 0, 1, 1], [], []>} : vector<32x32xf32>, vector<32x32xf32>, vector<32x32xf32> -> vector<32x32xf32>
    %c0_28 = arith.constant 0 : index
    %c0_29 = arith.constant 0 : index
    %56 = vector.load %arg9[%c0_28, %c0_29] : memref<1x32xf32, #tpu.memory_space<vmem>>, vector<1x32xf32>
    %57 = vector.broadcast %56 : vector<1x32xf32> to vector<32x32xf32>
    %58 = arith.addf %55, %57 : vector<32x32xf32>
    %c0_30 = arith.constant 0 : index
    %c0_31 = arith.constant 0 : index
    %59 = vector.load %arg10[%c0_30, %c0_31] : memref<32x32xf32, #tpu.memory_space<vmem>>, vector<32x32xf32>
    %cst_32 = arith.constant dense<0.000000e+00> : vector<32x32xf32>
    %60 = tpu.matmul %53, %59, %cst_32 {dimension_numbers = #tpu.dot_dimension_numbers<[1], [0], [0], [1], [0, 0, 1, 1], [], []>} : vector<32x32xf32>, vector<32x32xf32>, vector<32x32xf32> -> vector<32x32xf32>
    %c0_33 = arith.constant 0 : index
    %c0_34 = arith.constant 0 : index
    %61 = vector.load %arg11[%c0_33, %c0_34] : memref<1x32xf32, #tpu.memory_space<vmem>>, vector<1x32xf32>
    %62 = vector.broadcast %61 : vector<1x32xf32> to vector<32x32xf32>
    %63 = arith.addf %60, %62 : vector<32x32xf32>
    %64 = arith.addf %1, %58 : vector<32x32xf32>
    %c0_35 = arith.constant 0 : index
    %c0_36 = arith.constant 0 : index
    %65 = vector.load %arg12[%c0_35, %c0_36] : memref<32x32xf32, #tpu.memory_space<vmem>>, vector<32x32xf32>
    tpu.vector_store %arg12[%c0_35, %c0_36], %64 {strides = array<i32>} : memref<32x32xf32, #tpu.memory_space<vmem>>, vector<32x32xf32>,
    %66 = vector.extract_strided_slice %3 {offsets = [0, 0], sizes = [32, 32], strides = [1, 1]} : vector<32x96xf32> to vector<32x32xf32>
    %67 = arith.mulf %63, %5 : vector<32x32xf32>
    %68 = arith.addf %66, %67 : vector<32x32xf32>
    %69 = vector.extract_strided_slice %3 {offsets = [0, 32], sizes = [32, 32], strides = [1, 1]} : vector<32x96xf32> to vector<32x32xf32>
    %70 = arith.mulf %63, %9 : vector<32x32xf32>
    %71 = arith.addf %69, %70 : vector<32x32xf32>
    %72 = vector.extract_strided_slice %3 {offsets = [0, 64], sizes = [32, 32], strides = [1, 1]} : vector<32x96xf32> to vector<32x32xf32>
    %73 = arith.mulf %63, %13 : vector<32x32xf32>
    %74 = arith.addf %72, %73 : vector<32x32xf32>
    %75 = tpu.concatenate %68, %71, %74 in 1 : vector<32x32xf32>, vector<32x32xf32>, vector<32x32xf32> -> vector<32x96xf32>
    %c0_37 = arith.constant 0 : index
    %c0_38 = arith.constant 0 : index
    %76 = vector.load %arg13[%c0_37, %c0_38] : memref<32x96xf32, #tpu.memory_space<vmem>>, vector<32x96xf32>
    tpu.vector_store %arg13[%c0_37, %c0_38], %75 {strides = array<i32>} : memref<32x96xf32, #tpu.memory_space<vmem>>, vector<32x96xf32>,
    %77 = vector.extract_strided_slice %16 {offsets = [0, 0], sizes = [32, 32], strides = [1, 1]} : vector<32x160xf32> to vector<32x32xf32>
    %78 = arith.mulf %63, %18 : vector<32x32xf32>
    %79 = arith.addf %77, %78 : vector<32x32xf32>
    %80 = vector.extract_strided_slice %16 {offsets = [0, 32], sizes = [32, 32], strides = [1, 1]} : vector<32x160xf32> to vector<32x32xf32>
    %81 = arith.mulf %63, %22 : vector<32x32xf32>
    %82 = arith.addf %80, %81 : vector<32x32xf32>
    %83 = vector.extract_strided_slice %16 {offsets = [0, 64], sizes = [32, 32], strides = [1, 1]} : vector<32x160xf32> to vector<32x32xf32>
    %84 = arith.mulf %63, %26 : vector<32x32xf32>
    %85 = arith.addf %83, %84 : vector<32x32xf32>
    %86 = vector.extract_strided_slice %16 {offsets = [0, 96], sizes = [32, 32], strides = [1, 1]} : vector<32x160xf32> to vector<32x32xf32>
    %87 = arith.mulf %63, %30 : vector<32x32xf32>
    %88 = arith.addf %86, %87 : vector<32x32xf32>
    %89 = vector.extract_strided_slice %16 {offsets = [0, 128], sizes = [32, 32], strides = [1, 1]} : vector<32x160xf32> to vector<32x32xf32>
    %90 = arith.mulf %63, %34 : vector<32x32xf32>
    %91 = arith.addf %89, %90 : vector<32x32xf32>
    %92 = tpu.concatenate %79, %82, %85, %88, %91 in 1 : vector<32x32xf32>, vector<32x32xf32>, vector<32x32xf32>, vector<32x32xf32>, vector<32x32xf32> -> vector<32x160xf32>
    %c0_39 = arith.constant 0 : index
    %c0_40 = arith.constant 0 : index
    %93 = vector.load %arg14[%c0_39, %c0_40] : memref<32x160xf32, #tpu.memory_space<vmem>>, vector<32x160xf32>
    tpu.vector_store %arg14[%c0_39, %c0_40], %92 {strides = array<i32>} : memref<32x160xf32, #tpu.memory_space<vmem>>, vector<32x160xf32>,
    return
  }
  func.func @transform_0(%arg0: i32) -> (i32, i32) {
    %c0_i32 = arith.constant 0 : i32
    %c0_i32_0 = arith.constant 0 : i32
    return %arg0, %c0_i32 : i32, i32
  }
  func.func @transform_1(%arg0: i32) -> (i32, i32) {
    %c0_i32 = arith.constant 0 : i32
    %c0_i32_0 = arith.constant 0 : i32
    return %arg0, %c0_i32 : i32, i32
  }
  func.func @transform_2(%arg0: i32) -> (i32, i32) {
    %c0_i32 = arith.constant 0 : i32
    %c0_i32_0 = arith.constant 0 : i32
    return %arg0, %c0_i32 : i32, i32
  }
  func.func @transform_3(%arg0: i32) -> (i32, i32) {
    %c0_i32 = arith.constant 0 : i32
    %c0_i32_0 = arith.constant 0 : i32
    %c0_i32_1 = arith.constant 0 : i32
    return %c0_i32, %c0_i32_0 : i32, i32
  }
  func.func @transform_4(%arg0: i32) -> (i32, i32) {
    %c0_i32 = arith.constant 0 : i32
    %c0_i32_0 = arith.constant 0 : i32
    %c0_i32_1 = arith.constant 0 : i32
    return %c0_i32, %c0_i32_0 : i32, i32
  }
  func.func @transform_5(%arg0: i32) -> (i32, i32) {
    %c0_i32 = arith.constant 0 : i32
    %c0_i32_0 = arith.constant 0 : i32
    %c0_i32_1 = arith.constant 0 : i32
    return %c0_i32, %c0_i32_0 : i32, i32
  }
  func.func @transform_6(%arg0: i32) -> (i32, i32) {
    %c0_i32 = arith.constant 0 : i32
    %c0_i32_0 = arith.constant 0 : i32
    %c0_i32_1 = arith.constant 0 : i32
    return %c0_i32, %c0_i32_0 : i32, i32
  }
  func.func @transform_7(%arg0: i32) -> (i32, i32) {
    %c0_i32 = arith.constant 0 : i32
    %c0_i32_0 = arith.constant 0 : i32
    %c0_i32_1 = arith.constant 0 : i32
    return %c0_i32, %c0_i32_0 : i32, i32
  }
  func.func @transform_8(%arg0: i32) -> (i32, i32) {
    %c0_i32 = arith.constant 0 : i32
    %c0_i32_0 = arith.constant 0 : i32
    %c0_i32_1 = arith.constant 0 : i32
    return %c0_i32, %c0_i32_0 : i32, i32
  }
  func.func @transform_9(%arg0: i32) -> (i32, i32) {
    %c0_i32 = arith.constant 0 : i32
    %c0_i32_0 = arith.constant 0 : i32
    %c0_i32_1 = arith.constant 0 : i32
    return %c0_i32, %c0_i32_0 : i32, i32
  }
  func.func @transform_10(%arg0: i32) -> (i32, i32) {
    %c0_i32 = arith.constant 0 : i32
    %c0_i32_0 = arith.constant 0 : i32
    %c0_i32_1 = arith.constant 0 : i32
    return %c0_i32, %c0_i32_0 : i32, i32
  }
  func.func @transform_11(%arg0: i32) -> (i32, i32) {
    %c0_i32 = arith.constant 0 : i32
    %c0_i32_0 = arith.constant 0 : i32
    return %arg0, %c0_i32 : i32, i32
  }
  func.func @transform_12(%arg0: i32) -> (i32, i32) {
    %c0_i32 = arith.constant 0 : i32
    %c0_i32_0 = arith.constant 0 : i32
    return %arg0, %c0_i32 : i32, i32
  }
  func.func @transform_13(%arg0: i32) -> (i32, i32) {
    %c0_i32 = arith.constant 0 : i32
    %c0_i32_0 = arith.constant 0 : i32
    return %arg0, %c0_i32 : i32, i32
  }
}

</mosaic_0001>

<llo_original>
// kernel: tpu_custom_call.1
$region0: #{tpu_custom_call.1}
  #allocation0 [shape = 'u32[]', space=smem, size = 0x4, offset = 0x4, fixed_abs, tag = 'smem constant byte address 0x4 - core index']
  #allocation1 [shape = 'u32[144,128]{1,0:T(1,128)}', space=vmem, size = 0x12000, scoped, tag = 'internal scratch']
  %s0 = inlined_call_operand.vmem [shape: f32[128,32], index: 0, kind: input, shape index: {}]
  %s1 = inlined_call_operand.vmem [shape: f32[128,96], index: 1, kind: input, shape index: {}]
  %s2 = inlined_call_operand.vmem [shape: f32[128,160], index: 2, kind: input, shape index: {}]
  %s3 = inlined_call_operand.vmem [shape: f32[32,32], index: 3, kind: input, shape index: {}]
  %s4 = inlined_call_operand.vmem [shape: f32[32,32], index: 4, kind: input, shape index: {}]
  %s5 = inlined_call_operand.vmem [shape: f32[32,32], index: 5, kind: input, shape index: {}]
  %s6 = inlined_call_operand.vmem [shape: f32[1,32], index: 6, kind: input, shape index: {}]
  %s7 = inlined_call_operand.vmem [shape: f32[32,32], index: 7, kind: input, shape index: {}]
  %s8 = inlined_call_operand.vmem [shape: f32[1,32], index: 8, kind: input, shape index: {}]
  %s9 = inlined_call_operand.vmem [shape: f32[32,32], index: 9, kind: input, shape index: {}]
  %s10 = inlined_call_operand.vmem [shape: f32[1,32], index: 10, kind: input, shape index: {}]
  %s11 = inlined_call_operand.vmem [shape: f32[128,32], index: 11, kind: output, shape index: {0}]
  %s12 = inlined_call_operand.vmem [shape: f32[128,96], index: 12, kind: output, shape index: {1}]
  %s13 = inlined_call_operand.vmem [shape: f32[128,160], index: 13, kind: output, shape index: {2}]
  %14 = xla_tuple %s11, %s12, %s13
  %s15 = sld [smem:[#allocation0]]
  $region93: #{tpu_custom_call.1} parent=0
    _
  %s17 = ssub.s32 1, %s15
  %s18 = scalar_select 0, %s17, %s15
  loop: start=0, step=1, limit=6
  $region2: #{tpu_custom_call.1} parent=0 // loop_pre_header
    _
  $region3: #{tpu_custom_call.1} parent=0 // loop_header
    %s20 = sphi 0, %s24
    %p21 = scmp.ge.s32.totalorder %s20, 6
    %s30 = sphi 0, %s32
    %s33 = sphi 0, %s30
    %s34 = sphi 0, %s33
    %s50 = sphi 0, %s34
    %s56 = sphi 0, %s58
    %s59 = sphi 0, %s56
    %s60 = sphi 0, %s59
    %s76 = sphi 0, %s60
    %s82 = sphi 0, %s84
    %s85 = sphi 0, %s82
    %s86 = sphi 0, %s85
    %s102 = sphi 0, %s86
    %s106 = sphi 0, %s106
    %s108 = sphi 0, %s106
    %s109 = sphi 0, %s108
    %s123 = sphi 0, %s109
    %s127 = sphi 0, %s127
    %s129 = sphi 0, %s127
    %s130 = sphi 0, %s129
    %s144 = sphi 0, %s130
    %s148 = sphi 0, %s148
    %s150 = sphi 0, %s148
    %s151 = sphi 0, %s150
    %s165 = sphi 0, %s151
    %s169 = sphi 0, %s169
    %s171 = sphi 0, %s169
    %s172 = sphi 0, %s171
    %s186 = sphi 0, %s172
    %s190 = sphi 0, %s190
    %s192 = sphi 0, %s190
    %s193 = sphi 0, %s192
    %s207 = sphi 0, %s193
    %s211 = sphi 0, %s211
    %s213 = sphi 0, %s211
    %s214 = sphi 0, %s213
    %s228 = sphi 0, %s214
    %s232 = sphi 0, %s232
    %s234 = sphi 0, %s232
    %s235 = sphi 0, %s234
    %s249 = sphi 0, %s235
    %s253 = sphi 0, %s253
    %s255 = sphi 0, %s253
    %s256 = sphi 0, %s255
    %s270 = sphi 0, %s256
    %s276 = sphi 0, %s278
    %s279 = sphi 0, %s276
    %s280 = sphi 0, %s279
    %s296 = sphi 0, %s280
    %s302 = sphi 0, %s304
    %s305 = sphi 0, %s302
    %s306 = sphi 0, %s305
    %s322 = sphi 0, %s306
    %s328 = sphi 0, %s330
    %s331 = sphi 0, %s328
    %s332 = sphi 0, %s331
    %s348 = sphi 0, %s332
  $region4: #{tpu_custom_call.1} parent=0 // loop_header_branch
    %23 = sbr.rel (%p21) target = $region8
  $region5: #{tpu_custom_call.1} parent=0 // loop_body
    %s25 = ssub.s32 %s20, 1
    %s26 = ssub.s32 %s20, 2
    %s27 = sadd.s32 %s20, 1
    %s28 = ssub.s32 %s20, %s27
    %p29 = scmp.eq.s32.totalorder %s28, 0
    %s31 = sadd.s32 %s30, 1
    %s32 = scalar_select %p29, %s30, %s31
    %p35 = pneg %p29
    %p36 = scmp.eq.s32.totalorder %s20, 3
    %p37 = por %p35, %p36
    %p38 = scmp.ne.s32.totalorder %s30, %s33
    %p39 = scmp.eq.s32.totalorder %s20, 0
    %p40 = por %p38, %p39
    %p41 = scmp.ne.s32.totalorder %s30, %s33
    %p42 = scmp.eq.s32.totalorder %s25, 3
    %p43 = por %p41, %p42
    %p44 = scmp.ne.s32.totalorder %s33, %s34
    %p45 = scmp.eq.s32.totalorder %s25, 0
    %p46 = por %p44, %p45
    %p47 = scmp.ne.s32.totalorder %s33, %s34
    %p48 = scmp.eq.s32.totalorder %s26, 3
    %p49 = por %p47, %p48
    %p51 = scmp.ne.s32.totalorder %s34, %s50
    %p52 = scmp.eq.s32.totalorder %s26, 0
    %p53 = por %p51, %p52
    %s54 = ssub.s32 %s20, %s27
    %p55 = scmp.eq.s32.totalorder %s54, 0
    %s57 = sadd.s32 %s56, 1
    %s58 = scalar_select %p55, %s56, %s57
    %p61 = pneg %p55
    %p62 = scmp.eq.s32.totalorder %s20, 3
    %p63 = por %p61, %p62
    %p64 = scmp.ne.s32.totalorder %s56, %s59
    %p65 = scmp.eq.s32.totalorder %s20, 0
    %p66 = por %p64, %p65
    %p67 = scmp.ne.s32.totalorder %s56, %s59
    %p68 = scmp.eq.s32.totalorder %s25, 3
    %p69 = por %p67, %p68
    %p70 = scmp.ne.s32.totalorder %s59, %s60
    %p71 = scmp.eq.s32.totalorder %s25, 0
    %p72 = por %p70, %p71
    %p73 = scmp.ne.s32.totalorder %s59, %s60
    %p74 = scmp.eq.s32.totalorder %s26, 3
    %p75 = por %p73, %p74
    %p77 = scmp.ne.s32.totalorder %s60, %s76
    %p78 = scmp.eq.s32.totalorder %s26, 0
    %p79 = por %p77, %p78
    %s80 = ssub.s32 %s20, %s27
    %p81 = scmp.eq.s32.totalorder %s80, 0
    %s83 = sadd.s32 %s82, 1
    %s84 = scalar_select %p81, %s82, %s83
    %p87 = pneg %p81
    %p88 = scmp.eq.s32.totalorder %s20, 3
    %p89 = por %p87, %p88
    %p90 = scmp.ne.s32.totalorder %s82, %s85
    %p91 = scmp.eq.s32.totalorder %s20, 0
    %p92 = por %p90, %p91
    %p93 = scmp.ne.s32.totalorder %s82, %s85
    %p94 = scmp.eq.s32.totalorder %s25, 3
    %p95 = por %p93, %p94
    %p96 = scmp.ne.s32.totalorder %s85, %s86
    %p97 = scmp.eq.s32.totalorder %s25, 0
    %p98 = por %p96, %p97
    %p99 = scmp.ne.s32.totalorder %s85, %s86
    %p100 = scmp.eq.s32.totalorder %s26, 3
    %p101 = por %p99, %p100
    %p103 = scmp.ne.s32.totalorder %s86, %s102
    %p104 = scmp.eq.s32.totalorder %s26, 0
    %p105 = por %p103, %p104
    %s107 = sadd.s32 %s106, 1
    %p110 = scmp.eq.s32.totalorder %s20, 3
    %p111 = scmp.ne.s32.totalorder %s106, %s108
    %p112 = scmp.eq.s32.totalorder %s20, 0
    %p113 = por %p111, %p112
    %p114 = scmp.ne.s32.totalorder %s106, %s108
    %p115 = scmp.eq.s32.totalorder %s25, 3
    %p116 = por %p114, %p115
    %p117 = scmp.ne.s32.totalorder %s108, %s109
    %p118 = scmp.eq.s32.totalorder %s25, 0
    %p119 = por %p117, %p118
    %p120 = scmp.ne.s32.totalorder %s108, %s109
    %p121 = scmp.eq.s32.totalorder %s26, 3
    %p122 = por %p120, %p121
    %p124 = scmp.ne.s32.totalorder %s109, %s123
    %p125 = scmp.eq.s32.totalorder %s26, 0
    %p126 = por %p124, %p125
    %s128 = sadd.s32 %s127, 1
    %p131 = scmp.eq.s32.totalorder %s20, 3
    %p132 = scmp.ne.s32.totalorder %s127, %s129
    %p133 = scmp.eq.s32.totalorder %s20, 0
    %p134 = por %p132, %p133
    %p135 = scmp.ne.s32.totalorder %s127, %s129
    %p136 = scmp.eq.s32.totalorder %s25, 3
    %p137 = por %p135, %p136
    %p138 = scmp.ne.s32.totalorder %s129, %s130
    %p139 = scmp.eq.s32.totalorder %s25, 0
    %p140 = por %p138, %p139
    %p141 = scmp.ne.s32.totalorder %s129, %s130
    %p142 = scmp.eq.s32.totalorder %s26, 3
    %p143 = por %p141, %p142
    %p145 = scmp.ne.s32.totalorder %s130, %s144
    %p146 = scmp.eq.s32.totalorder %s26, 0
    %p147 = por %p145, %p146
    %s149 = sadd.s32 %s148, 1
    %p152 = scmp.eq.s32.totalorder %s20, 3
    %p153 = scmp.ne.s32.totalorder %s148, %s150
    %p154 = scmp.eq.s32.totalorder %s20, 0
    %p155 = por %p153, %p154
    %p156 = scmp.ne.s32.totalorder %s148, %s150
    %p157 = scmp.eq.s32.totalorder %s25, 3
    %p158 = por %p156, %p157
    %p159 = scmp.ne.s32.totalorder %s150, %s151
    %p160 = scmp.eq.s32.totalorder %s25, 0
    %p161 = por %p159, %p160
    %p162 = scmp.ne.s32.totalorder %s150, %s151
    %p163 = scmp.eq.s32.totalorder %s26, 3
    %p164 = por %p162, %p163
    %p166 = scmp.ne.s32.totalorder %s151, %s165
    %p167 = scmp.eq.s32.totalorder %s26, 0
    %p168 = por %p166, %p167
    %s170 = sadd.s32 %s169, 1
    %p173 = scmp.eq.s32.totalorder %s20, 3
    %p174 = scmp.ne.s32.totalorder %s169, %s171
    %p175 = scmp.eq.s32.totalorder %s20, 0
    %p176 = por %p174, %p175
    %p177 = scmp.ne.s32.totalorder %s169, %s171
    %p178 = scmp.eq.s32.totalorder %s25, 3
    %p179 = por %p177, %p178
    %p180 = scmp.ne.s32.totalorder %s171, %s172
    %p181 = scmp.eq.s32.totalorder %s25, 0
    %p182 = por %p180, %p181
    %p183 = scmp.ne.s32.totalorder %s171, %s172
    %p184 = scmp.eq.s32.totalorder %s26, 3
    %p185 = por %p183, %p184
    %p187 = scmp.ne.s32.totalorder %s172, %s186
    %p188 = scmp.eq.s32.totalorder %s26, 0
    %p189 = por %p187, %p188
    %s191 = sadd.s32 %s190, 1
    %p194 = scmp.eq.s32.totalorder %s20, 3
    %p195 = scmp.ne.s32.totalorder %s190, %s192
    %p196 = scmp.eq.s32.totalorder %s20, 0
    %p197 = por %p195, %p196
    %p198 = scmp.ne.s32.totalorder %s190, %s192
    %p199 = scmp.eq.s32.totalorder %s25, 3
    %p200 = por %p198, %p199
    %p201 = scmp.ne.s32.totalorder %s192, %s193
    %p202 = scmp.eq.s32.totalorder %s25, 0
    %p203 = por %p201, %p202
    %p204 = scmp.ne.s32.totalorder %s192, %s193
    %p205 = scmp.eq.s32.totalorder %s26, 3
    %p206 = por %p204, %p205
    %p208 = scmp.ne.s32.totalorder %s193, %s207
    %p209 = scmp.eq.s32.totalorder %s26, 0
    %p210 = por %p208, %p209
    %s212 = sadd.s32 %s211, 1
    %p215 = scmp.eq.s32.totalorder %s20, 3
    %p216 = scmp.ne.s32.totalorder %s211, %s213
    %p217 = scmp.eq.s32.totalorder %s20, 0
    %p218 = por %p216, %p217
    %p219 = scmp.ne.s32.totalorder %s211, %s213
    %p220 = scmp.eq.s32.totalorder %s25, 3
    %p221 = por %p219, %p220
    %p222 = scmp.ne.s32.totalorder %s213, %s214
    %p223 = scmp.eq.s32.totalorder %s25, 0
    %p224 = por %p222, %p223
    %p225 = scmp.ne.s32.totalorder %s213, %s214
    %p226 = scmp.eq.s32.totalorder %s26, 3
    %p227 = por %p225, %p226
    %p229 = scmp.ne.s32.totalorder %s214, %s228
    %p230 = scmp.eq.s32.totalorder %s26, 0
    %p231 = por %p229, %p230
    %s233 = sadd.s32 %s232, 1
    %p236 = scmp.eq.s32.totalorder %s20, 3
    %p237 = scmp.ne.s32.totalorder %s232, %s234
    %p238 = scmp.eq.s32.totalorder %s20, 0
    %p239 = por %p237, %p238
    %p240 = scmp.ne.s32.totalorder %s232, %s234
    %p241 = scmp.eq.s32.totalorder %s25, 3
    %p242 = por %p240, %p241
    %p243 = scmp.ne.s32.totalorder %s234, %s235
    %p244 = scmp.eq.s32.totalorder %s25, 0
    %p245 = por %p243, %p244
    %p246 = scmp.ne.s32.totalorder %s234, %s235
    %p247 = scmp.eq.s32.totalorder %s26, 3
    %p248 = por %p246, %p247
    %p250 = scmp.ne.s32.totalorder %s235, %s249
    %p251 = scmp.eq.s32.totalorder %s26, 0
    %p252 = por %p250, %p251
    %s254 = sadd.s32 %s253, 1
    %p257 = scmp.eq.s32.totalorder %s20, 3
    %p258 = scmp.ne.s32.totalorder %s253, %s255
    %p259 = scmp.eq.s32.totalorder %s20, 0
    %p260 = por %p258, %p259
    %p261 = scmp.ne.s32.totalorder %s253, %s255
    %p262 = scmp.eq.s32.totalorder %s25, 3
    %p263 = por %p261, %p262
    %p264 = scmp.ne.s32.totalorder %s255, %s256
    %p265 = scmp.eq.s32.totalorder %s25, 0
    %p266 = por %p264, %p265
    %p267 = scmp.ne.s32.totalorder %s255, %s256
    %p268 = scmp.eq.s32.totalorder %s26, 3
    %p269 = por %p267, %p268
    %p271 = scmp.ne.s32.totalorder %s256, %s270
    %p272 = scmp.eq.s32.totalorder %s26, 0
    %p273 = por %p271, %p272
    %s274 = ssub.s32 %s20, %s27
    %p275 = scmp.eq.s32.totalorder %s274, 0
    %s277 = sadd.s32 %s276, 1
    %s278 = scalar_select %p275, %s276, %s277
    %p281 = pneg %p275
    %p282 = scmp.eq.s32.totalorder %s20, 3
    %p283 = por %p281, %p282
    %p284 = scmp.ne.s32.totalorder %s276, %s279
    %p285 = scmp.eq.s32.totalorder %s20, 0
    %p286 = por %p284, %p285
    %p287 = scmp.ne.s32.totalorder %s276, %s279
    %p288 = scmp.eq.s32.totalorder %s25, 3
    %p289 = por %p287, %p288
    %p290 = scmp.ne.s32.totalorder %s279, %s280
    %p291 = scmp.eq.s32.totalorder %s25, 0
    %p292 = por %p290, %p291
    %p293 = scmp.ne.s32.totalorder %s279, %s280
    %p294 = scmp.eq.s32.totalorder %s26, 3
    %p295 = por %p293, %p294
    %p297 = scmp.ne.s32.totalorder %s280, %s296
    %p298 = scmp.eq.s32.totalorder %s26, 0
    %p299 = por %p297, %p298
    %s300 = ssub.s32 %s20, %s27
    %p301 = scmp.eq.s32.totalorder %s300, 0
    %s303 = sadd.s32 %s302, 1
    %s304 = scalar_select %p301, %s302, %s303
    %p307 = pneg %p301
    %p308 = scmp.eq.s32.totalorder %s20, 3
    %p309 = por %p307, %p308
    %p310 = scmp.ne.s32.totalorder %s302, %s305
    %p311 = scmp.eq.s32.totalorder %s20, 0
    %p312 = por %p310, %p311
    %p313 = scmp.ne.s32.totalorder %s302, %s305
    %p314 = scmp.eq.s32.totalorder %s25, 3
    %p315 = por %p313, %p314
    %p316 = scmp.ne.s32.totalorder %s305, %s306
    %p317 = scmp.eq.s32.totalorder %s25, 0
    %p318 = por %p316, %p317
    %p319 = scmp.ne.s32.totalorder %s305, %s306
    %p320 = scmp.eq.s32.totalorder %s26, 3
    %p321 = por %p319, %p320
    %p323 = scmp.ne.s32.totalorder %s306, %s322
    %p324 = scmp.eq.s32.totalorder %s26, 0
    %p325 = por %p323, %p324
    %s326 = ssub.s32 %s20, %s27
    %p327 = scmp.eq.s32.totalorder %s326, 0
    %s329 = sadd.s32 %s328, 1
    %s330 = scalar_select %p327, %s328, %s329
    %p333 = pneg %p327
    %p334 = scmp.eq.s32.totalorder %s20, 3
    %p335 = por %p333, %p334
    %p336 = scmp.ne.s32.totalorder %s328, %s331
    %p337 = scmp.eq.s32.totalorder %s20, 0
    %p338 = por %p336, %p337
    %p339 = scmp.ne.s32.totalorder %s328, %s331
    %p340 = scmp.eq.s32.totalorder %s25, 3
    %p341 = por %p339, %p340
    %p342 = scmp.ne.s32.totalorder %s331, %s332
    %p343 = scmp.eq.s32.totalorder %s25, 0
    %p344 = por %p342, %p343
    %p345 = scmp.ne.s32.totalorder %s331, %s332
    %p346 = scmp.eq.s32.totalorder %s26, 3
    %p347 = por %p345, %p346
    %p349 = scmp.ne.s32.totalorder %s332, %s348
    %p350 = scmp.eq.s32.totalorder %s26, 0
    %p351 = por %p349, %p350
    %p352 = scmp.le.s32.totalorder 1, %s20
    %p353 = scmp.lt.s32.totalorder %s20, 5
    %p354 = pnand %p352, %p353
    %p355 = pneg %p354
    // Predicated region
    $region9: #{tpu_custom_call.1} parent=5 // pred_check
      _
    $region10: #{tpu_custom_call.1} parent=5 // pred_check_branch
      %357 = sbr.rel (%p354) target = $region12
    $region11: #{tpu_custom_call.1} parent=5 // pred_region
      %s358 = ssub.s32 %s20, 1
      // Predicated region
      $region13: #{tpu_custom_call.1} parent=11 // pred_check
        %p359 = pneg %p119
      $region14: #{tpu_custom_call.1} parent=11 // pred_check_branch
        %361 = sbr.rel (%p359) target = $region16
      $region15: #{tpu_custom_call.1} parent=11 // pred_region
        _
      $region16: #{tpu_custom_call.1} parent=11 // pred_fallthru
        _
      // Predicated region
      $region17: #{tpu_custom_call.1} parent=11 // pred_check
        %p362 = pneg %p140
      $region18: #{tpu_custom_call.1} parent=11 // pred_check_branch
        %364 = sbr.rel (%p362) target = $region20
      $region19: #{tpu_custom_call.1} parent=11 // pred_region
        _
      $region20: #{tpu_custom_call.1} parent=11 // pred_fallthru
        _
      // Predicated region
      $region21: #{tpu_custom_call.1} parent=11 // pred_check
        %p365 = pneg %p161
      $region22: #{tpu_custom_call.1} parent=11 // pred_check_branch
        %367 = sbr.rel (%p365) target = $region24
      $region23: #{tpu_custom_call.1} parent=11 // pred_region
        _
      $region24: #{tpu_custom_call.1} parent=11 // pred_fallthru
        _
      // Predicated region
      $region25: #{tpu_custom_call.1} parent=11 // pred_check
        %p368 = pneg %p182
      $region26: #{tpu_custom_call.1} parent=11 // pred_check_branch
        %370 = sbr.rel (%p368) target = $region28
      $region27: #{tpu_custom_call.1} parent=11 // pred_region
        _
      $region28: #{tpu_custom_call.1} parent=11 // pred_fallthru
        _
      // Predicated region
      $region29: #{tpu_custom_call.1} parent=11 // pred_check
        %p371 = pneg %p203
      $region30: #{tpu_custom_call.1} parent=11 // pred_check_branch
        %373 = sbr.rel (%p371) target = $region32
      $region31: #{tpu_custom_call.1} parent=11 // pred_region
        _
      $region32: #{tpu_custom_call.1} parent=11 // pred_fallthru
        _
      // Predicated region
      $region33: #{tpu_custom_call.1} parent=11 // pred_check
        %p374 = pneg %p224
      $region34: #{tpu_custom_call.1} parent=11 // pred_check_branch
        %376 = sbr.rel (%p374) target = $region36
      $region35: #{tpu_custom_call.1} parent=11 // pred_region
        _
      $region36: #{tpu_custom_call.1} parent=11 // pred_fallthru
        _
      // Predicated region
      $region37: #{tpu_custom_call.1} parent=11 // pred_check
        %p377 = pneg %p245
      $region38: #{tpu_custom_call.1} parent=11 // pred_check_branch
        %379 = sbr.rel (%p377) target = $region40
      $region39: #{tpu_custom_call.1} parent=11 // pred_region
        _
      $region40: #{tpu_custom_call.1} parent=11 // pred_fallthru
        _
      // Predicated region
      $region41: #{tpu_custom_call.1} parent=11 // pred_check
        %p380 = pneg %p266
      $region42: #{tpu_custom_call.1} parent=11 // pred_check_branch
        %382 = sbr.rel (%p380) target = $region44
      $region43: #{tpu_custom_call.1} parent=11 // pred_region
        _
      $region44: #{tpu_custom_call.1} parent=11 // pred_fallthru
        _
    $region12: #{tpu_custom_call.1} parent=5 // pred_fallthru
      _
    %p383 = scmp.lt.s32.totalorder %s20, 4
    // Predicated region
    $region45: #{tpu_custom_call.1} parent=5 // pred_check
      %p384 = pneg %p383
    $region46: #{tpu_custom_call.1} parent=5 // pred_check_branch
      %386 = sbr.rel (%p384) target = $region48
    $region47: #{tpu_custom_call.1} parent=5 // pred_region
      // Predicated region
      $region49: #{tpu_custom_call.1} parent=47 // pred_check
        %p387 = pneg %p40
      $region50: #{tpu_custom_call.1} parent=47 // pred_check_branch
        %389 = sbr.rel (%p387) target = $region52
      $region51: #{tpu_custom_call.1} parent=47 // pred_region
        %s390 = smul.u32 4, %s20
        %p391 = scmp.lt.s32.totalorder %s390, 15
        %s392 = scalar_select %p391, %s390, 15
        %s393 = smul.addr %s392, 8
        %s394 = scalar_lea.vmem %s0, %s393
        %s395 = smul.u32 4, %s20
      $region52: #{tpu_custom_call.1} parent=47 // pred_fallthru
        _
      // Predicated region
      $region53: #{tpu_custom_call.1} parent=47 // pred_check
        %p396 = pneg %p66
      $region54: #{tpu_custom_call.1} parent=47 // pred_check_branch
        %398 = sbr.rel (%p396) target = $region56
      $region55: #{tpu_custom_call.1} parent=47 // pred_region
        %s399 = smul.u32 4, %s20
        %p400 = scmp.lt.s32.totalorder %s399, 15
        %s401 = scalar_select %p400, %s399, 15
        %s402 = smul.addr %s401, 8
        %s403 = scalar_lea.vmem %s1, %s402
        %s404 = smul.u32 4, %s20
      $region56: #{tpu_custom_call.1} parent=47 // pred_fallthru
        _
      // Predicated region
      $region57: #{tpu_custom_call.1} parent=47 // pred_check
        %p405 = pneg %p92
      $region58: #{tpu_custom_call.1} parent=47 // pred_check_branch
        %407 = sbr.rel (%p405) target = $region60
      $region59: #{tpu_custom_call.1} parent=47 // pred_region
        %s408 = smul.u32 4, %s20
        %p409 = scmp.lt.s32.totalorder %s408, 15
        %s410 = scalar_select %p409, %s408, 15
        %s411 = smul.addr %s410, 2
        %s412 = smul.addr %s411, 8
        %s413 = scalar_lea.vmem %s2, %s412
        %s414 = smul.u32 4, %s20
      $region60: #{tpu_custom_call.1} parent=47 // pred_fallthru
        _
    $region48: #{tpu_custom_call.1} parent=5 // pred_fallthru
      _
    %p415 = scmp.le.s32.totalorder 1, %s20
    %p416 = scmp.lt.s32.totalorder %s20, 5
    %p417 = pnand %p415, %p416
    %p418 = pneg %p417
    // Predicated region
    $region61: #{tpu_custom_call.1} parent=5 // pred_check
      _
    $region62: #{tpu_custom_call.1} parent=5 // pred_check_branch
      %420 = sbr.rel (%p417) target = $region64
    $region63: #{tpu_custom_call.1} parent=5 // pred_region
      %s421 = ssub.s32 %s20, 1
      %s422 = smul.u32 4, %s25
      %p423 = scmp.lt.s32.totalorder %s422, 15
      %s424 = scalar_select %p423, %s422, 15
      %s425 = smul.addr %s424, 8
      %s426 = scalar_lea.vmem %s0, %s425
      %p427 = pneg %p46
      %p428 = pneg %p43
      %s429 = smul.u32 4, %s25
      %p430 = scmp.lt.s32.totalorder %s429, 15
      %s431 = scalar_select %p430, %s429, 15
      %s432 = smul.addr %s431, 8
      %s433 = scalar_lea.vmem %s1, %s432
      %p434 = pneg %p72
      %p435 = pneg %p69
      %s436 = smul.u32 4, %s25
      %p437 = scmp.lt.s32.totalorder %s436, 15
      %s438 = scalar_select %p437, %s436, 15
      %s439 = smul.addr %s438, 2
      %s440 = smul.addr %s439, 8
      %s441 = scalar_lea.vmem %s2, %s440
      %p442 = pneg %p98
      %p443 = pneg %p95
      %p444 = pneg %p119
      %p445 = pneg %p116
      %p446 = pneg %p140
      %p447 = pneg %p137
      %p448 = pneg %p161
      %p449 = pneg %p158
      %p450 = pneg %p182
      %p451 = pneg %p179
      %p452 = pneg %p203
      %p453 = pneg %p200
      %p454 = pneg %p224
      %p455 = pneg %p221
      %p456 = pneg %p245
      %p457 = pneg %p242
      %p458 = pneg %p266
      %p459 = pneg %p263
      %p460 = pneg %p292
      %p461 = pneg %p289
      %s462 = smul.u32 4, %s25
      %p463 = scmp.lt.s32.totalorder %s462, 15
      %s464 = scalar_select %p463, %s462, 15
      %s465 = smul.addr %s464, 8
      %s466 = scalar_lea.vmem %s11, %s465
      %p467 = pneg %p318
      %p468 = pneg %p315
      %s469 = smul.u32 4, %s25
      %p470 = scmp.lt.s32.totalorder %s469, 15
      %s471 = scalar_select %p470, %s469, 15
      %s472 = smul.addr %s471, 8
      %s473 = scalar_lea.vmem %s12, %s472
      %p474 = pneg %p344
      %p475 = pneg %p341
      %s476 = smul.u32 4, %s25
      %p477 = scmp.lt.s32.totalorder %s476, 15
      %s478 = scalar_select %p477, %s476, 15
      %s479 = smul.addr %s478, 2
      %s480 = smul.addr %s479, 8
      %s481 = scalar_lea.vmem %s13, %s480
      %s482 = smul.u32 4, %s25
      %p483 = scmp.lt.s32.totalorder %s482, 15
      %s484 = scalar_select %p483, %s482, 15
      %s485 = smul.addr %s484, 8
      %s486 = scalar_lea.vmem %s0, %s485
      %s487 = smul.u32 4, %s25
      %s488 = smul.u32 4, %s25
      %p489 = scmp.lt.s32.totalorder %s488, 15
      %s490 = scalar_select %p489, %s488, 15
      %s491 = smul.addr %s490, 8
      %s492 = scalar_lea.vmem %s1, %s491
      %s493 = smul.u32 4, %s25
      %s494 = smul.u32 4, %s25
      %p495 = scmp.lt.s32.totalorder %s494, 15
      %s496 = scalar_select %p495, %s494, 15
      %s497 = smul.addr %s496, 2
      %s498 = smul.addr %s497, 8
      %s499 = scalar_lea.vmem %s2, %s498
      %s500 = smul.u32 4, %s25
      %s501 = smul.u32 4, %s25
      %p502 = scmp.lt.s32.totalorder %s501, 15
      %s503 = scalar_select %p502, %s501, 15
      %s504 = smul.addr %s503, 8
      %s505 = scalar_lea.vmem %s11, %s504
      %s506 = smul.u32 4, %s25
      %s507 = smul.u32 4, %s25
      %p508 = scmp.lt.s32.totalorder %s507, 15
      %s509 = scalar_select %p508, %s507, 15
      %s510 = smul.addr %s509, 8
      %s511 = scalar_lea.vmem %s12, %s510
      %s512 = smul.u32 4, %s25
      %s513 = smul.u32 4, %s25
      %p514 = scmp.lt.s32.totalorder %s513, 15
      %s515 = scalar_select %p514, %s513, 15
      %s516 = smul.addr %s515, 2
      %s517 = smul.addr %s516, 8
      %s518 = scalar_lea.vmem %s13, %s517
      %s519 = smul.u32 4, %s25
      %v520 = vld [vmem:[%s3] sm:$0xff]
      %v521 = vld [vmem:[%s3 + $0x8] sm:$0xff]
      %v522 = vld [vmem:[%s3 + $0x10] sm:$0xff]
      %v523 = vld [vmem:[%s3 + $0x18] sm:$0xff]
      %v524 = vld [vmem:[%s486] sm:$0xff]
      %v525 = vld [vmem:[%s486 + $0x8] sm:$0xff]
      %v526 = vld [vmem:[%s486 + $0x10] sm:$0xff]
      %v527 = vld [vmem:[%s486 + $0x18] sm:$0xff]
      %v528 = vld [vmem:[%s492] sm:$0xff]
      %v529 = vld [vmem:[%s492 + $0x8] sm:$0xff]
      %v530 = vld [vmem:[%s492 + $0x10] sm:$0xff]
      %v531 = vld [vmem:[%s492 + $0x18] sm:$0xff]
      %vm532 = vcmask 261120
      %v534 = vsel %vm532, %v528, 0
      %v537 = vsel %vm532, %v529, 0
      %v540 = vsel %vm532, %v530, 0
      %v543 = vsel %vm532, %v531, 0
      %545 = vmatprep.subr.mxu0 0.0
      %546 = vmatpush1.msra.mxu0 %v520
      %547 = vmatprep.subr.mxu0 0.0
      %548 = vmatpush1.msra.mxu0 %v521
      %549 = vmatprep.subr.mxu0 0.0
      %550 = vmatpush1.msra.mxu0 %v522
      %551 = vmatprep.subr.mxu0 0.0
      %552 = vmatpush1.msra.mxu0 %v523
      %553 = vmatprep.subr.mxu0 0.0
      %554 = vmatpush1.msra.mxu0 0.0
      %555 = vmatprep.subr.mxu0 0.0
      %556 = vmatpush1.msra.mxu0 0.0
      %557 = vmatprep.subr.mxu0 0.0
      %558 = vmatpush1.msra.mxu0 0.0
      %559 = vmatprep.subr.mxu0 0.0
      %560 = vmatpush1.msra.mxu0 0.0
      %561 = vmatprep.subr.mxu0 0.0
      %562 = vmatpush1.msra.mxu0 0.0
      %563 = vmatprep.subr.mxu0 0.0
      %564 = vmatpush1.msra.mxu0 0.0
      %565 = vmatprep.subr.mxu0 0.0
      %566 = vmatpush1.msra.mxu0 0.0
      %567 = vmatprep.subr.mxu0 0.0
      %568 = vmatpush1.msra.mxu0 0.0
      %569 = vmatprep.subr.mxu0 0.0
      %570 = vmatpush1.msra.mxu0 0.0
      %571 = vmatprep.subr.mxu0 0.0
      %572 = vmatpush1.msra.mxu0 0.0
      %573 = vmatprep.subr.mxu0 0.0
      %574 = vmatpush1.msra.mxu0 0.0
      %575 = vmatprep.subr.mxu0 0.0
      %576 = vmatpush1.msra.mxu0 0.0
      %577 = vmatprep.subr.mxu0 0.0
      %578 = vmatpush1.msra.mxu0 0.0
      %579 = vmatprep.subr.mxu0 0.0
      %580 = vmatpush1.msra.mxu0 0.0
      %581 = vmatprep.subr.mxu0 0.0
      %582 = vmatpush1.msra.mxu0 0.0
      %583 = vmatprep.subr.mxu0 0.0
      %584 = vmatpush1.msra.mxu0 0.0
      %585 = vmatprep.subr.mxu0 0.0
      %586 = vmatpush1.msra.mxu0 0.0
      %587 = vmatprep.subr.mxu0 0.0
      %588 = vmatpush1.msra.mxu0 0.0
      %589 = vmatprep.subr.mxu0 0.0
      %590 = vmatpush1.msra.mxu0 0.0
      %591 = vmatprep.subr.mxu0 0.0
      %592 = vmatpush1.msra.mxu0 0.0
      %593 = vmatprep.subr.mxu0 0.0
      %594 = vmatpush1.msra.mxu0 0.0
      %595 = vmatprep.subr.mxu0 0.0
      %596 = vmatpush1.msra.mxu0 0.0
      %597 = vmatprep.subr.mxu0 0.0
      %598 = vmatpush1.msra.mxu0 0.0
      %599 = vmatprep.subr.mxu0 0.0
      %600 = vmatpush1.msra.mxu0 0.0
      %601 = vmatprep.subr.mxu0 0.0
      %602 = vmatpush1.msra.mxu0 0.0
      %603 = vmatprep.subr.mxu0 0.0
      %604 = vmatpush1.msra.mxu0 0.0
      %605 = vmatprep.subr.mxu0 0.0
      %606 = vmatpush1.msra.mxu0 0.0
      %607 = vmatprep.subr.mxu0 0.0
      %608 = vmatpush1.msra.mxu0 0.0
      %609 = vmatprep.mubr.f32.mxu0 0.0
      %610 = vmatmul.mubr.f32.gmra.mrb[0].mxu0 %v534
      %v611 = vpop.f32.mrb[0].mxu0
      %v612 = vadd.f32 0.0, %v611
      %v613 = vpop.f32.mrb[0].mxu0
      %614 = vmatprep.mubr.f32.mxu0 0.0
      %615 = vmatmul.mubr.f32.gmra.mrb[0].mxu0 %v537
      %v616 = vpop.f32.mrb[0].mxu0
      %v617 = vadd.f32 0.0, %v616
      %v618 = vpop.f32.mrb[0].mxu0
      %619 = vmatprep.mubr.f32.mxu0 0.0
      %620 = vmatmul.mubr.f32.gmra.mrb[0].mxu0 %v540
      %v621 = vpop.f32.mrb[0].mxu0
      %v622 = vadd.f32 0.0, %v621
      %v623 = vpop.f32.mrb[0].mxu0
      %624 = vmatprep.mubr.f32.mxu0 0.0
      %625 = vmatmul.mubr.f32.gmra.mrb[0].mxu0 %v543
      %v626 = vpop.f32.mrb[0].mxu0
      %v627 = vadd.f32 0.0, %v626
      %v628 = vpop.f32.mrb[0].mxu0
      %629 = vdwg.mxu0
      %v630 = vmul.f32 %v612, %v612
      %v631 = vmul.f32 %v617, %v617
      %v632 = vmul.f32 %v622, %v622
      %v633 = vmul.f32 %v627, %v627
      %v634 = vadd.f32 %v630, 0.0
      %v635 = vadd.f32 %v631, 0.0
      %v636 = vadd.f32 %v632, 0.0
      %v637 = vadd.f32 %v633, 0.0
      %638 = vrot.lane.b32.xlu0 %v528, 96
      %v639 = vpop.permute.xlu0 %638
      %640 = vrot.lane.b32.xlu0 %v529, 96
      %v641 = vpop.permute.xlu0 %640
      %642 = vrot.lane.b32.xlu0 %v530, 96
      %v643 = vpop.permute.xlu0 %642
      %644 = vrot.lane.b32.xlu0 %v531, 96
      %v645 = vpop.permute.xlu0 %644
      %v646 = vsel %vm532, %v639, 0
      %v648 = vsel %vm532, %v641, 0
      %v650 = vsel %vm532, %v643, 0
      %v652 = vsel %vm532, %v645, 0
      %654 = vmatprep.subr.mxu0 0.0
      %655 = vmatpush1.msra.mxu0 %v520
      %656 = vmatprep.subr.mxu0 0.0
      %657 = vmatpush1.msra.mxu0 %v521
      %658 = vmatprep.subr.mxu0 0.0
      %659 = vmatpush1.msra.mxu0 %v522
      %660 = vmatprep.subr.mxu0 0.0
      %661 = vmatpush1.msra.mxu0 %v523
      %662 = vmatprep.subr.mxu0 0.0
      %663 = vmatpush1.msra.mxu0 0.0
      %664 = vmatprep.subr.mxu0 0.0
      %665 = vmatpush1.msra.mxu0 0.0
      %666 = vmatprep.subr.mxu0 0.0
      %667 = vmatpush1.msra.mxu0 0.0
      %668 = vmatprep.subr.mxu0 0.0
      %669 = vmatpush1.msra.mxu0 0.0
      %670 = vmatprep.subr.mxu0 0.0
      %671 = vmatpush1.msra.mxu0 0.0
      %672 = vmatprep.subr.mxu0 0.0
      %673 = vmatpush1.msra.mxu0 0.0
      %674 = vmatprep.subr.mxu0 0.0
      %675 = vmatpush1.msra.mxu0 0.0
      %676 = vmatprep.subr.mxu0 0.0
      %677 = vmatpush1.msra.mxu0 0.0
      %678 = vmatprep.subr.mxu0 0.0
      %679 = vmatpush1.msra.mxu0 0.0
      %680 = vmatprep.subr.mxu0 0.0
      %681 = vmatpush1.msra.mxu0 0.0
      %682 = vmatprep.subr.mxu0 0.0
      %683 = vmatpush1.msra.mxu0 0.0
      %684 = vmatprep.subr.mxu0 0.0
      %685 = vmatpush1.msra.mxu0 0.0
      %686 = vmatprep.subr.mxu0 0.0
      %687 = vmatpush1.msra.mxu0 0.0
      %688 = vmatprep.subr.mxu0 0.0
      %689 = vmatpush1.msra.mxu0 0.0
      %690 = vmatprep.subr.mxu0 0.0
      %691 = vmatpush1.msra.mxu0 0.0
      %692 = vmatprep.subr.mxu0 0.0
      %693 = vmatpush1.msra.mxu0 0.0
      %694 = vmatprep.subr.mxu0 0.0
      %695 = vmatpush1.msra.mxu0 0.0
      %696 = vmatprep.subr.mxu0 0.0
      %697 = vmatpush1.msra.mxu0 0.0
      %698 = vmatprep.subr.mxu0 0.0
      %699 = vmatpush1.msra.mxu0 0.0
      %700 = vmatprep.subr.mxu0 0.0
      %701 = vmatpush1.msra.mxu0 0.0
      %702 = vmatprep.subr.mxu0 0.0
      %703 = vmatpush1.msra.mxu0 0.0
      %704 = vmatprep.subr.mxu0 0.0
      %705 = vmatpush1.msra.mxu0 0.0
      %706 = vmatprep.subr.mxu0 0.0
      %707 = vmatpush1.msra.mxu0 0.0
      %708 = vmatprep.subr.mxu0 0.0
      %709 = vmatpush1.msra.mxu0 0.0
      %710 = vmatprep.subr.mxu0 0.0
      %711 = vmatpush1.msra.mxu0 0.0
      %712 = vmatprep.subr.mxu0 0.0
      %713 = vmatpush1.msra.mxu0 0.0
      %714 = vmatprep.subr.mxu0 0.0
      %715 = vmatpush1.msra.mxu0 0.0
      %716 = vmatprep.subr.mxu0 0.0
      %717 = vmatpush1.msra.mxu0 0.0
      %718 = vmatprep.mubr.f32.mxu0 0.0
      %719 = vmatmul.mubr.f32.gmra.mrb[0].mxu0 %v646
      %v720 = vpop.f32.mrb[0].mxu0
      %v721 = vadd.f32 0.0, %v720
      %v722 = vpop.f32.mrb[0].mxu0
      %723 = vmatprep.mubr.f32.mxu0 0.0
      %724 = vmatmul.mubr.f32.gmra.mrb[0].mxu0 %v648
      %v725 = vpop.f32.mrb[0].mxu0
      %v726 = vadd.f32 0.0, %v725
      %v727 = vpop.f32.mrb[0].mxu0
      %728 = vmatprep.mubr.f32.mxu0 0.0
      %729 = vmatmul.mubr.f32.gmra.mrb[0].mxu0 %v650
      %v730 = vpop.f32.mrb[0].mxu0
      %v731 = vadd.f32 0.0, %v730
      %v732 = vpop.f32.mrb[0].mxu0
      %733 = vmatprep.mubr.f32.mxu0 0.0
      %734 = vmatmul.mubr.f32.gmra.mrb[0].mxu0 %v652
      %v735 = vpop.f32.mrb[0].mxu0
      %v736 = vadd.f32 0.0, %v735
      %v737 = vpop.f32.mrb[0].mxu0
      %738 = vdwg.mxu0
      %v739 = vmul.f32 %v721, %v721
      %v740 = vmul.f32 %v726, %v726
      %v741 = vmul.f32 %v731, %v731
      %v742 = vmul.f32 %v736, %v736
      %v743 = vadd.f32 %v634, %v739
      %v744 = vadd.f32 %v635, %v740
      %v745 = vadd.f32 %v636, %v741
      %v746 = vadd.f32 %v637, %v742
      %747 = vrot.lane.b32.xlu0 %v528, 64
      %v748 = vpop.permute.xlu0 %747
      %749 = vrot.lane.b32.xlu0 %v529, 64
      %v750 = vpop.permute.xlu0 %749
      %751 = vrot.lane.b32.xlu0 %v530, 64
      %v752 = vpop.permute.xlu0 %751
      %753 = vrot.lane.b32.xlu0 %v531, 64
      %v754 = vpop.permute.xlu0 %753
      %v755 = vsel %vm532, %v748, 0
      %v757 = vsel %vm532, %v750, 0
      %v759 = vsel %vm532, %v752, 0
      %v761 = vsel %vm532, %v754, 0
      %763 = vmatprep.subr.mxu0 0.0
      %764 = vmatpush1.msra.mxu0 %v520
      %765 = vmatprep.subr.mxu0 0.0
      %766 = vmatpush1.msra.mxu0 %v521
      %767 = vmatprep.subr.mxu0 0.0
      %768 = vmatpush1.msra.mxu0 %v522
      %769 = vmatprep.subr.mxu0 0.0
      %770 = vmatpush1.msra.mxu0 %v523
      %771 = vmatprep.subr.mxu0 0.0
      %772 = vmatpush1.msra.mxu0 0.0
      %773 = vmatprep.subr.mxu0 0.0
      %774 = vmatpush1.msra.mxu0 0.0
      %775 = vmatprep.subr.mxu0 0.0
      %776 = vmatpush1.msra.mxu0 0.0
      %777 = vmatprep.subr.mxu0 0.0
      %778 = vmatpush1.msra.mxu0 0.0
      %779 = vmatprep.subr.mxu0 0.0
      %780 = vmatpush1.msra.mxu0 0.0
      %781 = vmatprep.subr.mxu0 0.0
      %782 = vmatpush1.msra.mxu0 0.0
      %783 = vmatprep.subr.mxu0 0.0
      %784 = vmatpush1.msra.mxu0 0.0
      %785 = vmatprep.subr.mxu0 0.0
      %786 = vmatpush1.msra.mxu0 0.0
      %787 = vmatprep.subr.mxu0 0.0
      %788 = vmatpush1.msra.mxu0 0.0
      %789 = vmatprep.subr.mxu0 0.0
      %790 = vmatpush1.msra.mxu0 0.0
      %791 = vmatprep.subr.mxu0 0.0
      %792 = vmatpush1.msra.mxu0 0.0
      %793 = vmatprep.subr.mxu0 0.0
      %794 = vmatpush1.msra.mxu0 0.0
      %795 = vmatprep.subr.mxu0 0.0
      %796 = vmatpush1.msra.mxu0 0.0
      %797 = vmatprep.subr.mxu0 0.0
      %798 = vmatpush1.msra.mxu0 0.0
      %799 = vmatprep.subr.mxu0 0.0
      %800 = vmatpush1.msra.mxu0 0.0
      %801 = vmatprep.subr.mxu0 0.0
      %802 = vmatpush1.msra.mxu0 0.0
      %803 = vmatprep.subr.mxu0 0.0
      %804 = vmatpush1.msra.mxu0 0.0
      %805 = vmatprep.subr.mxu0 0.0
      %806 = vmatpush1.msra.mxu0 0.0
      %807 = vmatprep.subr.mxu0 0.0
      %808 = vmatpush1.msra.mxu0 0.0
      %809 = vmatprep.subr.mxu0 0.0
      %810 = vmatpush1.msra.mxu0 0.0
      %811 = vmatprep.subr.mxu0 0.0
      %812 = vmatpush1.msra.mxu0 0.0
      %813 = vmatprep.subr.mxu0 0.0
      %814 = vmatpush1.msra.mxu0 0.0
      %815 = vmatprep.subr.mxu0 0.0
      %816 = vmatpush1.msra.mxu0 0.0
      %817 = vmatprep.subr.mxu0 0.0
      %818 = vmatpush1.msra.mxu0 0.0
      %819 = vmatprep.subr.mxu0 0.0
      %820 = vmatpush1.msra.mxu0 0.0
      %821 = vmatprep.subr.mxu0 0.0
      %822 = vmatpush1.msra.mxu0 0.0
      %823 = vmatprep.subr.mxu0 0.0
      %824 = vmatpush1.msra.mxu0 0.0
      %825 = vmatprep.subr.mxu0 0.0
      %826 = vmatpush1.msra.mxu0 0.0
      %827 = vmatprep.mubr.f32.mxu0 0.0
      %828 = vmatmul.mubr.f32.gmra.mrb[0].mxu0 %v755
      %v829 = vpop.f32.mrb[0].mxu0
      %v830 = vadd.f32 0.0, %v829
      %v831 = vpop.f32.mrb[0].mxu0
      %832 = vmatprep.mubr.f32.mxu0 0.0
      %833 = vmatmul.mubr.f32.gmra.mrb[0].mxu0 %v757
      %v834 = vpop.f32.mrb[0].mxu0
      %v835 = vadd.f32 0.0, %v834
      %v836 = vpop.f32.mrb[0].mxu0
      %837 = vmatprep.mubr.f32.mxu0 0.0
      %838 = vmatmul.mubr.f32.gmra.mrb[0].mxu0 %v759
      %v839 = vpop.f32.mrb[0].mxu0
      %v840 = vadd.f32 0.0, %v839
      %v841 = vpop.f32.mrb[0].mxu0
      %842 = vmatprep.mubr.f32.mxu0 0.0
      %843 = vmatmul.mubr.f32.gmra.mrb[0].mxu0 %v761
      %v844 = vpop.f32.mrb[0].mxu0
      %v845 = vadd.f32 0.0, %v844
      %v846 = vpop.f32.mrb[0].mxu0
      %847 = vdwg.mxu0
      %v848 = vmul.f32 %v830, %v830
      %v849 = vmul.f32 %v835, %v835
      %v850 = vmul.f32 %v840, %v840
      %v851 = vmul.f32 %v845, %v845
      %v852 = vadd.f32 %v743, %v848
      %v853 = vadd.f32 %v744, %v849
      %v854 = vadd.f32 %v745, %v850
      %v855 = vadd.f32 %v746, %v851
      %v856 = vld [vmem:[%s499] sm:$0xff]
      %v857 = vld [vmem:[%s499 + $0x8] sm:$0xff]
      %v858 = vld [vmem:[%s499 + $0x10] sm:$0xff]
      %v859 = vld [vmem:[%s499 + $0x18] sm:$0xff]
      %v860 = vld [vmem:[%s499 + $0x20] sm:$0xff]
      %v861 = vld [vmem:[%s499 + $0x28] sm:$0xff]
      %v862 = vld [vmem:[%s499 + $0x30] sm:$0xff]
      %v863 = vld [vmem:[%s499 + $0x38] sm:$0xff]
      %v865 = vsel %vm532, %v856, 0
      %v868 = vsel %vm532, %v858, 0
      %v871 = vsel %vm532, %v860, 0
      %v874 = vsel %vm532, %v862, 0
      %876 = vmatprep.subr.mxu0 0.0
      %877 = vmatpush1.msra.mxu0 %v520
      %878 = vmatprep.subr.mxu0 0.0
      %879 = vmatpush1.msra.mxu0 %v521
      %880 = vmatprep.subr.mxu0 0.0
      %881 = vmatpush1.msra.mxu0 %v522
      %882 = vmatprep.subr.mxu0 0.0
      %883 = vmatpush1.msra.mxu0 %v523
      %884 = vmatprep.subr.mxu0 0.0
      %885 = vmatpush1.msra.mxu0 0.0
      %886 = vmatprep.subr.mxu0 0.0
      %887 = vmatpush1.msra.mxu0 0.0
      %888 = vmatprep.subr.mxu0 0.0
      %889 = vmatpush1.msra.mxu0 0.0
      %890 = vmatprep.subr.mxu0 0.0
      %891 = vmatpush1.msra.mxu0 0.0
      %892 = vmatprep.subr.mxu0 0.0
      %893 = vmatpush1.msra.mxu0 0.0
      %894 = vmatprep.subr.mxu0 0.0
      %895 = vmatpush1.msra.mxu0 0.0
      %896 = vmatprep.subr.mxu0 0.0
      %897 = vmatpush1.msra.mxu0 0.0
      %898 = vmatprep.subr.mxu0 0.0
      %899 = vmatpush1.msra.mxu0 0.0
      %900 = vmatprep.subr.mxu0 0.0
      %901 = vmatpush1.msra.mxu0 0.0
      %902 = vmatprep.subr.mxu0 0.0
      %903 = vmatpush1.msra.mxu0 0.0
      %904 = vmatprep.subr.mxu0 0.0
      %905 = vmatpush1.msra.mxu0 0.0
      %906 = vmatprep.subr.mxu0 0.0
      %907 = vmatpush1.msra.mxu0 0.0
      %908 = vmatprep.subr.mxu0 0.0
      %909 = vmatpush1.msra.mxu0 0.0
      %910 = vmatprep.subr.mxu0 0.0
      %911 = vmatpush1.msra.mxu0 0.0
      %912 = vmatprep.subr.mxu0 0.0
      %913 = vmatpush1.msra.mxu0 0.0
      %914 = vmatprep.subr.mxu0 0.0
      %915 = vmatpush1.msra.mxu0 0.0
      %916 = vmatprep.subr.mxu0 0.0
      %917 = vmatpush1.msra.mxu0 0.0
      %918 = vmatprep.subr.mxu0 0.0
      %919 = vmatpush1.msra.mxu0 0.0
      %920 = vmatprep.subr.mxu0 0.0
      %921 = vmatpush1.msra.mxu0 0.0
      %922 = vmatprep.subr.mxu0 0.0
      %923 = vmatpush1.msra.mxu0 0.0
      %924 = vmatprep.subr.mxu0 0.0
      %925 = vmatpush1.msra.mxu0 0.0
      %926 = vmatprep.subr.mxu0 0.0
      %927 = vmatpush1.msra.mxu0 0.0
      %928 = vmatprep.subr.mxu0 0.0
      %929 = vmatpush1.msra.mxu0 0.0
      %930 = vmatprep.subr.mxu0 0.0
      %931 = vmatpush1.msra.mxu0 0.0
      %932 = vmatprep.subr.mxu0 0.0
      %933 = vmatpush1.msra.mxu0 0.0
      %934 = vmatprep.subr.mxu0 0.0
      %935 = vmatpush1.msra.mxu0 0.0
      %936 = vmatprep.subr.mxu0 0.0
      %937 = vmatpush1.msra.mxu0 0.0
      %938 = vmatprep.subr.mxu0 0.0
      %939 = vmatpush1.msra.mxu0 0.0
      %940 = vmatprep.mubr.f32.mxu0 0.0
      %941 = vmatmul.mubr.f32.gmra.mrb[0].mxu0 %v865
      %v942 = vpop.f32.mrb[0].mxu0
      %v943 = vadd.f32 0.0, %v942
      %v944 = vpop.f32.mrb[0].mxu0
      %945 = vmatprep.mubr.f32.mxu0 0.0
      %946 = vmatmul.mubr.f32.gmra.mrb[0].mxu0 %v868
      %v947 = vpop.f32.mrb[0].mxu0
      %v948 = vadd.f32 0.0, %v947
      %v949 = vpop.f32.mrb[0].mxu0
      %950 = vmatprep.mubr.f32.mxu0 0.0
      %951 = vmatmul.mubr.f32.gmra.mrb[0].mxu0 %v871
      %v952 = vpop.f32.mrb[0].mxu0
      %v953 = vadd.f32 0.0, %v952
      %v954 = vpop.f32.mrb[0].mxu0
      %955 = vmatprep.mubr.f32.mxu0 0.0
      %956 = vmatmul.mubr.f32.gmra.mrb[0].mxu0 %v874
      %v957 = vpop.f32.mrb[0].mxu0
      %v958 = vadd.f32 0.0, %v957
      %v959 = vpop.f32.mrb[0].mxu0
      %960 = vdwg.mxu0
      %v961 = vmul.f32 %v943, %v943
      %v962 = vmul.f32 %v948, %v948
      %v963 = vmul.f32 %v953, %v953
      %v964 = vmul.f32 %v958, %v958
      %v965 = vadd.f32 %v852, %v961
      %v966 = vadd.f32 %v853, %v962
      %v967 = vadd.f32 %v854, %v963
      %v968 = vadd.f32 %v855, %v964
      %969 = vrot.lane.b32.xlu0 %v856, 96
      %v970 = vpop.permute.xlu0 %969
      %971 = vrot.lane.b32.xlu0 %v858, 96
      %v972 = vpop.permute.xlu0 %971
      %973 = vrot.lane.b32.xlu0 %v860, 96
      %v974 = vpop.permute.xlu0 %973
      %975 = vrot.lane.b32.xlu0 %v862, 96
      %v976 = vpop.permute.xlu0 %975
      %v977 = vsel %vm532, %v970, 0
      %v979 = vsel %vm532, %v972, 0
      %v981 = vsel %vm532, %v974, 0
      %v983 = vsel %vm532, %v976, 0
      %985 = vmatprep.subr.mxu0 0.0
      %986 = vmatpush1.msra.mxu0 %v520
      %987 = vmatprep.subr.mxu0 0.0
      %988 = vmatpush1.msra.mxu0 %v521
      %989 = vmatprep.subr.mxu0 0.0
      %990 = vmatpush1.msra.mxu0 %v522
      %991 = vmatprep.subr.mxu0 0.0
      %992 = vmatpush1.msra.mxu0 %v523
      %993 = vmatprep.subr.mxu0 0.0
      %994 = vmatpush1.msra.mxu0 0.0
      %995 = vmatprep.subr.mxu0 0.0
      %996 = vmatpush1.msra.mxu0 0.0
      %997 = vmatprep.subr.mxu0 0.0
      %998 = vmatpush1.msra.mxu0 0.0
      %999 = vmatprep.subr.mxu0 0.0
      %1000 = vmatpush1.msra.mxu0 0.0
      %1001 = vmatprep.subr.mxu0 0.0
      %1002 = vmatpush1.msra.mxu0 0.0
      %1003 = vmatprep.subr.mxu0 0.0
      %1004 = vmatpush1.msra.mxu0 0.0
      %1005 = vmatprep.subr.mxu0 0.0
      %1006 = vmatpush1.msra.mxu0 0.0
      %1007 = vmatprep.subr.mxu0 0.0
      %1008 = vmatpush1.msra.mxu0 0.0
      %1009 = vmatprep.subr.mxu0 0.0
      %1010 = vmatpush1.msra.mxu0 0.0
      %1011 = vmatprep.subr.mxu0 0.0
      %1012 = vmatpush1.msra.mxu0 0.0
      %1013 = vmatprep.subr.mxu0 0.0
      %1014 = vmatpush1.msra.mxu0 0.0
      %1015 = vmatprep.subr.mxu0 0.0
      %1016 = vmatpush1.msra.mxu0 0.0
      %1017 = vmatprep.subr.mxu0 0.0
      %1018 = vmatpush1.msra.mxu0 0.0
      %1019 = vmatprep.subr.mxu0 0.0
      %1020 = vmatpush1.msra.mxu0 0.0
      %1021 = vmatprep.subr.mxu0 0.0
      %1022 = vmatpush1.msra.mxu0 0.0
      %1023 = vmatprep.subr.mxu0 0.0
      %1024 = vmatpush1.msra.mxu0 0.0
      %1025 = vmatprep.subr.mxu0 0.0
      %1026 = vmatpush1.msra.mxu0 0.0
      %1027 = vmatprep.subr.mxu0 0.0
      %1028 = vmatpush1.msra.mxu0 0.0
      %1029 = vmatprep.subr.mxu0 0.0
      %1030 = vmatpush1.msra.mxu0 0.0
      %1031 = vmatprep.subr.mxu0 0.0
      %1032 = vmatpush1.msra.mxu0 0.0
      %1033 = vmatprep.subr.mxu0 0.0
      %1034 = vmatpush1.msra.mxu0 0.0
      %1035 = vmatprep.subr.mxu0 0.0
      %1036 = vmatpush1.msra.mxu0 0.0
      %1037 = vmatprep.subr.mxu0 0.0
      %1038 = vmatpush1.msra.mxu0 0.0
      %1039 = vmatprep.subr.mxu0 0.0
      %1040 = vmatpush1.msra.mxu0 0.0
      %1041 = vmatprep.subr.mxu0 0.0
      %1042 = vmatpush1.msra.mxu0 0.0
      %1043 = vmatprep.subr.mxu0 0.0
      %1044 = vmatpush1.msra.mxu0 0.0
      %1045 = vmatprep.subr.mxu0 0.0
      %1046 = vmatpush1.msra.mxu0 0.0
      %1047 = vmatprep.subr.mxu0 0.0
      %1048 = vmatpush1.msra.mxu0 0.0
      %1049 = vmatprep.mubr.f32.mxu0 0.0
      %1050 = vmatmul.mubr.f32.gmra.mrb[0].mxu0 %v977
      %v1051 = vpop.f32.mrb[0].mxu0
      %v1052 = vadd.f32 0.0, %v1051
      %v1053 = vpop.f32.mrb[0].mxu0
      %1054 = vmatprep.mubr.f32.mxu0 0.0
      %1055 = vmatmul.mubr.f32.gmra.mrb[0].mxu0 %v979
      %v1056 = vpop.f32.mrb[0].mxu0
      %v1057 = vadd.f32 0.0, %v1056
      %v1058 = vpop.f32.mrb[0].mxu0
      %1059 = vmatprep.mubr.f32.mxu0 0.0
      %1060 = vmatmul.mubr.f32.gmra.mrb[0].mxu0 %v981
      %v1061 = vpop.f32.mrb[0].mxu0
      %v1062 = vadd.f32 0.0, %v1061
      %v1063 = vpop.f32.mrb[0].mxu0
      %1064 = vmatprep.mubr.f32.mxu0 0.0
      %1065 = vmatmul.mubr.f32.gmra.mrb[0].mxu0 %v983
      %v1066 = vpop.f32.mrb[0].mxu0
      %v1067 = vadd.f32 0.0, %v1066
      %v1068 = vpop.f32.mrb[0].mxu0
      %1069 = vdwg.mxu0
      %v1070 = vmul.f32 %v1052, %v1052
      %v1071 = vmul.f32 %v1057, %v1057
      %v1072 = vmul.f32 %v1062, %v1062
      %v1073 = vmul.f32 %v1067, %v1067
      %v1074 = vadd.f32 %v965, %v1070
      %v1075 = vadd.f32 %v966, %v1071
      %v1076 = vadd.f32 %v967, %v1072
      %v1077 = vadd.f32 %v968, %v1073
      %1078 = vrot.lane.b32.xlu0 %v856, 64
      %v1079 = vpop.permute.xlu0 %1078
      %1080 = vrot.lane.b32.xlu0 %v858, 64
      %v1081 = vpop.permute.xlu0 %1080
      %1082 = vrot.lane.b32.xlu0 %v860, 64
      %v1083 = vpop.permute.xlu0 %1082
      %1084 = vrot.lane.b32.xlu0 %v862, 64
      %v1085 = vpop.permute.xlu0 %1084
      %v1086 = vsel %vm532, %v1079, 0
      %v1088 = vsel %vm532, %v1081, 0
      %v1090 = vsel %vm532, %v1083, 0
      %v1092 = vsel %vm532, %v1085, 0
      %1094 = vmatprep.subr.mxu0 0.0
      %1095 = vmatpush1.msra.mxu0 %v520
      %1096 = vmatprep.subr.mxu0 0.0
      %1097 = vmatpush1.msra.mxu0 %v521
      %1098 = vmatprep.subr.mxu0 0.0
      %1099 = vmatpush1.msra.mxu0 %v522
      %1100 = vmatprep.subr.mxu0 0.0
      %1101 = vmatpush1.msra.mxu0 %v523
      %1102 = vmatprep.subr.mxu0 0.0
      %1103 = vmatpush1.msra.mxu0 0.0
      %1104 = vmatprep.subr.mxu0 0.0
      %1105 = vmatpush1.msra.mxu0 0.0
      %1106 = vmatprep.subr.mxu0 0.0
      %1107 = vmatpush1.msra.mxu0 0.0
      %1108 = vmatprep.subr.mxu0 0.0
      %1109 = vmatpush1.msra.mxu0 0.0
      %1110 = vmatprep.subr.mxu0 0.0
      %1111 = vmatpush1.msra.mxu0 0.0
      %1112 = vmatprep.subr.mxu0 0.0
      %1113 = vmatpush1.msra.mxu0 0.0
      %1114 = vmatprep.subr.mxu0 0.0
      %1115 = vmatpush1.msra.mxu0 0.0
      %1116 = vmatprep.subr.mxu0 0.0
      %1117 = vmatpush1.msra.mxu0 0.0
      %1118 = vmatprep.subr.mxu0 0.0
      %1119 = vmatpush1.msra.mxu0 0.0
      %1120 = vmatprep.subr.mxu0 0.0
      %1121 = vmatpush1.msra.mxu0 0.0
      %1122 = vmatprep.subr.mxu0 0.0
      %1123 = vmatpush1.msra.mxu0 0.0
      %1124 = vmatprep.subr.mxu0 0.0
      %1125 = vmatpush1.msra.mxu0 0.0
      %1126 = vmatprep.subr.mxu0 0.0
      %1127 = vmatpush1.msra.mxu0 0.0
      %1128 = vmatprep.subr.mxu0 0.0
      %1129 = vmatpush1.msra.mxu0 0.0
      %1130 = vmatprep.subr.mxu0 0.0
      %1131 = vmatpush1.msra.mxu0 0.0
      %1132 = vmatprep.subr.mxu0 0.0
      %1133 = vmatpush1.msra.mxu0 0.0
      %1134 = vmatprep.subr.mxu0 0.0
      %1135 = vmatpush1.msra.mxu0 0.0
      %1136 = vmatprep.subr.mxu0 0.0
      %1137 = vmatpush1.msra.mxu0 0.0
      %1138 = vmatprep.subr.mxu0 0.0
      %1139 = vmatpush1.msra.mxu0 0.0
      %1140 = vmatprep.subr.mxu0 0.0
      %1141 = vmatpush1.msra.mxu0 0.0
      %1142 = vmatprep.subr.mxu0 0.0
      %1143 = vmatpush1.msra.mxu0 0.0
      %1144 = vmatprep.subr.mxu0 0.0
      %1145 = vmatpush1.msra.mxu0 0.0
      %1146 = vmatprep.subr.mxu0 0.0
      %1147 = vmatpush1.msra.mxu0 0.0
      %1148 = vmatprep.subr.mxu0 0.0
      %1149 = vmatpush1.msra.mxu0 0.0
      %1150 = vmatprep.subr.mxu0 0.0
      %1151 = vmatpush1.msra.mxu0 0.0
      %1152 = vmatprep.subr.mxu0 0.0
      %1153 = vmatpush1.msra.mxu0 0.0
      %1154 = vmatprep.subr.mxu0 0.0
      %1155 = vmatpush1.msra.mxu0 0.0
      %1156 = vmatprep.subr.mxu0 0.0
      %1157 = vmatpush1.msra.mxu0 0.0
      %1158 = vmatprep.mubr.f32.mxu0 0.0
      %1159 = vmatmul.mubr.f32.gmra.mrb[0].mxu0 %v1086
      %v1160 = vpop.f32.mrb[0].mxu0
      %v1161 = vadd.f32 0.0, %v1160
      %v1162 = vpop.f32.mrb[0].mxu0
      %1163 = vmatprep.mubr.f32.mxu0 0.0
      %1164 = vmatmul.mubr.f32.gmra.mrb[0].mxu0 %v1088
      %v1165 = vpop.f32.mrb[0].mxu0
      %v1166 = vadd.f32 0.0, %v1165
      %v1167 = vpop.f32.mrb[0].mxu0
      %1168 = vmatprep.mubr.f32.mxu0 0.0
      %1169 = vmatmul.mubr.f32.gmra.mrb[0].mxu0 %v1090
      %v1170 = vpop.f32.mrb[0].mxu0
      %v1171 = vadd.f32 0.0, %v1170
      %v1172 = vpop.f32.mrb[0].mxu0
      %1173 = vmatprep.mubr.f32.mxu0 0.0
      %1174 = vmatmul.mubr.f32.gmra.mrb[0].mxu0 %v1092
      %v1175 = vpop.f32.mrb[0].mxu0
      %v1176 = vadd.f32 0.0, %v1175
      %v1177 = vpop.f32.mrb[0].mxu0
      %1178 = vdwg.mxu0
      %v1179 = vmul.f32 %v1161, %v1161
      %v1180 = vmul.f32 %v1166, %v1166
      %v1181 = vmul.f32 %v1171, %v1171
      %v1182 = vmul.f32 %v1176, %v1176
      %v1183 = vadd.f32 %v1074, %v1179
      %v1184 = vadd.f32 %v1075, %v1180
      %v1185 = vadd.f32 %v1076, %v1181
      %v1186 = vadd.f32 %v1077, %v1182
      %1187 = vrot.lane.b32.xlu0 %v856, 32
      %v1188 = vpop.permute.xlu0 %1187
      %1189 = vrot.lane.b32.xlu0 %v858, 32
      %v1190 = vpop.permute.xlu0 %1189
      %1191 = vrot.lane.b32.xlu0 %v860, 32
      %v1192 = vpop.permute.xlu0 %1191
      %1193 = vrot.lane.b32.xlu0 %v862, 32
      %v1194 = vpop.permute.xlu0 %1193
      %v1195 = vsel %vm532, %v1188, 0
      %v1197 = vsel %vm532, %v1190, 0
      %v1199 = vsel %vm532, %v1192, 0
      %v1201 = vsel %vm532, %v1194, 0
      %1203 = vmatprep.subr.mxu0 0.0
      %1204 = vmatpush1.msra.mxu0 %v520
      %1205 = vmatprep.subr.mxu0 0.0
      %1206 = vmatpush1.msra.mxu0 %v521
      %1207 = vmatprep.subr.mxu0 0.0
      %1208 = vmatpush1.msra.mxu0 %v522
      %1209 = vmatprep.subr.mxu0 0.0
      %1210 = vmatpush1.msra.mxu0 %v523
      %1211 = vmatprep.subr.mxu0 0.0
      %1212 = vmatpush1.msra.mxu0 0.0
      %1213 = vmatprep.subr.mxu0 0.0
      %1214 = vmatpush1.msra.mxu0 0.0
      %1215 = vmatprep.subr.mxu0 0.0
      %1216 = vmatpush1.msra.mxu0 0.0
      %1217 = vmatprep.subr.mxu0 0.0
      %1218 = vmatpush1.msra.mxu0 0.0
      %1219 = vmatprep.subr.mxu0 0.0
      %1220 = vmatpush1.msra.mxu0 0.0
      %1221 = vmatprep.subr.mxu0 0.0
      %1222 = vmatpush1.msra.mxu0 0.0
      %1223 = vmatprep.subr.mxu0 0.0
      %1224 = vmatpush1.msra.mxu0 0.0
      %1225 = vmatprep.subr.mxu0 0.0
      %1226 = vmatpush1.msra.mxu0 0.0
      %1227 = vmatprep.subr.mxu0 0.0
      %1228 = vmatpush1.msra.mxu0 0.0
      %1229 = vmatprep.subr.mxu0 0.0
      %1230 = vmatpush1.msra.mxu0 0.0
      %1231 = vmatprep.subr.mxu0 0.0
      %1232 = vmatpush1.msra.mxu0 0.0
      %1233 = vmatprep.subr.mxu0 0.0
      %1234 = vmatpush1.msra.mxu0 0.0
      %1235 = vmatprep.subr.mxu0 0.0
      %1236 = vmatpush1.msra.mxu0 0.0
      %1237 = vmatprep.subr.mxu0 0.0
      %1238 = vmatpush1.msra.mxu0 0.0
      %1239 = vmatprep.subr.mxu0 0.0
      %1240 = vmatpush1.msra.mxu0 0.0
      %1241 = vmatprep.subr.mxu0 0.0
      %1242 = vmatpush1.msra.mxu0 0.0
      %1243 = vmatprep.subr.mxu0 0.0
      %1244 = vmatpush1.msra.mxu0 0.0
      %1245 = vmatprep.subr.mxu0 0.0
      %1246 = vmatpush1.msra.mxu0 0.0
      %1247 = vmatprep.subr.mxu0 0.0
      %1248 = vmatpush1.msra.mxu0 0.0
      %1249 = vmatprep.subr.mxu0 0.0
      %1250 = vmatpush1.msra.mxu0 0.0
      %1251 = vmatprep.subr.mxu0 0.0
      %1252 = vmatpush1.msra.mxu0 0.0
      %1253 = vmatprep.subr.mxu0 0.0
      %1254 = vmatpush1.msra.mxu0 0.0
      %1255 = vmatprep.subr.mxu0 0.0
      %1256 = vmatpush1.msra.mxu0 0.0
      %1257 = vmatprep.subr.mxu0 0.0
      %1258 = vmatpush1.msra.mxu0 0.0
      %1259 = vmatprep.subr.mxu0 0.0
      %1260 = vmatpush1.msra.mxu0 0.0
      %1261 = vmatprep.subr.mxu0 0.0
      %1262 = vmatpush1.msra.mxu0 0.0
      %1263 = vmatprep.subr.mxu0 0.0
      %1264 = vmatpush1.msra.mxu0 0.0
      %1265 = vmatprep.subr.mxu0 0.0
      %1266 = vmatpush1.msra.mxu0 0.0
      %1267 = vmatprep.mubr.f32.mxu0 0.0
      %1268 = vmatmul.mubr.f32.gmra.mrb[0].mxu0 %v1195
      %v1269 = vpop.f32.mrb[0].mxu0
      %v1270 = vadd.f32 0.0, %v1269
      %v1271 = vpop.f32.mrb[0].mxu0
      %1272 = vmatprep.mubr.f32.mxu0 0.0
      %1273 = vmatmul.mubr.f32.gmra.mrb[0].mxu0 %v1197
      %v1274 = vpop.f32.mrb[0].mxu0
      %v1275 = vadd.f32 0.0, %v1274
      %v1276 = vpop.f32.mrb[0].mxu0
      %1277 = vmatprep.mubr.f32.mxu0 0.0
      %1278 = vmatmul.mubr.f32.gmra.mrb[0].mxu0 %v1199
      %v1279 = vpop.f32.mrb[0].mxu0
      %v1280 = vadd.f32 0.0, %v1279
      %v1281 = vpop.f32.mrb[0].mxu0
      %1282 = vmatprep.mubr.f32.mxu0 0.0
      %1283 = vmatmul.mubr.f32.gmra.mrb[0].mxu0 %v1201
      %v1284 = vpop.f32.mrb[0].mxu0
      %v1285 = vadd.f32 0.0, %v1284
      %v1286 = vpop.f32.mrb[0].mxu0
      %1287 = vdwg.mxu0
      %v1288 = vmul.f32 %v1270, %v1270
      %v1289 = vmul.f32 %v1275, %v1275
      %v1290 = vmul.f32 %v1280, %v1280
      %v1291 = vmul.f32 %v1285, %v1285
      %v1292 = vadd.f32 %v1183, %v1288
      %v1293 = vadd.f32 %v1184, %v1289
      %v1294 = vadd.f32 %v1185, %v1290
      %v1295 = vadd.f32 %v1186, %v1291
      %v1297 = vsel %vm532, %v857, 0
      %v1300 = vsel %vm532, %v859, 0
      %v1303 = vsel %vm532, %v861, 0
      %v1306 = vsel %vm532, %v863, 0
      %1308 = vmatprep.subr.mxu0 0.0
      %1309 = vmatpush1.msra.mxu0 %v520
      %1310 = vmatprep.subr.mxu0 0.0
      %1311 = vmatpush1.msra.mxu0 %v521
      %1312 = vmatprep.subr.mxu0 0.0
      %1313 = vmatpush1.msra.mxu0 %v522
      %1314 = vmatprep.subr.mxu0 0.0
      %1315 = vmatpush1.msra.mxu0 %v523
      %1316 = vmatprep.subr.mxu0 0.0
      %1317 = vmatpush1.msra.mxu0 0.0
      %1318 = vmatprep.subr.mxu0 0.0
      %1319 = vmatpush1.msra.mxu0 0.0
      %1320 = vmatprep.subr.mxu0 0.0
      %1321 = vmatpush1.msra.mxu0 0.0
      %1322 = vmatprep.subr.mxu0 0.0
      %1323 = vmatpush1.msra.mxu0 0.0
      %1324 = vmatprep.subr.mxu0 0.0
      %1325 = vmatpush1.msra.mxu0 0.0
      %1326 = vmatprep.subr.mxu0 0.0
      %1327 = vmatpush1.msra.mxu0 0.0
      %1328 = vmatprep.subr.mxu0 0.0
      %1329 = vmatpush1.msra.mxu0 0.0
      %1330 = vmatprep.subr.mxu0 0.0
      %1331 = vmatpush1.msra.mxu0 0.0
      %1332 = vmatprep.subr.mxu0 0.0
      %1333 = vmatpush1.msra.mxu0 0.0
      %1334 = vmatprep.subr.mxu0 0.0
      %1335 = vmatpush1.msra.mxu0 0.0
      %1336 = vmatprep.subr.mxu0 0.0
      %1337 = vmatpush1.msra.mxu0 0.0
      %1338 = vmatprep.subr.mxu0 0.0
      %1339 = vmatpush1.msra.mxu0 0.0
      %1340 = vmatprep.subr.mxu0 0.0
      %1341 = vmatpush1.msra.mxu0 0.0
      %1342 = vmatprep.subr.mxu0 0.0
      %1343 = vmatpush1.msra.mxu0 0.0
      %1344 = vmatprep.subr.mxu0 0.0
      %1345 = vmatpush1.msra.mxu0 0.0
      %1346 = vmatprep.subr.mxu0 0.0
      %1347 = vmatpush1.msra.mxu0 0.0
      %1348 = vmatprep.subr.mxu0 0.0
      %1349 = vmatpush1.msra.mxu0 0.0
      %1350 = vmatprep.subr.mxu0 0.0
      %1351 = vmatpush1.msra.mxu0 0.0
      %1352 = vmatprep.subr.mxu0 0.0
      %1353 = vmatpush1.msra.mxu0 0.0
      %1354 = vmatprep.subr.mxu0 0.0
      %1355 = vmatpush1.msra.mxu0 0.0
      %1356 = vmatprep.subr.mxu0 0.0
      %1357 = vmatpush1.msra.mxu0 0.0
      %1358 = vmatprep.subr.mxu0 0.0
      %1359 = vmatpush1.msra.mxu0 0.0
      %1360 = vmatprep.subr.mxu0 0.0
      %1361 = vmatpush1.msra.mxu0 0.0
      %1362 = vmatprep.subr.mxu0 0.0
      %1363 = vmatpush1.msra.mxu0 0.0
      %1364 = vmatprep.subr.mxu0 0.0
      %1365 = vmatpush1.msra.mxu0 0.0
      %1366 = vmatprep.subr.mxu0 0.0
      %1367 = vmatpush1.msra.mxu0 0.0
      %1368 = vmatprep.subr.mxu0 0.0
      %1369 = vmatpush1.msra.mxu0 0.0
      %1370 = vmatprep.subr.mxu0 0.0
      %1371 = vmatpush1.msra.mxu0 0.0
      %1372 = vmatprep.mubr.f32.mxu0 0.0
      %1373 = vmatmul.mubr.f32.gmra.mrb[0].mxu0 %v1297
      %v1374 = vpop.f32.mrb[0].mxu0
      %v1375 = vadd.f32 0.0, %v1374
      %v1376 = vpop.f32.mrb[0].mxu0
      %1377 = vmatprep.mubr.f32.mxu0 0.0
      %1378 = vmatmul.mubr.f32.gmra.mrb[0].mxu0 %v1300
      %v1379 = vpop.f32.mrb[0].mxu0
      %v1380 = vadd.f32 0.0, %v1379
      %v1381 = vpop.f32.mrb[0].mxu0
      %1382 = vmatprep.mubr.f32.mxu0 0.0
      %1383 = vmatmul.mubr.f32.gmra.mrb[0].mxu0 %v1303
      %v1384 = vpop.f32.mrb[0].mxu0
      %v1385 = vadd.f32 0.0, %v1384
      %v1386 = vpop.f32.mrb[0].mxu0
      %1387 = vmatprep.mubr.f32.mxu0 0.0
      %1388 = vmatmul.mubr.f32.gmra.mrb[0].mxu0 %v1306
      %v1389 = vpop.f32.mrb[0].mxu0
      %v1390 = vadd.f32 0.0, %v1389
      %v1391 = vpop.f32.mrb[0].mxu0
      %1392 = vdwg.mxu0
      %v1393 = vmul.f32 %v1375, %v1375
      %v1394 = vmul.f32 %v1380, %v1380
      %v1395 = vmul.f32 %v1385, %v1385
      %v1396 = vmul.f32 %v1390, %v1390
      %v1397 = vadd.f32 %v1292, %v1393
      %v1398 = vadd.f32 %v1293, %v1394
      %v1399 = vadd.f32 %v1294, %v1395
      %v1400 = vadd.f32 %v1295, %v1396
      %v1401 = vadd.f32 %v1397, 1e-08
      %v1402 = vadd.f32 %v1398, 1e-08
      %v1403 = vadd.f32 %v1399, 1e-08
      %v1404 = vadd.f32 %v1400, 1e-08
      %v1405 = vrsqrt.pop %v1401
      %v1406 = vmul.f32 %v1401, %v1405
      %vm1407 = vcmp.eq.f32.partialorder %v1401, inf
      %v1408 = vsel %vm1407, %v1401, %v1406
      %vm1409 = vcmp.eq.f32.partialorder %v1401, 0.0
      %v1410 = vand.u32 %v1401, 2147483648
      %v1411 = vsel %vm1409, %v1410, %v1408
      %v1412 = vrsqrt.pop %v1402
      %v1413 = vmul.f32 %v1402, %v1412
      %vm1414 = vcmp.eq.f32.partialorder %v1402, inf
      %v1415 = vsel %vm1414, %v1402, %v1413
      %vm1416 = vcmp.eq.f32.partialorder %v1402, 0.0
      %v1417 = vand.u32 %v1402, 2147483648
      %v1418 = vsel %vm1416, %v1417, %v1415
      %v1419 = vrsqrt.pop %v1403
      %v1420 = vmul.f32 %v1403, %v1419
      %vm1421 = vcmp.eq.f32.partialorder %v1403, inf
      %v1422 = vsel %vm1421, %v1403, %v1420
      %vm1423 = vcmp.eq.f32.partialorder %v1403, 0.0
      %v1424 = vand.u32 %v1403, 2147483648
      %v1425 = vsel %vm1423, %v1424, %v1422
      %v1426 = vrsqrt.pop %v1404
      %v1427 = vmul.f32 %v1404, %v1426
      %vm1428 = vcmp.eq.f32.partialorder %v1404, inf
      %v1429 = vsel %vm1428, %v1404, %v1427
      %vm1430 = vcmp.eq.f32.partialorder %v1404, 0.0
      %v1431 = vand.u32 %v1404, 2147483648
      %v1432 = vsel %vm1430, %v1431, %v1429
      %v1433 = vld [vmem:[%s4] sm:$0xff]
      %v1434 = vld [vmem:[%s4 + $0x8] sm:$0xff]
      %v1435 = vld [vmem:[%s4 + $0x10] sm:$0xff]
      %v1436 = vld [vmem:[%s4 + $0x18] sm:$0xff]
      %v1437 = vld [vmem:[%s5] sm:$0xff]
      %v1438 = vld [vmem:[%s5 + $0x8] sm:$0xff]
      %v1439 = vld [vmem:[%s5 + $0x10] sm:$0xff]
      %v1440 = vld [vmem:[%s5 + $0x18] sm:$0xff]
      %v1442 = vsel %vm532, %v1411, 0
      %v1445 = vsel %vm532, %v1418, 0
      %v1448 = vsel %vm532, %v1425, 0
      %v1451 = vsel %vm532, %v1432, 0
      %1453 = vmatprep.subr.mxu0 0.0
      %1454 = vmatpush1.msra.mxu0 %v1437
      %1455 = vmatprep.subr.mxu0 0.0
      %1456 = vmatpush1.msra.mxu0 %v1438
      %1457 = vmatprep.subr.mxu0 0.0
      %1458 = vmatpush1.msra.mxu0 %v1439
      %1459 = vmatprep.subr.mxu0 0.0
      %1460 = vmatpush1.msra.mxu0 %v1440
      %1461 = vmatprep.subr.mxu0 0.0
      %1462 = vmatpush1.msra.mxu0 0.0
      %1463 = vmatprep.subr.mxu0 0.0
      %1464 = vmatpush1.msra.mxu0 0.0
      %1465 = vmatprep.subr.mxu0 0.0
      %1466 = vmatpush1.msra.mxu0 0.0
      %1467 = vmatprep.subr.mxu0 0.0
      %1468 = vmatpush1.msra.mxu0 0.0
      %1469 = vmatprep.subr.mxu0 0.0
      %1470 = vmatpush1.msra.mxu0 0.0
      %1471 = vmatprep.subr.mxu0 0.0
      %1472 = vmatpush1.msra.mxu0 0.0
      %1473 = vmatprep.subr.mxu0 0.0
      %1474 = vmatpush1.msra.mxu0 0.0
      %1475 = vmatprep.subr.mxu0 0.0
      %1476 = vmatpush1.msra.mxu0 0.0
      %1477 = vmatprep.subr.mxu0 0.0
      %1478 = vmatpush1.msra.mxu0 0.0
      %1479 = vmatprep.subr.mxu0 0.0
      %1480 = vmatpush1.msra.mxu0 0.0
      %1481 = vmatprep.subr.mxu0 0.0
      %1482 = vmatpush1.msra.mxu0 0.0
      %1483 = vmatprep.subr.mxu0 0.0
      %1484 = vmatpush1.msra.mxu0 0.0
      %1485 = vmatprep.subr.mxu0 0.0
      %1486 = vmatpush1.msra.mxu0 0.0
      %1487 = vmatprep.subr.mxu0 0.0
      %1488 = vmatpush1.msra.mxu0 0.0
      %1489 = vmatprep.subr.mxu0 0.0
      %1490 = vmatpush1.msra.mxu0 0.0
      %1491 = vmatprep.subr.mxu0 0.0
      %1492 = vmatpush1.msra.mxu0 0.0
      %1493 = vmatprep.subr.mxu0 0.0
      %1494 = vmatpush1.msra.mxu0 0.0
      %1495 = vmatprep.subr.mxu0 0.0
      %1496 = vmatpush1.msra.mxu0 0.0
      %1497 = vmatprep.subr.mxu0 0.0
      %1498 = vmatpush1.msra.mxu0 0.0
      %1499 = vmatprep.subr.mxu0 0.0
      %1500 = vmatpush1.msra.mxu0 0.0
      %1501 = vmatprep.subr.mxu0 0.0
      %1502 = vmatpush1.msra.mxu0 0.0
      %1503 = vmatprep.subr.mxu0 0.0
      %1504 = vmatpush1.msra.mxu0 0.0
      %1505 = vmatprep.subr.mxu0 0.0
      %1506 = vmatpush1.msra.mxu0 0.0
      %1507 = vmatprep.subr.mxu0 0.0
      %1508 = vmatpush1.msra.mxu0 0.0
      %1509 = vmatprep.subr.mxu0 0.0
      %1510 = vmatpush1.msra.mxu0 0.0
      %1511 = vmatprep.subr.mxu0 0.0
      %1512 = vmatpush1.msra.mxu0 0.0
      %1513 = vmatprep.subr.mxu0 0.0
      %1514 = vmatpush1.msra.mxu0 0.0
      %1515 = vmatprep.subr.mxu0 0.0
      %1516 = vmatpush1.msra.mxu0 0.0
      %1517 = vmatprep.mubr.f32.mxu0 0.0
      %1518 = vmatmul.mubr.f32.gmra.mrb[0].mxu0 %v1442
      %v1519 = vpop.f32.mrb[0].mxu0
      %v1520 = vadd.f32 0.0, %v1519
      %v1521 = vpop.f32.mrb[0].mxu0
      %1522 = vmatprep.mubr.f32.mxu0 0.0
      %1523 = vmatmul.mubr.f32.gmra.mrb[0].mxu0 %v1445
      %v1524 = vpop.f32.mrb[0].mxu0
      %v1525 = vadd.f32 0.0, %v1524
      %v1526 = vpop.f32.mrb[0].mxu0
      %1527 = vmatprep.mubr.f32.mxu0 0.0
      %1528 = vmatmul.mubr.f32.gmra.mrb[0].mxu0 %v1448
      %v1529 = vpop.f32.mrb[0].mxu0
      %v1530 = vadd.f32 0.0, %v1529
      %v1531 = vpop.f32.mrb[0].mxu0
      %1532 = vmatprep.mubr.f32.mxu0 0.0
      %1533 = vmatmul.mubr.f32.gmra.mrb[0].mxu0 %v1451
      %v1534 = vpop.f32.mrb[0].mxu0
      %v1535 = vadd.f32 0.0, %v1534
      %v1536 = vpop.f32.mrb[0].mxu0
      %1537 = vdwg.mxu0
      %v1539 = vsel %vm532, %v524, 0
      %v1542 = vsel %vm532, %v525, 0
      %v1545 = vsel %vm532, %v526, 0
      %v1548 = vsel %vm532, %v527, 0
      %1550 = vmatprep.subr.mxu0 0.0
      %1551 = vmatpush1.msra.mxu0 %v1433
      %1552 = vmatprep.subr.mxu0 0.0
      %1553 = vmatpush1.msra.mxu0 %v1434
      %1554 = vmatprep.subr.mxu0 0.0
      %1555 = vmatpush1.msra.mxu0 %v1435
      %1556 = vmatprep.subr.mxu0 0.0
      %1557 = vmatpush1.msra.mxu0 %v1436
      %1558 = vmatprep.subr.mxu0 0.0
      %1559 = vmatpush1.msra.mxu0 0.0
      %1560 = vmatprep.subr.mxu0 0.0
      %1561 = vmatpush1.msra.mxu0 0.0
      %1562 = vmatprep.subr.mxu0 0.0
      %1563 = vmatpush1.msra.mxu0 0.0
      %1564 = vmatprep.subr.mxu0 0.0
      %1565 = vmatpush1.msra.mxu0 0.0
      %1566 = vmatprep.subr.mxu0 0.0
      %1567 = vmatpush1.msra.mxu0 0.0
      %1568 = vmatprep.subr.mxu0 0.0
      %1569 = vmatpush1.msra.mxu0 0.0
      %1570 = vmatprep.subr.mxu0 0.0
      %1571 = vmatpush1.msra.mxu0 0.0
      %1572 = vmatprep.subr.mxu0 0.0
      %1573 = vmatpush1.msra.mxu0 0.0
      %1574 = vmatprep.subr.mxu0 0.0
      %1575 = vmatpush1.msra.mxu0 0.0
      %1576 = vmatprep.subr.mxu0 0.0
      %1577 = vmatpush1.msra.mxu0 0.0
      %1578 = vmatprep.subr.mxu0 0.0
      %1579 = vmatpush1.msra.mxu0 0.0
      %1580 = vmatprep.subr.mxu0 0.0
      %1581 = vmatpush1.msra.mxu0 0.0
      %1582 = vmatprep.subr.mxu0 0.0
      %1583 = vmatpush1.msra.mxu0 0.0
      %1584 = vmatprep.subr.mxu0 0.0
      %1585 = vmatpush1.msra.mxu0 0.0
      %1586 = vmatprep.subr.mxu0 0.0
      %1587 = vmatpush1.msra.mxu0 0.0
      %1588 = vmatprep.subr.mxu0 0.0
      %1589 = vmatpush1.msra.mxu0 0.0
      %1590 = vmatprep.subr.mxu0 0.0
      %1591 = vmatpush1.msra.mxu0 0.0
      %1592 = vmatprep.subr.mxu0 0.0
      %1593 = vmatpush1.msra.mxu0 0.0
      %1594 = vmatprep.subr.mxu0 0.0
      %1595 = vmatpush1.msra.mxu0 0.0
      %1596 = vmatprep.subr.mxu0 0.0
      %1597 = vmatpush1.msra.mxu0 0.0
      %1598 = vmatprep.subr.mxu0 0.0
      %1599 = vmatpush1.msra.mxu0 0.0
      %1600 = vmatprep.subr.mxu0 0.0
      %1601 = vmatpush1.msra.mxu0 0.0
      %1602 = vmatprep.subr.mxu0 0.0
      %1603 = vmatpush1.msra.mxu0 0.0
      %1604 = vmatprep.subr.mxu0 0.0
      %1605 = vmatpush1.msra.mxu0 0.0
      %1606 = vmatprep.subr.mxu0 0.0
      %1607 = vmatpush1.msra.mxu0 0.0
      %1608 = vmatprep.subr.mxu0 0.0
      %1609 = vmatpush1.msra.mxu0 0.0
      %1610 = vmatprep.subr.mxu0 0.0
      %1611 = vmatpush1.msra.mxu0 0.0
      %1612 = vmatprep.subr.mxu0 0.0
      %1613 = vmatpush1.msra.mxu0 0.0
      %1614 = vmatprep.mubr.f32.mxu0 0.0
      %1615 = vmatmul.mubr.f32.gmra.mrb[0].mxu0 %v1539
      %v1616 = vpop.f32.mrb[0].mxu0
      %v1617 = vadd.f32 %v1520, %v1616
      %v1618 = vpop.f32.mrb[0].mxu0
      %1619 = vmatprep.mubr.f32.mxu0 0.0
      %1620 = vmatmul.mubr.f32.gmra.mrb[0].mxu0 %v1542
      %v1621 = vpop.f32.mrb[0].mxu0
      %v1622 = vadd.f32 %v1525, %v1621
      %v1623 = vpop.f32.mrb[0].mxu0
      %1624 = vmatprep.mubr.f32.mxu0 0.0
      %1625 = vmatmul.mubr.f32.gmra.mrb[0].mxu0 %v1545
      %v1626 = vpop.f32.mrb[0].mxu0
      %v1627 = vadd.f32 %v1530, %v1626
      %v1628 = vpop.f32.mrb[0].mxu0
      %1629 = vmatprep.mubr.f32.mxu0 0.0
      %1630 = vmatmul.mubr.f32.gmra.mrb[0].mxu0 %v1548
      %v1631 = vpop.f32.mrb[0].mxu0
      %v1632 = vadd.f32 %v1535, %v1631
      %v1633 = vpop.f32.mrb[0].mxu0
      %1634 = vdwg.mxu0
      %v1635 = vld [vmem:[%s6] sm:$0x1]
      %v1637 = vlaneseq
      %v1638 = vshrl.u32 %v1637, 7
      %v1639 = vsub.s32 0, %v1638
      %v1640 = vrot.slane %v1635, %v1639
      %v1642 = vadd.f32 %v1617, %v1640
      %v1643 = vadd.f32 %v1622, %v1640
      %v1644 = vadd.f32 %v1627, %v1640
      %v1645 = vadd.f32 %v1632, %v1640
      %v1646 = vxor.u32 %v1642, 2147483648
      %v1647 = vxor.u32 %v1643, 2147483648
      %v1648 = vxor.u32 %v1644, 2147483648
      %v1649 = vxor.u32 %v1645, 2147483648
      %v1650 = vmul.f32 %v1646, 1.442695
      %v1651 = vpow.pop %v1650
      %v1652 = vmul.f32 %v1647, 1.442695
      %v1653 = vpow.pop %v1652
      %v1654 = vmul.f32 %v1648, 1.442695
      %v1655 = vpow.pop %v1654
      %v1656 = vmul.f32 %v1649, 1.442695
      %v1657 = vpow.pop %v1656
      %v1658 = vadd.f32 %v1651, 1.0
      %v1659 = vadd.f32 %v1653, 1.0
      %v1660 = vadd.f32 %v1655, 1.0
      %v1661 = vadd.f32 %v1657, 1.0
      %v1662 = vrcp.pop %v1658
      %v1663 = vmul.f32 1.0, %v1662
      %v1664 = vrcp.pop %v1659
      %v1665 = vmul.f32 1.0, %v1664
      %v1666 = vrcp.pop %v1660
      %v1667 = vmul.f32 1.0, %v1666
      %v1668 = vrcp.pop %v1661
      %v1669 = vmul.f32 1.0, %v1668
      %v1670 = vmul.f32 %v1642, %v1663
      %v1671 = vmul.f32 %v1643, %v1665
      %v1672 = vmul.f32 %v1644, %v1667
      %v1673 = vmul.f32 %v1645, %v1669
      %v1674 = vld [vmem:[%s7] sm:$0xff]
      %v1675 = vld [vmem:[%s7 + $0x8] sm:$0xff]
      %v1676 = vld [vmem:[%s7 + $0x10] sm:$0xff]
      %v1677 = vld [vmem:[%s7 + $0x18] sm:$0xff]
      %v1678 = vld [vmem:[%s8] sm:$0x1]
      %v1680 = vlaneseq
      %v1681 = vshrl.u32 %v1680, 7
      %v1682 = vsub.s32 0, %v1681
      %v1683 = vrot.slane %v1678, %v1682
      %v1686 = vsel %vm532, %v1670, 0
      %v1689 = vsel %vm532, %v1671, 0
      %v1692 = vsel %vm532, %v1672, 0
      %v1695 = vsel %vm532, %v1673, 0
      %1697 = vmatprep.subr.mxu0 0.0
      %1698 = vmatpush1.msra.mxu0 %v1674
      %1699 = vmatprep.subr.mxu0 0.0
      %1700 = vmatpush1.msra.mxu0 %v1675
      %1701 = vmatprep.subr.mxu0 0.0
      %1702 = vmatpush1.msra.mxu0 %v1676
      %1703 = vmatprep.subr.mxu0 0.0
      %1704 = vmatpush1.msra.mxu0 %v1677
      %1705 = vmatprep.subr.mxu0 0.0
      %1706 = vmatpush1.msra.mxu0 0.0
      %1707 = vmatprep.subr.mxu0 0.0
      %1708 = vmatpush1.msra.mxu0 0.0
      %1709 = vmatprep.subr.mxu0 0.0
      %1710 = vmatpush1.msra.mxu0 0.0
      %1711 = vmatprep.subr.mxu0 0.0
      %1712 = vmatpush1.msra.mxu0 0.0
      %1713 = vmatprep.subr.mxu0 0.0
      %1714 = vmatpush1.msra.mxu0 0.0
      %1715 = vmatprep.subr.mxu0 0.0
      %1716 = vmatpush1.msra.mxu0 0.0
      %1717 = vmatprep.subr.mxu0 0.0
      %1718 = vmatpush1.msra.mxu0 0.0
      %1719 = vmatprep.subr.mxu0 0.0
      %1720 = vmatpush1.msra.mxu0 0.0
      %1721 = vmatprep.subr.mxu0 0.0
      %1722 = vmatpush1.msra.mxu0 0.0
      %1723 = vmatprep.subr.mxu0 0.0
      %1724 = vmatpush1.msra.mxu0 0.0
      %1725 = vmatprep.subr.mxu0 0.0
      %1726 = vmatpush1.msra.mxu0 0.0
      %1727 = vmatprep.subr.mxu0 0.0
      %1728 = vmatpush1.msra.mxu0 0.0
      %1729 = vmatprep.subr.mxu0 0.0
      %1730 = vmatpush1.msra.mxu0 0.0
      %1731 = vmatprep.subr.mxu0 0.0
      %1732 = vmatpush1.msra.mxu0 0.0
      %1733 = vmatprep.subr.mxu0 0.0
      %1734 = vmatpush1.msra.mxu0 0.0
      %1735 = vmatprep.subr.mxu0 0.0
      %1736 = vmatpush1.msra.mxu0 0.0
      %1737 = vmatprep.subr.mxu0 0.0
      %1738 = vmatpush1.msra.mxu0 0.0
      %1739 = vmatprep.subr.mxu0 0.0
      %1740 = vmatpush1.msra.mxu0 0.0
      %1741 = vmatprep.subr.mxu0 0.0
      %1742 = vmatpush1.msra.mxu0 0.0
      %1743 = vmatprep.subr.mxu0 0.0
      %1744 = vmatpush1.msra.mxu0 0.0
      %1745 = vmatprep.subr.mxu0 0.0
      %1746 = vmatpush1.msra.mxu0 0.0
      %1747 = vmatprep.subr.mxu0 0.0
      %1748 = vmatpush1.msra.mxu0 0.0
      %1749 = vmatprep.subr.mxu0 0.0
      %1750 = vmatpush1.msra.mxu0 0.0
      %1751 = vmatprep.subr.mxu0 0.0
      %1752 = vmatpush1.msra.mxu0 0.0
      %1753 = vmatprep.subr.mxu0 0.0
      %1754 = vmatpush1.msra.mxu0 0.0
      %1755 = vmatprep.subr.mxu0 0.0
      %1756 = vmatpush1.msra.mxu0 0.0
      %1757 = vmatprep.subr.mxu0 0.0
      %1758 = vmatpush1.msra.mxu0 0.0
      %1759 = vmatprep.subr.mxu0 0.0
      %1760 = vmatpush1.msra.mxu0 0.0
      %1761 = vmatprep.mubr.f32.mxu0 0.0
      %1762 = vmatmul.mubr.f32.gmra.mrb[0].mxu0 %v1686
      %v1763 = vpop.f32.mrb[0].mxu0
      %v1764 = vadd.f32 %v1683, %v1763
      %v1765 = vpop.f32.mrb[0].mxu0
      %1766 = vmatprep.mubr.f32.mxu0 0.0
      %1767 = vmatmul.mubr.f32.gmra.mrb[0].mxu0 %v1689
      %v1768 = vpop.f32.mrb[0].mxu0
      %v1769 = vadd.f32 %v1683, %v1768
      %v1770 = vpop.f32.mrb[0].mxu0
      %1771 = vmatprep.mubr.f32.mxu0 0.0
      %1772 = vmatmul.mubr.f32.gmra.mrb[0].mxu0 %v1692
      %v1773 = vpop.f32.mrb[0].mxu0
      %v1774 = vadd.f32 %v1683, %v1773
      %v1775 = vpop.f32.mrb[0].mxu0
      %1776 = vmatprep.mubr.f32.mxu0 0.0
      %1777 = vmatmul.mubr.f32.gmra.mrb[0].mxu0 %v1695
      %v1778 = vpop.f32.mrb[0].mxu0
      %v1779 = vadd.f32 %v1683, %v1778
      %v1780 = vpop.f32.mrb[0].mxu0
      %1781 = vdwg.mxu0
      %v1782 = vld [vmem:[%s9] sm:$0xff]
      %v1783 = vld [vmem:[%s9 + $0x8] sm:$0xff]
      %v1784 = vld [vmem:[%s9 + $0x10] sm:$0xff]
      %v1785 = vld [vmem:[%s9 + $0x18] sm:$0xff]
      %v1786 = vld [vmem:[%s10] sm:$0x1]
      %v1788 = vlaneseq
      %v1789 = vshrl.u32 %v1788, 7
      %v1790 = vsub.s32 0, %v1789
      %v1791 = vrot.slane %v1786, %v1790
      %1793 = vmatprep.subr.mxu0 0.0
      %1794 = vmatpush1.msra.mxu0 %v1782
      %1795 = vmatprep.subr.mxu0 0.0
      %1796 = vmatpush1.msra.mxu0 %v1783
      %1797 = vmatprep.subr.mxu0 0.0
      %1798 = vmatpush1.msra.mxu0 %v1784
      %1799 = vmatprep.subr.mxu0 0.0
      %1800 = vmatpush1.msra.mxu0 %v1785
      %1801 = vmatprep.subr.mxu0 0.0
      %1802 = vmatpush1.msra.mxu0 0.0
      %1803 = vmatprep.subr.mxu0 0.0
      %1804 = vmatpush1.msra.mxu0 0.0
      %1805 = vmatprep.subr.mxu0 0.0
      %1806 = vmatpush1.msra.mxu0 0.0
      %1807 = vmatprep.subr.mxu0 0.0
      %1808 = vmatpush1.msra.mxu0 0.0
      %1809 = vmatprep.subr.mxu0 0.0
      %1810 = vmatpush1.msra.mxu0 0.0
      %1811 = vmatprep.subr.mxu0 0.0
      %1812 = vmatpush1.msra.mxu0 0.0
      %1813 = vmatprep.subr.mxu0 0.0
      %1814 = vmatpush1.msra.mxu0 0.0
      %1815 = vmatprep.subr.mxu0 0.0
      %1816 = vmatpush1.msra.mxu0 0.0
      %1817 = vmatprep.subr.mxu0 0.0
      %1818 = vmatpush1.msra.mxu0 0.0
      %1819 = vmatprep.subr.mxu0 0.0
      %1820 = vmatpush1.msra.mxu0 0.0
      %1821 = vmatprep.subr.mxu0 0.0
      %1822 = vmatpush1.msra.mxu0 0.0
      %1823 = vmatprep.subr.mxu0 0.0
      %1824 = vmatpush1.msra.mxu0 0.0
      %1825 = vmatprep.subr.mxu0 0.0
      %1826 = vmatpush1.msra.mxu0 0.0
      %1827 = vmatprep.subr.mxu0 0.0
      %1828 = vmatpush1.msra.mxu0 0.0
      %1829 = vmatprep.subr.mxu0 0.0
      %1830 = vmatpush1.msra.mxu0 0.0
      %1831 = vmatprep.subr.mxu0 0.0
      %1832 = vmatpush1.msra.mxu0 0.0
      %1833 = vmatprep.subr.mxu0 0.0
      %1834 = vmatpush1.msra.mxu0 0.0
      %1835 = vmatprep.subr.mxu0 0.0
      %1836 = vmatpush1.msra.mxu0 0.0
      %1837 = vmatprep.subr.mxu0 0.0
      %1838 = vmatpush1.msra.mxu0 0.0
      %1839 = vmatprep.subr.mxu0 0.0
      %1840 = vmatpush1.msra.mxu0 0.0
      %1841 = vmatprep.subr.mxu0 0.0
      %1842 = vmatpush1.msra.mxu0 0.0
      %1843 = vmatprep.subr.mxu0 0.0
      %1844 = vmatpush1.msra.mxu0 0.0
      %1845 = vmatprep.subr.mxu0 0.0
      %1846 = vmatpush1.msra.mxu0 0.0
      %1847 = vmatprep.subr.mxu0 0.0
      %1848 = vmatpush1.msra.mxu0 0.0
      %1849 = vmatprep.subr.mxu0 0.0
      %1850 = vmatpush1.msra.mxu0 0.0
      %1851 = vmatprep.subr.mxu0 0.0
      %1852 = vmatpush1.msra.mxu0 0.0
      %1853 = vmatprep.subr.mxu0 0.0
      %1854 = vmatpush1.msra.mxu0 0.0
      %1855 = vmatprep.subr.mxu0 0.0
      %1856 = vmatpush1.msra.mxu0 0.0
      %1857 = vmatprep.mubr.f32.mxu0 0.0
      %1858 = vmatmul.mubr.f32.gmra.mrb[0].mxu0 %v1686
      %v1859 = vpop.f32.mrb[0].mxu0
      %v1860 = vadd.f32 %v1791, %v1859
      %v1861 = vpop.f32.mrb[0].mxu0
      %1862 = vmatprep.mubr.f32.mxu0 0.0
      %1863 = vmatmul.mubr.f32.gmra.mrb[0].mxu0 %v1689
      %v1864 = vpop.f32.mrb[0].mxu0
      %v1865 = vadd.f32 %v1791, %v1864
      %v1866 = vpop.f32.mrb[0].mxu0
      %1867 = vmatprep.mubr.f32.mxu0 0.0
      %1868 = vmatmul.mubr.f32.gmra.mrb[0].mxu0 %v1692
      %v1869 = vpop.f32.mrb[0].mxu0
      %v1870 = vadd.f32 %v1791, %v1869
      %v1871 = vpop.f32.mrb[0].mxu0
      %1872 = vmatprep.mubr.f32.mxu0 0.0
      %1873 = vmatmul.mubr.f32.gmra.mrb[0].mxu0 %v1695
      %v1874 = vpop.f32.mrb[0].mxu0
      %v1875 = vadd.f32 %v1791, %v1874
      %v1876 = vpop.f32.mrb[0].mxu0
      %1877 = vdwg.mxu0
      %v1878 = vadd.f32 %v524, %v1764
      %v1879 = vadd.f32 %v525, %v1769
      %v1880 = vadd.f32 %v526, %v1774
      %v1881 = vadd.f32 %v527, %v1779
      %1882 = vst.msk [vmem:[%s505] sm:$0xff] %vm532, %v1878
      %1883 = vst.msk [vmem:[%s505 + $0x8] sm:$0xff] %vm532, %v1879
      %1884 = vst.msk [vmem:[%s505 + $0x10] sm:$0xff] %vm532, %v1880
      %1885 = vst.msk [vmem:[%s505 + $0x18] sm:$0xff] %vm532, %v1881
      %v1886 = vmul.f32 %v1860, %v612
      %v1887 = vmul.f32 %v1865, %v617
      %v1888 = vmul.f32 %v1870, %v622
      %v1889 = vmul.f32 %v1875, %v627
      %v1890 = vadd.f32 %v528, %v1886
      %v1891 = vadd.f32 %v529, %v1887
      %v1892 = vadd.f32 %v530, %v1888
      %v1893 = vadd.f32 %v531, %v1889
      %v1894 = vmul.f32 %v1860, %v721
      %v1895 = vmul.f32 %v1865, %v726
      %v1896 = vmul.f32 %v1870, %v731
      %v1897 = vmul.f32 %v1875, %v736
      %1902 = vrot.lane.b32.xlu0 %v1894, 32
      %v1903 = vpop.permute.xlu0 %1902
      %1904 = vrot.lane.b32.xlu0 %v1895, 32
      %v1905 = vpop.permute.xlu0 %1904
      %1906 = vrot.lane.b32.xlu0 %v1896, 32
      %v1907 = vpop.permute.xlu0 %1906
      %1908 = vrot.lane.b32.xlu0 %v1897, 32
      %v1909 = vpop.permute.xlu0 %1908
      %v1914 = vadd.f32 %v528, %v1903
      %v1915 = vadd.f32 %v529, %v1905
      %v1916 = vadd.f32 %v530, %v1907
      %v1917 = vadd.f32 %v531, %v1909
      %v1918 = vmul.f32 %v1860, %v830
      %v1919 = vmul.f32 %v1865, %v835
      %v1920 = vmul.f32 %v1870, %v840
      %v1921 = vmul.f32 %v1875, %v845
      %1926 = vrot.lane.b32.xlu0 %v1918, 64
      %v1927 = vpop.permute.xlu0 %1926
      %1928 = vrot.lane.b32.xlu0 %v1919, 64
      %v1929 = vpop.permute.xlu0 %1928
      %1930 = vrot.lane.b32.xlu0 %v1920, 64
      %v1931 = vpop.permute.xlu0 %1930
      %1932 = vrot.lane.b32.xlu0 %v1921, 64
      %v1933 = vpop.permute.xlu0 %1932
      %v1938 = vadd.f32 %v528, %v1927
      %v1939 = vadd.f32 %v529, %v1929
      %v1940 = vadd.f32 %v530, %v1931
      %v1941 = vadd.f32 %v531, %v1933
      %v1942 = vsel %vm532, %v1890, %v1914
      %v1943 = vsel %vm532, %v1891, %v1915
      %v1944 = vsel %vm532, %v1892, %v1916
      %v1945 = vsel %vm532, %v1893, %v1917
      %vm1946 = vcmask 523264
      %v1947 = vsel %vm1946, %v1942, %v1938
      %v1948 = vsel %vm1946, %v1943, %v1939
      %v1949 = vsel %vm1946, %v1944, %v1940
      %v1950 = vsel %vm1946, %v1945, %v1941
      %vm1951 = vcmask 785408
      %1952 = vst.msk [vmem:[%s511] sm:$0xff] %vm1951, %v1947
      %1953 = vst.msk [vmem:[%s511 + $0x8] sm:$0xff] %vm1951, %v1948
      %1954 = vst.msk [vmem:[%s511 + $0x10] sm:$0xff] %vm1951, %v1949
      %1955 = vst.msk [vmem:[%s511 + $0x18] sm:$0xff] %vm1951, %v1950
      %v1956 = vmul.f32 %v1860, %v943
      %v1957 = vmul.f32 %v1865, %v948
      %v1958 = vmul.f32 %v1870, %v953
      %v1959 = vmul.f32 %v1875, %v958
      %v1960 = vadd.f32 %v856, %v1956
      %v1961 = vadd.f32 %v858, %v1957
      %v1962 = vadd.f32 %v860, %v1958
      %v1963 = vadd.f32 %v862, %v1959
      %v1964 = vmul.f32 %v1860, %v1052
      %v1965 = vmul.f32 %v1865, %v1057
      %v1966 = vmul.f32 %v1870, %v1062
      %v1967 = vmul.f32 %v1875, %v1067
      %1972 = vrot.lane.b32.xlu0 %v1964, 32
      %v1973 = vpop.permute.xlu0 %1972
      %1974 = vrot.lane.b32.xlu0 %v1965, 32
      %v1975 = vpop.permute.xlu0 %1974
      %1976 = vrot.lane.b32.xlu0 %v1966, 32
      %v1977 = vpop.permute.xlu0 %1976
      %1978 = vrot.lane.b32.xlu0 %v1967, 32
      %v1979 = vpop.permute.xlu0 %1978
      %v1984 = vadd.f32 %v856, %v1973
      %v1985 = vadd.f32 %v858, %v1975
      %v1986 = vadd.f32 %v860, %v1977
      %v1987 = vadd.f32 %v862, %v1979
      %v1988 = vmul.f32 %v1860, %v1161
      %v1989 = vmul.f32 %v1865, %v1166
      %v1990 = vmul.f32 %v1870, %v1171
      %v1991 = vmul.f32 %v1875, %v1176
      %1996 = vrot.lane.b32.xlu0 %v1988, 64
      %v1997 = vpop.permute.xlu0 %1996
      %1998 = vrot.lane.b32.xlu0 %v1989, 64
      %v1999 = vpop.permute.xlu0 %1998
      %2000 = vrot.lane.b32.xlu0 %v1990, 64
      %v2001 = vpop.permute.xlu0 %2000
      %2002 = vrot.lane.b32.xlu0 %v1991, 64
      %v2003 = vpop.permute.xlu0 %2002
      %v2008 = vadd.f32 %v856, %v1997
      %v2009 = vadd.f32 %v858, %v1999
      %v2010 = vadd.f32 %v860, %v2001
      %v2011 = vadd.f32 %v862, %v2003
      %v2012 = vmul.f32 %v1860, %v1270
      %v2013 = vmul.f32 %v1865, %v1275
      %v2014 = vmul.f32 %v1870, %v1280
      %v2015 = vmul.f32 %v1875, %v1285
      %2020 = vrot.lane.b32.xlu0 %v2012, 96
      %v2021 = vpop.permute.xlu0 %2020
      %2022 = vrot.lane.b32.xlu0 %v2013, 96
      %v2023 = vpop.permute.xlu0 %2022
      %2024 = vrot.lane.b32.xlu0 %v2014, 96
      %v2025 = vpop.permute.xlu0 %2024
      %2026 = vrot.lane.b32.xlu0 %v2015, 96
      %v2027 = vpop.permute.xlu0 %2026
      %v2032 = vadd.f32 %v856, %v2021
      %v2033 = vadd.f32 %v858, %v2023
      %v2034 = vadd.f32 %v860, %v2025
      %v2035 = vadd.f32 %v862, %v2027
      %v2036 = vmul.f32 %v1860, %v1375
      %v2037 = vmul.f32 %v1865, %v1380
      %v2038 = vmul.f32 %v1870, %v1385
      %v2039 = vmul.f32 %v1875, %v1390
      %v2040 = vadd.f32 %v857, %v2036
      %v2041 = vadd.f32 %v859, %v2037
      %v2042 = vadd.f32 %v861, %v2038
      %v2043 = vadd.f32 %v863, %v2039
      %v2044 = vsel %vm532, %v1960, %v1984
      %v2045 = vsel %vm532, %v1961, %v1985
      %v2046 = vsel %vm532, %v1962, %v1986
      %v2047 = vsel %vm532, %v1963, %v1987
      %v2048 = vsel %vm1946, %v2044, %v2008
      %v2049 = vsel %vm1946, %v2045, %v2009
      %v2050 = vsel %vm1946, %v2046, %v2010
      %v2051 = vsel %vm1946, %v2047, %v2011
      %v2052 = vsel %vm1951, %v2048, %v2032
      %v2053 = vsel %vm1951, %v2049, %v2033
      %v2054 = vsel %vm1951, %v2050, %v2034
      %v2055 = vsel %vm1951, %v2051, %v2035
      %2056 = vst [vmem:[%s518] sm:$0xff] %v2052
      %2057 = vst.msk [vmem:[%s518 + $0x8] sm:$0xff] %vm532, %v2040
      %2058 = vst [vmem:[%s518 + $0x10] sm:$0xff] %v2053
      %2059 = vst.msk [vmem:[%s518 + $0x18] sm:$0xff] %vm532, %v2041
      %2060 = vst [vmem:[%s518 + $0x20] sm:$0xff] %v2054
      %2061 = vst.msk [vmem:[%s518 + $0x28] sm:$0xff] %vm532, %v2042
      %2062 = vst [vmem:[%s518 + $0x30] sm:$0xff] %v2055
      %2063 = vst.msk [vmem:[%s518 + $0x38] sm:$0xff] %vm532, %v2043
      %s2064 = smul.u32 4, %s25
      %p2065 = scmp.lt.s32.totalorder %s2064, 15
      %s2066 = scalar_select %p2065, %s2064, 15
      %s2067 = smul.addr %s2066, 8
      %s2068 = scalar_lea.vmem %s11, %s2067
      %s2069 = smul.u32 4, %s25
      %p2070 = scmp.lt.s32.totalorder %s2069, 15
      %s2071 = scalar_select %p2070, %s2069, 15
      %s2072 = smul.addr %s2071, 8
      %s2073 = scalar_lea.vmem %s12, %s2072
      %s2074 = smul.u32 4, %s25
      %p2075 = scmp.lt.s32.totalorder %s2074, 15
      %s2076 = scalar_select %p2075, %s2074, 15
      %s2077 = smul.addr %s2076, 2
      %s2078 = smul.addr %s2077, 8
      %s2079 = scalar_lea.vmem %s13, %s2078
      // Predicated region
      $region65: #{tpu_custom_call.1} parent=63 // pred_check
        %p2080 = pneg %p289
      $region66: #{tpu_custom_call.1} parent=63 // pred_check_branch
        %2082 = sbr.rel (%p2080) target = $region68
      $region67: #{tpu_custom_call.1} parent=63 // pred_region
        %s2083 = smul.u32 4, %s25
      $region68: #{tpu_custom_call.1} parent=63 // pred_fallthru
        _
      // Predicated region
      $region69: #{tpu_custom_call.1} parent=63 // pred_check
        %p2084 = pneg %p315
      $region70: #{tpu_custom_call.1} parent=63 // pred_check_branch
        %2086 = sbr.rel (%p2084) target = $region72
      $region71: #{tpu_custom_call.1} parent=63 // pred_region
        %s2087 = smul.u32 4, %s25
      $region72: #{tpu_custom_call.1} parent=63 // pred_fallthru
        _
      // Predicated region
      $region73: #{tpu_custom_call.1} parent=63 // pred_check
        %p2088 = pneg %p341
      $region74: #{tpu_custom_call.1} parent=63 // pred_check_branch
        %2090 = sbr.rel (%p2088) target = $region76
      $region75: #{tpu_custom_call.1} parent=63 // pred_region
        %s2091 = smul.u32 4, %s25
      $region76: #{tpu_custom_call.1} parent=63 // pred_fallthru
        _
    $region64: #{tpu_custom_call.1} parent=5 // pred_fallthru
      _
    %p2092 = scmp.le.s32.totalorder 2, %s20
    // Predicated region
    $region77: #{tpu_custom_call.1} parent=5 // pred_check
      %p2093 = pneg %p2092
    $region78: #{tpu_custom_call.1} parent=5 // pred_check_branch
      %2095 = sbr.rel (%p2093) target = $region80
    $region79: #{tpu_custom_call.1} parent=5 // pred_region
      %s2096 = ssub.s32 %s20, 2
      // Predicated region
      $region81: #{tpu_custom_call.1} parent=79 // pred_check
        %p2097 = pneg %p295
      $region82: #{tpu_custom_call.1} parent=79 // pred_check_branch
        %2099 = sbr.rel (%p2097) target = $region84
      $region83: #{tpu_custom_call.1} parent=79 // pred_region
        %s2100 = smul.u32 4, %s26
        %p2101 = scmp.lt.s32.totalorder %s2100, 15
        %s2102 = scalar_select %p2101, %s2100, 15
        %s2103 = smul.addr %s2102, 8
        %s2104 = scalar_lea.vmem %s11, %s2103
      $region84: #{tpu_custom_call.1} parent=79 // pred_fallthru
        _
      // Predicated region
      $region85: #{tpu_custom_call.1} parent=79 // pred_check
        %p2105 = pneg %p321
      $region86: #{tpu_custom_call.1} parent=79 // pred_check_branch
        %2107 = sbr.rel (%p2105) target = $region88
      $region87: #{tpu_custom_call.1} parent=79 // pred_region
        %s2108 = smul.u32 4, %s26
        %p2109 = scmp.lt.s32.totalorder %s2108, 15
        %s2110 = scalar_select %p2109, %s2108, 15
        %s2111 = smul.addr %s2110, 8
        %s2112 = scalar_lea.vmem %s12, %s2111
      $region88: #{tpu_custom_call.1} parent=79 // pred_fallthru
        _
      // Predicated region
      $region89: #{tpu_custom_call.1} parent=79 // pred_check
        %p2113 = pneg %p347
      $region90: #{tpu_custom_call.1} parent=79 // pred_check_branch
        %2115 = sbr.rel (%p2113) target = $region92
      $region91: #{tpu_custom_call.1} parent=79 // pred_region
        %s2116 = smul.u32 4, %s26
        %p2117 = scmp.lt.s32.totalorder %s2116, 15
        %s2118 = scalar_select %p2117, %s2116, 15
        %s2119 = smul.addr %s2118, 2
        %s2120 = smul.addr %s2119, 8
        %s2121 = scalar_lea.vmem %s13, %s2120
      $region92: #{tpu_custom_call.1} parent=79 // pred_fallthru
        _
    $region80: #{tpu_custom_call.1} parent=5 // pred_fallthru
      _
  $region6: #{tpu_custom_call.1} parent=0 // loop_footer
    %s24 = sadd.s32 1, %s20
  $region7: #{tpu_custom_call.1} parent=0 // loop_footer_branch
    %19 = sbr.rel target = $region3
  $region8: #{tpu_custom_call.1} parent=0 // loop_exit
    _

// kernel: tpu_custom_call.1
$region0: #{tpu_custom_call.1}
  #allocation0 [shape = 'u32[]', space=smem, size = 0x4, offset = 0x4, fixed_abs, tag = 'smem constant byte address 0x4 - core index']
  #allocation1 [shape = 'u32[144,128]{1,0:T(1,128)}', space=vmem, size = 0x12000, scoped, tag = 'internal scratch']
  %s0 = inlined_call_operand.vmem [shape: f32[128,32], index: 0, kind: input, shape index: {}]
  %s1 = inlined_call_operand.vmem [shape: f32[128,96], index: 1, kind: input, shape index: {}]
  %s2 = inlined_call_operand.vmem [shape: f32[128,160], index: 2, kind: input, shape index: {}]
  %s3 = inlined_call_operand.vmem [shape: f32[32,32], index: 3, kind: input, shape index: {}]
  %s4 = inlined_call_operand.vmem [shape: f32[32,32], index: 4, kind: input, shape index: {}]
  %s5 = inlined_call_operand.vmem [shape: f32[32,32], index: 5, kind: input, shape index: {}]
  %s6 = inlined_call_operand.vmem [shape: f32[1,32], index: 6, kind: input, shape index: {}]
  %s7 = inlined_call_operand.vmem [shape: f32[32,32], index: 7, kind: input, shape index: {}]
  %s8 = inlined_call_operand.vmem [shape: f32[1,32], index: 8, kind: input, shape index: {}]
  %s9 = inlined_call_operand.vmem [shape: f32[32,32], index: 9, kind: input, shape index: {}]
  %s10 = inlined_call_operand.vmem [shape: f32[1,32], index: 10, kind: input, shape index: {}]
  %s11 = inlined_call_operand.vmem [shape: f32[128,32], index: 11, kind: output, shape index: {0}]
  %s12 = inlined_call_operand.vmem [shape: f32[128,96], index: 12, kind: output, shape index: {1}]
  %s13 = inlined_call_operand.vmem [shape: f32[128,160], index: 13, kind: output, shape index: {2}]
  %14 = xla_tuple %s11, %s12, %s13
  %s15 = sld [smem:[#allocation0]]
  $region93: #{tpu_custom_call.1} parent=0
    _
  %s17 = ssub.s32 1, %s15
  %s18 = scalar_select 0, %s17, %s15
  loop: start=0, step=1, limit=6
  $region2: #{tpu_custom_call.1} parent=0 // loop_pre_header
    _
  $region3: #{tpu_custom_call.1} parent=0 // loop_header
    %s20 = sphi 0, %s24
    %p21 = scmp.ge.s32.totalorder %s20, 6
    %s30 = sphi 0, %s32
    %s33 = sphi 0, %s30
    %s34 = sphi 0, %s33
    %s50 = sphi 0, %s34
    %s56 = sphi 0, %s58
    %s59 = sphi 0, %s56
    %s60 = sphi 0, %s59
    %s76 = sphi 0, %s60
    %s82 = sphi 0, %s84
    %s85 = sphi 0, %s82
    %s86 = sphi 0, %s85
    %s102 = sphi 0, %s86
    %s106 = sphi 0, %s106
    %s108 = sphi 0, %s106
    %s109 = sphi 0, %s108
    %s123 = sphi 0, %s109
    %s127 = sphi 0, %s127
    %s129 = sphi 0, %s127
    %s130 = sphi 0, %s129
    %s144 = sphi 0, %s130
    %s148 = sphi 0, %s148
    %s150 = sphi 0, %s148
    %s151 = sphi 0, %s150
    %s165 = sphi 0, %s151
    %s169 = sphi 0, %s169
    %s171 = sphi 0, %s169
    %s172 = sphi 0, %s171
    %s186 = sphi 0, %s172
    %s190 = sphi 0, %s190
    %s192 = sphi 0, %s190
    %s193 = sphi 0, %s192
    %s207 = sphi 0, %s193
    %s211 = sphi 0, %s211
    %s213 = sphi 0, %s211
    %s214 = sphi 0, %s213
    %s228 = sphi 0, %s214
    %s232 = sphi 0, %s232
    %s234 = sphi 0, %s232
    %s235 = sphi 0, %s234
    %s249 = sphi 0, %s235
    %s253 = sphi 0, %s253
    %s255 = sphi 0, %s253
    %s256 = sphi 0, %s255
    %s270 = sphi 0, %s256
    %s276 = sphi 0, %s278
    %s279 = sphi 0, %s276
    %s280 = sphi 0, %s279
    %s296 = sphi 0, %s280
    %s302 = sphi 0, %s304
    %s305 = sphi 0, %s302
    %s306 = sphi 0, %s305
    %s322 = sphi 0, %s306
    %s328 = sphi 0, %s330
    %s331 = sphi 0, %s328
    %s332 = sphi 0, %s331
    %s348 = sphi 0, %s332
  $region4: #{tpu_custom_call.1} parent=0 // loop_header_branch
    %23 = sbr.rel (%p21) target = $region8
  $region5: #{tpu_custom_call.1} parent=0 // loop_body
    %s25 = ssub.s32 %s20, 1
    %s26 = ssub.s32 %s20, 2
    %s27 = sadd.s32 %s20, 1
    %s28 = ssub.s32 %s20, %s27
    %p29 = scmp.eq.s32.totalorder %s28, 0
    %s31 = sadd.s32 %s30, 1
    %s32 = scalar_select %p29, %s30, %s31
    %p35 = pneg %p29
    %p36 = scmp.eq.s32.totalorder %s20, 3
    %p37 = por %p35, %p36
    %p38 = scmp.ne.s32.totalorder %s30, %s33
    %p39 = scmp.eq.s32.totalorder %s20, 0
    %p40 = por %p38, %p39
    %p41 = scmp.ne.s32.totalorder %s30, %s33
    %p42 = scmp.eq.s32.totalorder %s25, 3
    %p43 = por %p41, %p42
    %p44 = scmp.ne.s32.totalorder %s33, %s34
    %p45 = scmp.eq.s32.totalorder %s25, 0
    %p46 = por %p44, %p45
    %p47 = scmp.ne.s32.totalorder %s33, %s34
    %p48 = scmp.eq.s32.totalorder %s26, 3
    %p49 = por %p47, %p48
    %p51 = scmp.ne.s32.totalorder %s34, %s50
    %p52 = scmp.eq.s32.totalorder %s26, 0
    %p53 = por %p51, %p52
    %s54 = ssub.s32 %s20, %s27
    %p55 = scmp.eq.s32.totalorder %s54, 0
    %s57 = sadd.s32 %s56, 1
    %s58 = scalar_select %p55, %s56, %s57
    %p61 = pneg %p55
    %p62 = scmp.eq.s32.totalorder %s20, 3
    %p63 = por %p61, %p62
    %p64 = scmp.ne.s32.totalorder %s56, %s59
    %p65 = scmp.eq.s32.totalorder %s20, 0
    %p66 = por %p64, %p65
    %p67 = scmp.ne.s32.totalorder %s56, %s59
    %p68 = scmp.eq.s32.totalorder %s25, 3
    %p69 = por %p67, %p68
    %p70 = scmp.ne.s32.totalorder %s59, %s60
    %p71 = scmp.eq.s32.totalorder %s25, 0
    %p72 = por %p70, %p71
    %p73 = scmp.ne.s32.totalorder %s59, %s60
    %p74 = scmp.eq.s32.totalorder %s26, 3
    %p75 = por %p73, %p74
    %p77 = scmp.ne.s32.totalorder %s60, %s76
    %p78 = scmp.eq.s32.totalorder %s26, 0
    %p79 = por %p77, %p78
    %s80 = ssub.s32 %s20, %s27
    %p81 = scmp.eq.s32.totalorder %s80, 0
    %s83 = sadd.s32 %s82, 1
    %s84 = scalar_select %p81, %s82, %s83
    %p87 = pneg %p81
    %p88 = scmp.eq.s32.totalorder %s20, 3
    %p89 = por %p87, %p88
    %p90 = scmp.ne.s32.totalorder %s82, %s85
    %p91 = scmp.eq.s32.totalorder %s20, 0
    %p92 = por %p90, %p91
    %p93 = scmp.ne.s32.totalorder %s82, %s85
    %p94 = scmp.eq.s32.totalorder %s25, 3
    %p95 = por %p93, %p94
    %p96 = scmp.ne.s32.totalorder %s85, %s86
    %p97 = scmp.eq.s32.totalorder %s25, 0
    %p98 = por %p96, %p97
    %p99 = scmp.ne.s32.totalorder %s85, %s86
    %p100 = scmp.eq.s32.totalorder %s26, 3
    %p101 = por %p99, %p100
    %p103 = scmp.ne.s32.totalorder %s86, %s102
    %p104 = scmp.eq.s32.totalorder %s26, 0
    %p105 = por %p103, %p104
    %s107 = sadd.s32 %s106, 1
    %p110 = scmp.eq.s32.totalorder %s20, 3
    %p111 = scmp.ne.s32.totalorder %s106, %s108
    %p112 = scmp.eq.s32.totalorder %s20, 0
    %p113 = por %p111, %p112
    %p114 = scmp.ne.s32.totalorder %s106, %s108
    %p115 = scmp.eq.s32.totalorder %s25, 3
    %p116 = por %p114, %p115
    %p117 = scmp.ne.s32.totalorder %s108, %s109
    %p118 = scmp.eq.s32.totalorder %s25, 0
    %p119 = por %p117, %p118
    %p120 = scmp.ne.s32.totalorder %s108, %s109
    %p121 = scmp.eq.s32.totalorder %s26, 3
    %p122 = por %p120, %p121
    %p124 = scmp.ne.s32.totalorder %s109, %s123
    %p125 = scmp.eq.s32.totalorder %s26, 0
    %p126 = por %p124, %p125
    %s128 = sadd.s32 %s127, 1
    %p131 = scmp.eq.s32.totalorder %s20, 3
    %p132 = scmp.ne.s32.totalorder %s127, %s129
    %p133 = scmp.eq.s32.totalorder %s20, 0
    %p134 = por %p132, %p133
    %p135 = scmp.ne.s32.totalorder %s127, %s129
    %p136 = scmp.eq.s32.totalorder %s25, 3
    %p137 = por %p135, %p136
    %p138 = scmp.ne.s32.totalorder %s129, %s130
    %p139 = scmp.eq.s32.totalorder %s25, 0
    %p140 = por %p138, %p139
    %p141 = scmp.ne.s32.totalorder %s129, %s130
    %p142 = scmp.eq.s32.totalorder %s26, 3
    %p143 = por %p141, %p142
    %p145 = scmp.ne.s32.totalorder %s130, %s144
    %p146 = scmp.eq.s32.totalorder %s26, 0
    %p147 = por %p145, %p146
    %s149 = sadd.s32 %s148, 1
    %p152 = scmp.eq.s32.totalorder %s20, 3
    %p153 = scmp.ne.s32.totalorder %s148, %s150
    %p154 = scmp.eq.s32.totalorder %s20, 0
    %p155 = por %p153, %p154
    %p156 = scmp.ne.s32.totalorder %s148, %s150
    %p157 = scmp.eq.s32.totalorder %s25, 3
    %p158 = por %p156, %p157
    %p159 = scmp.ne.s32.totalorder %s150, %s151
    %p160 = scmp.eq.s32.totalorder %s25, 0
    %p161 = por %p159, %p160
    %p162 = scmp.ne.s32.totalorder %s150, %s151
    %p163 = scmp.eq.s32.totalorder %s26, 3
    %p164 = por %p162, %p163
    %p166 = scmp.ne.s32.totalorder %s151, %s165
    %p167 = scmp.eq.s32.totalorder %s26, 0
    %p168 = por %p166, %p167
    %s170 = sadd.s32 %s169, 1
    %p173 = scmp.eq.s32.totalorder %s20, 3
    %p174 = scmp.ne.s32.totalorder %s169, %s171
    %p175 = scmp.eq.s32.totalorder %s20, 0
    %p176 = por %p174, %p175
    %p177 = scmp.ne.s32.totalorder %s169, %s171
    %p178 = scmp.eq.s32.totalorder %s25, 3
    %p179 = por %p177, %p178
    %p180 = scmp.ne.s32.totalorder %s171, %s172
    %p181 = scmp.eq.s32.totalorder %s25, 0
    %p182 = por %p180, %p181
    %p183 = scmp.ne.s32.totalorder %s171, %s172
    %p184 = scmp.eq.s32.totalorder %s26, 3
    %p185 = por %p183, %p184
    %p187 = scmp.ne.s32.totalorder %s172, %s186
    %p188 = scmp.eq.s32.totalorder %s26, 0
    %p189 = por %p187, %p188
    %s191 = sadd.s32 %s190, 1
    %p194 = scmp.eq.s32.totalorder %s20, 3
    %p195 = scmp.ne.s32.totalorder %s190, %s192
    %p196 = scmp.eq.s32.totalorder %s20, 0
    %p197 = por %p195, %p196
    %p198 = scmp.ne.s32.totalorder %s190, %s192
    %p199 = scmp.eq.s32.totalorder %s25, 3
    %p200 = por %p198, %p199
    %p201 = scmp.ne.s32.totalorder %s192, %s193
    %p202 = scmp.eq.s32.totalorder %s25, 0
    %p203 = por %p201, %p202
    %p204 = scmp.ne.s32.totalorder %s192, %s193
    %p205 = scmp.eq.s32.totalorder %s26, 3
    %p206 = por %p204, %p205
    %p208 = scmp.ne.s32.totalorder %s193, %s207
    %p209 = scmp.eq.s32.totalorder %s26, 0
    %p210 = por %p208, %p209
    %s212 = sadd.s32 %s211, 1
    %p215 = scmp.eq.s32.totalorder %s20, 3
    %p216 = scmp.ne.s32.totalorder %s211, %s213
    %p217 = scmp.eq.s32.totalorder %s20, 0
    %p218 = por %p216, %p217
    %p219 = scmp.ne.s32.totalorder %s211, %s213
    %p220 = scmp.eq.s32.totalorder %s25, 3
    %p221 = por %p219, %p220
    %p222 = scmp.ne.s32.totalorder %s213, %s214
    %p223 = scmp.eq.s32.totalorder %s25, 0
    %p224 = por %p222, %p223
    %p225 = scmp.ne.s32.totalorder %s213, %s214
    %p226 = scmp.eq.s32.totalorder %s26, 3
    %p227 = por %p225, %p226
    %p229 = scmp.ne.s32.totalorder %s214, %s228
    %p230 = scmp.eq.s32.totalorder %s26, 0
    %p231 = por %p229, %p230
    %s233 = sadd.s32 %s232, 1
    %p236 = scmp.eq.s32.totalorder %s20, 3
    %p237 = scmp.ne.s32.totalorder %s232, %s234
    %p238 = scmp.eq.s32.totalorder %s20, 0
    %p239 = por %p237, %p238
    %p240 = scmp.ne.s32.totalorder %s232, %s234
    %p241 = scmp.eq.s32.totalorder %s25, 3
    %p242 = por %p240, %p241
    %p243 = scmp.ne.s32.totalorder %s234, %s235
    %p244 = scmp.eq.s32.totalorder %s25, 0
    %p245 = por %p243, %p244
    %p246 = scmp.ne.s32.totalorder %s234, %s235
    %p247 = scmp.eq.s32.totalorder %s26, 3
    %p248 = por %p246, %p247
    %p250 = scmp.ne.s32.totalorder %s235, %s249
    %p251 = scmp.eq.s32.totalorder %s26, 0
    %p252 = por %p250, %p251
    %s254 = sadd.s32 %s253, 1
    %p257 = scmp.eq.s32.totalorder %s20, 3
    %p258 = scmp.ne.s32.totalorder %s253, %s255
    %p259 = scmp.eq.s32.totalorder %s20, 0
    %p260 = por %p258, %p259
    %p261 = scmp.ne.s32.totalorder %s253, %s255
    %p262 = scmp.eq.s32.totalorder %s25, 3
    %p263 = por %p261, %p262
    %p264 = scmp.ne.s32.totalorder %s255, %s256
    %p265 = scmp.eq.s32.totalorder %s25, 0
    %p266 = por %p264, %p265
    %p267 = scmp.ne.s32.totalorder %s255, %s256
    %p268 = scmp.eq.s32.totalorder %s26, 3
    %p269 = por %p267, %p268
    %p271 = scmp.ne.s32.totalorder %s256, %s270
    %p272 = scmp.eq.s32.totalorder %s26, 0
    %p273 = por %p271, %p272
    %s274 = ssub.s32 %s20, %s27
    %p275 = scmp.eq.s32.totalorder %s274, 0
    %s277 = sadd.s32 %s276, 1
    %s278 = scalar_select %p275, %s276, %s277
    %p281 = pneg %p275
    %p282 = scmp.eq.s32.totalorder %s20, 3
    %p283 = por %p281, %p282
    %p284 = scmp.ne.s32.totalorder %s276, %s279
    %p285 = scmp.eq.s32.totalorder %s20, 0
    %p286 = por %p284, %p285
    %p287 = scmp.ne.s32.totalorder %s276, %s279
    %p288 = scmp.eq.s32.totalorder %s25, 3
    %p289 = por %p287, %p288
    %p290 = scmp.ne.s32.totalorder %s279, %s280
    %p291 = scmp.eq.s32.totalorder %s25, 0
    %p292 = por %p290, %p291
    %p293 = scmp.ne.s32.totalorder %s279, %s280
    %p294 = scmp.eq.s32.totalorder %s26, 3
    %p295 = por %p293, %p294
    %p297 = scmp.ne.s32.totalorder %s280, %s296
    %p298 = scmp.eq.s32.totalorder %s26, 0
    %p299 = por %p297, %p298
    %s300 = ssub.s32 %s20, %s27
    %p301 = scmp.eq.s32.totalorder %s300, 0
    %s303 = sadd.s32 %s302, 1
    %s304 = scalar_select %p301, %s302, %s303
    %p307 = pneg %p301
    %p308 = scmp.eq.s32.totalorder %s20, 3
    %p309 = por %p307, %p308
    %p310 = scmp.ne.s32.totalorder %s302, %s305
    %p311 = scmp.eq.s32.totalorder %s20, 0
    %p312 = por %p310, %p311
    %p313 = scmp.ne.s32.totalorder %s302, %s305
    %p314 = scmp.eq.s32.totalorder %s25, 3
    %p315 = por %p313, %p314
    %p316 = scmp.ne.s32.totalorder %s305, %s306
    %p317 = scmp.eq.s32.totalorder %s25, 0
    %p318 = por %p316, %p317
    %p319 = scmp.ne.s32.totalorder %s305, %s306
    %p320 = scmp.eq.s32.totalorder %s26, 3
    %p321 = por %p319, %p320
    %p323 = scmp.ne.s32.totalorder %s306, %s322
    %p324 = scmp.eq.s32.totalorder %s26, 0
    %p325 = por %p323, %p324
    %s326 = ssub.s32 %s20, %s27
    %p327 = scmp.eq.s32.totalorder %s326, 0
    %s329 = sadd.s32 %s328, 1
    %s330 = scalar_select %p327, %s328, %s329
    %p333 = pneg %p327
    %p334 = scmp.eq.s32.totalorder %s20, 3
    %p335 = por %p333, %p334
    %p336 = scmp.ne.s32.totalorder %s328, %s331
    %p337 = scmp.eq.s32.totalorder %s20, 0
    %p338 = por %p336, %p337
    %p339 = scmp.ne.s32.totalorder %s328, %s331
    %p340 = scmp.eq.s32.totalorder %s25, 3
    %p341 = por %p339, %p340
    %p342 = scmp.ne.s32.totalorder %s331, %s332
    %p343 = scmp.eq.s32.totalorder %s25, 0
    %p344 = por %p342, %p343
    %p345 = scmp.ne.s32.totalorder %s331, %s332
    %p346 = scmp.eq.s32.totalorder %s26, 3
    %p347 = por %p345, %p346
    %p349 = scmp.ne.s32.totalorder %s332, %s348
    %p350 = scmp.eq.s32.totalorder %s26, 0
    %p351 = por %p349, %p350
    %p352 = scmp.le.s32.totalorder 1, %s20
    %p353 = scmp.lt.s32.totalorder %s20, 5
    %p354 = pnand %p352, %p353
    %p355 = pneg %p354
    // Predicated region
    $region9: #{tpu_custom_call.1} parent=5 // pred_check
      _
    $region10: #{tpu_custom_call.1} parent=5 // pred_check_branch
      %357 = sbr.rel (%p354) target = $region12
    $region11: #{tpu_custom_call.1} parent=5 // pred_region
      %s358 = ssub.s32 %s20, 1
      // Predicated region
      $region13: #{tpu_custom_call.1} parent=11 // pred_check
        %p359 = pneg %p119
      $region14: #{tpu_custom_call.1} parent=11 // pred_check_branch
        %361 = sbr.rel (%p359) target = $region16
      $region15: #{tpu_custom_call.1} parent=11 // pred_region
        _
      $region16: #{tpu_custom_call.1} parent=11 // pred_fallthru
        _
      // Predicated region
      $region17: #{tpu_custom_call.1} parent=11 // pred_check
        %p362 = pneg %p140
      $region18: #{tpu_custom_call.1} parent=11 // pred_check_branch
        %364 = sbr.rel (%p362) target = $region20
      $region19: #{tpu_custom_call.1} parent=11 // pred_region
        _
      $region20: #{tpu_custom_call.1} parent=11 // pred_fallthru
        _
      // Predicated region
      $region21: #{tpu_custom_call.1} parent=11 // pred_check
        %p365 = pneg %p161
      $region22: #{tpu_custom_call.1} parent=11 // pred_check_branch
        %367 = sbr.rel (%p365) target = $region24
      $region23: #{tpu_custom_call.1} parent=11 // pred_region
        _
      $region24: #{tpu_custom_call.1} parent=11 // pred_fallthru
        _
      // Predicated region
      $region25: #{tpu_custom_call.1} parent=11 // pred_check
        %p368 = pneg %p182
      $region26: #{tpu_custom_call.1} parent=11 // pred_check_branch
        %370 = sbr.rel (%p368) target = $region28
      $region27: #{tpu_custom_call.1} parent=11 // pred_region
        _
      $region28: #{tpu_custom_call.1} parent=11 // pred_fallthru
        _
      // Predicated region
      $region29: #{tpu_custom_call.1} parent=11 // pred_check
        %p371 = pneg %p203
      $region30: #{tpu_custom_call.1} parent=11 // pred_check_branch
        %373 = sbr.rel (%p371) target = $region32
      $region31: #{tpu_custom_call.1} parent=11 // pred_region
        _
      $region32: #{tpu_custom_call.1} parent=11 // pred_fallthru
        _
      // Predicated region
      $region33: #{tpu_custom_call.1} parent=11 // pred_check
        %p374 = pneg %p224
      $region34: #{tpu_custom_call.1} parent=11 // pred_check_branch
        %376 = sbr.rel (%p374) target = $region36
      $region35: #{tpu_custom_call.1} parent=11 // pred_region
        _
      $region36: #{tpu_custom_call.1} parent=11 // pred_fallthru
        _
      // Predicated region
      $region37: #{tpu_custom_call.1} parent=11 // pred_check
        %p377 = pneg %p245
      $region38: #{tpu_custom_call.1} parent=11 // pred_check_branch
        %379 = sbr.rel (%p377) target = $region40
      $region39: #{tpu_custom_call.1} parent=11 // pred_region
        _
      $region40: #{tpu_custom_call.1} parent=11 // pred_fallthru
        _
      // Predicated region
      $region41: #{tpu_custom_call.1} parent=11 // pred_check
        %p380 = pneg %p266
      $region42: #{tpu_custom_call.1} parent=11 // pred_check_branch
        %382 = sbr.rel (%p380) target = $region44
      $region43: #{tpu_custom_call.1} parent=11 // pred_region
        _
      $region44: #{tpu_custom_call.1} parent=11 // pred_fallthru
        _
    $region12: #{tpu_custom_call.1} parent=5 // pred_fallthru
      _
    %p383 = scmp.lt.s32.totalorder %s20, 4
    // Predicated region
    $region45: #{tpu_custom_call.1} parent=5 // pred_check
      %p384 = pneg %p383
    $region46: #{tpu_custom_call.1} parent=5 // pred_check_branch
      %386 = sbr.rel (%p384) target = $region48
    $region47: #{tpu_custom_call.1} parent=5 // pred_region
      // Predicated region
      $region49: #{tpu_custom_call.1} parent=47 // pred_check
        %p387 = pneg %p40
      $region50: #{tpu_custom_call.1} parent=47 // pred_check_branch
        %389 = sbr.rel (%p387) target = $region52
      $region51: #{tpu_custom_call.1} parent=47 // pred_region
        %s390 = smul.u32 4, %s20
        %p391 = scmp.lt.s32.totalorder %s390, 15
        %s392 = scalar_select %p391, %s390, 15
        %s393 = smul.addr %s392, 8
        %s394 = scalar_lea.vmem %s0, %s393
        %s395 = smul.u32 4, %s20
      $region52: #{tpu_custom_call.1} parent=47 // pred_fallthru
        _
      // Predicated region
      $region53: #{tpu_custom_call.1} parent=47 // pred_check
        %p396 = pneg %p66
      $region54: #{tpu_custom_call.1} parent=47 // pred_check_branch
        %398 = sbr.rel (%p396) target = $region56
      $region55: #{tpu_custom_call.1} parent=47 // pred_region
        %s399 = smul.u32 4, %s20
        %p400 = scmp.lt.s32.totalorder %s399, 15
        %s401 = scalar_select %p400, %s399, 15
        %s402 = smul.addr %s401, 8
        %s403 = scalar_lea.vmem %s1, %s402
        %s404 = smul.u32 4, %s20
      $region56: #{tpu_custom_call.1} parent=47 // pred_fallthru
        _
      // Predicated region
      $region57: #{tpu_custom_call.1} parent=47 // pred_check
        %p405 = pneg %p92
      $region58: #{tpu_custom_call.1} parent=47 // pred_check_branch
        %407 = sbr.rel (%p405) target = $region60
      $region59: #{tpu_custom_call.1} parent=47 // pred_region
        %s408 = smul.u32 4, %s20
        %p409 = scmp.lt.s32.totalorder %s408, 15
        %s410 = scalar_select %p409, %s408, 15
        %s411 = smul.addr %s410, 2
        %s412 = smul.addr %s411, 8
        %s413 = scalar_lea.vmem %s2, %s412
        %s414 = smul.u32 4, %s20
      $region60: #{tpu_custom_call.1} parent=47 // pred_fallthru
        _
    $region48: #{tpu_custom_call.1} parent=5 // pred_fallthru
      _
    %p415 = scmp.le.s32.totalorder 1, %s20
    %p416 = scmp.lt.s32.totalorder %s20, 5
    %p417 = pnand %p415, %p416
    %p418 = pneg %p417
    // Predicated region
    $region61: #{tpu_custom_call.1} parent=5 // pred_check
      _
    $region62: #{tpu_custom_call.1} parent=5 // pred_check_branch
      %420 = sbr.rel (%p417) target = $region64
    $region63: #{tpu_custom_call.1} parent=5 // pred_region
      %s421 = ssub.s32 %s20, 1
      %s422 = smul.u32 4, %s25
      %p423 = scmp.lt.s32.totalorder %s422, 15
      %s424 = scalar_select %p423, %s422, 15
      %s425 = smul.addr %s424, 8
      %s426 = scalar_lea.vmem %s0, %s425
      %p427 = pneg %p46
      %p428 = pneg %p43
      %s429 = smul.u32 4, %s25
      %p430 = scmp.lt.s32.totalorder %s429, 15
      %s431 = scalar_select %p430, %s429, 15
      %s432 = smul.addr %s431, 8
      %s433 = scalar_lea.vmem %s1, %s432
      %p434 = pneg %p72
      %p435 = pneg %p69
      %s436 = smul.u32 4, %s25
      %p437 = scmp.lt.s32.totalorder %s436, 15
      %s438 = scalar_select %p437, %s436, 15
      %s439 = smul.addr %s438, 2
      %s440 = smul.addr %s439, 8
      %s441 = scalar_lea.vmem %s2, %s440
      %p442 = pneg %p98
      %p443 = pneg %p95
      %p444 = pneg %p119
      %p445 = pneg %p116
      %p446 = pneg %p140
      %p447 = pneg %p137
      %p448 = pneg %p161
      %p449 = pneg %p158
      %p450 = pneg %p182
      %p451 = pneg %p179
      %p452 = pneg %p203
      %p453 = pneg %p200
      %p454 = pneg %p224
      %p455 = pneg %p221
      %p456 = pneg %p245
      %p457 = pneg %p242
      %p458 = pneg %p266
      %p459 = pneg %p263
      %p460 = pneg %p292
      %p461 = pneg %p289
      %s462 = smul.u32 4, %s25
      %p463 = scmp.lt.s32.totalorder %s462, 15
      %s464 = scalar_select %p463, %s462, 15
      %s465 = smul.addr %s464, 8
      %s466 = scalar_lea.vmem %s11, %s465
      %p467 = pneg %p318
      %p468 = pneg %p315
      %s469 = smul.u32 4, %s25
      %p470 = scmp.lt.s32.totalorder %s469, 15
      %s471 = scalar_select %p470, %s469, 15
      %s472 = smul.addr %s471, 8
      %s473 = scalar_lea.vmem %s12, %s472
      %p474 = pneg %p344
      %p475 = pneg %p341
      %s476 = smul.u32 4, %s25
      %p477 = scmp.lt.s32.totalorder %s476, 15
      %s478 = scalar_select %p477, %s476, 15
      %s479 = smul.addr %s478, 2
      %s480 = smul.addr %s479, 8
      %s481 = scalar_lea.vmem %s13, %s480
      %s482 = smul.u32 4, %s25
      %p483 = scmp.lt.s32.totalorder %s482, 15
      %s484 = scalar_select %p483, %s482, 15
      %s485 = smul.addr %s484, 8
      %s486 = scalar_lea.vmem %s0, %s485
      %s487 = smul.u32 4, %s25
      %s488 = smul.u32 4, %s25
      %p489 = scmp.lt.s32.totalorder %s488, 15
      %s490 = scalar_select %p489, %s488, 15
      %s491 = smul.addr %s490, 8
      %s492 = scalar_lea.vmem %s1, %s491
      %s493 = smul.u32 4, %s25
      %s494 = smul.u32 4, %s25
      %p495 = scmp.lt.s32.totalorder %s494, 15
      %s496 = scalar_select %p495, %s494, 15
      %s497 = smul.addr %s496, 2
      %s498 = smul.addr %s497, 8
      %s499 = scalar_lea.vmem %s2, %s498
      %s500 = smul.u32 4, %s25
      %s501 = smul.u32 4, %s25
      %p502 = scmp.lt.s32.totalorder %s501, 15
      %s503 = scalar_select %p502, %s501, 15
      %s504 = smul.addr %s503, 8
      %s505 = scalar_lea.vmem %s11, %s504
      %s506 = smul.u32 4, %s25
      %s507 = smul.u32 4, %s25
      %p508 = scmp.lt.s32.totalorder %s507, 15
      %s509 = scalar_select %p508, %s507, 15
      %s510 = smul.addr %s509, 8
      %s511 = scalar_lea.vmem %s12, %s510
      %s512 = smul.u32 4, %s25
      %s513 = smul.u32 4, %s25
      %p514 = scmp.lt.s32.totalorder %s513, 15
      %s515 = scalar_select %p514, %s513, 15
      %s516 = smul.addr %s515, 2
      %s517 = smul.addr %s516, 8
      %s518 = scalar_lea.vmem %s13, %s517
      %s519 = smul.u32 4, %s25
      %v520 = vld [vmem:[%s3] sm:$0xff]
      %v521 = vld [vmem:[%s3 + $0x8] sm:$0xff]
      %v522 = vld [vmem:[%s3 + $0x10] sm:$0xff]
      %v523 = vld [vmem:[%s3 + $0x18] sm:$0xff]
      %v524 = vld [vmem:[%s486] sm:$0xff]
      %v525 = vld [vmem:[%s486 + $0x8] sm:$0xff]
      %v526 = vld [vmem:[%s486 + $0x10] sm:$0xff]
      %v527 = vld [vmem:[%s486 + $0x18] sm:$0xff]
      %v528 = vld [vmem:[%s492] sm:$0xff]
      %v529 = vld [vmem:[%s492 + $0x8] sm:$0xff]
      %v530 = vld [vmem:[%s492 + $0x10] sm:$0xff]
      %v531 = vld [vmem:[%s492 + $0x18] sm:$0xff]
      %vm532 = vcmask 261120
      %v534 = vsel %vm532, %v528, 0
      %v537 = vsel %vm532, %v529, 0
      %v540 = vsel %vm532, %v530, 0
      %v543 = vsel %vm532, %v531, 0
      %545 = vmatprep.subr.mxu0 0.0
      %546 = vmatpush1.msra.mxu0 %v520
      %547 = vmatprep.subr.mxu0 0.0
      %548 = vmatpush1.msra.mxu0 %v521
      %549 = vmatprep.subr.mxu0 0.0
      %550 = vmatpush1.msra.mxu0 %v522
      %551 = vmatprep.subr.mxu0 0.0
      %552 = vmatpush1.msra.mxu0 %v523
      %553 = vmatprep.subr.mxu0 0.0
      %554 = vmatpush1.msra.mxu0 0.0
      %555 = vmatprep.subr.mxu0 0.0
      %556 = vmatpush1.msra.mxu0 0.0
      %557 = vmatprep.subr.mxu0 0.0
      %558 = vmatpush1.msra.mxu0 0.0
      %559 = vmatprep.subr.mxu0 0.0
      %560 = vmatpush1.msra.mxu0 0.0
      %561 = vmatprep.subr.mxu0 0.0
      %562 = vmatpush1.msra.mxu0 0.0
      %563 = vmatprep.subr.mxu0 0.0
      %564 = vmatpush1.msra.mxu0 0.0
      %565 = vmatprep.subr.mxu0 0.0
      %566 = vmatpush1.msra.mxu0 0.0
      %567 = vmatprep.subr.mxu0 0.0
      %568 = vmatpush1.msra.mxu0 0.0
      %569 = vmatprep.subr.mxu0 0.0
      %570 = vmatpush1.msra.mxu0 0.0
      %571 = vmatprep.subr.mxu0 0.0
      %572 = vmatpush1.msra.mxu0 0.0
      %573 = vmatprep.subr.mxu0 0.0
      %574 = vmatpush1.msra.mxu0 0.0
      %575 = vmatprep.subr.mxu0 0.0
      %576 = vmatpush1.msra.mxu0 0.0
      %577 = vmatprep.subr.mxu0 0.0
      %578 = vmatpush1.msra.mxu0 0.0
      %579 = vmatprep.subr.mxu0 0.0
      %580 = vmatpush1.msra.mxu0 0.0
      %581 = vmatprep.subr.mxu0 0.0
      %582 = vmatpush1.msra.mxu0 0.0
      %583 = vmatprep.subr.mxu0 0.0
      %584 = vmatpush1.msra.mxu0 0.0
      %585 = vmatprep.subr.mxu0 0.0
      %586 = vmatpush1.msra.mxu0 0.0
      %587 = vmatprep.subr.mxu0 0.0
      %588 = vmatpush1.msra.mxu0 0.0
      %589 = vmatprep.subr.mxu0 0.0
      %590 = vmatpush1.msra.mxu0 0.0
      %591 = vmatprep.subr.mxu0 0.0
      %592 = vmatpush1.msra.mxu0 0.0
      %593 = vmatprep.subr.mxu0 0.0
      %594 = vmatpush1.msra.mxu0 0.0
      %595 = vmatprep.subr.mxu0 0.0
      %596 = vmatpush1.msra.mxu0 0.0
      %597 = vmatprep.subr.mxu0 0.0
      %598 = vmatpush1.msra.mxu0 0.0
      %599 = vmatprep.subr.mxu0 0.0
      %600 = vmatpush1.msra.mxu0 0.0
      %601 = vmatprep.subr.mxu0 0.0
      %602 = vmatpush1.msra.mxu0 0.0
      %603 = vmatprep.subr.mxu0 0.0
      %604 = vmatpush1.msra.mxu0 0.0
      %605 = vmatprep.subr.mxu0 0.0
      %606 = vmatpush1.msra.mxu0 0.0
      %607 = vmatprep.subr.mxu0 0.0
      %608 = vmatpush1.msra.mxu0 0.0
      %609 = vmatprep.mubr.f32.mxu0 0.0
      %610 = vmatmul.mubr.f32.gmra.mrb[0].mxu0 %v534
      %v611 = vpop.f32.mrb[0].mxu0
      %v612 = vadd.f32 0.0, %v611
      %v613 = vpop.f32.mrb[0].mxu0
      %614 = vmatprep.mubr.f32.mxu0 0.0
      %615 = vmatmul.mubr.f32.gmra.mrb[0].mxu0 %v537
      %v616 = vpop.f32.mrb[0].mxu0
      %v617 = vadd.f32 0.0, %v616
      %v618 = vpop.f32.mrb[0].mxu0
      %619 = vmatprep.mubr.f32.mxu0 0.0
      %620 = vmatmul.mubr.f32.gmra.mrb[0].mxu0 %v540
      %v621 = vpop.f32.mrb[0].mxu0
      %v622 = vadd.f32 0.0, %v621
      %v623 = vpop.f32.mrb[0].mxu0
      %624 = vmatprep.mubr.f32.mxu0 0.0
      %625 = vmatmul.mubr.f32.gmra.mrb[0].mxu0 %v543
      %v626 = vpop.f32.mrb[0].mxu0
      %v627 = vadd.f32 0.0, %v626
      %v628 = vpop.f32.mrb[0].mxu0
      %629 = vdwg.mxu0
      %v630 = vmul.f32 %v612, %v612
      %v631 = vmul.f32 %v617, %v617
      %v632 = vmul.f32 %v622, %v622
      %v633 = vmul.f32 %v627, %v627
      %v634 = vadd.f32 %v630, 0.0
      %v635 = vadd.f32 %v631, 0.0
      %v636 = vadd.f32 %v632, 0.0
      %v637 = vadd.f32 %v633, 0.0
      %638 = vrot.lane.b32.xlu0 %v528, 96
      %v639 = vpop.permute.xlu0 %638
      %640 = vrot.lane.b32.xlu0 %v529, 96
      %v641 = vpop.permute.xlu0 %640
      %642 = vrot.lane.b32.xlu0 %v530, 96
      %v643 = vpop.permute.xlu0 %642
      %644 = vrot.lane.b32.xlu0 %v531, 96
      %v645 = vpop.permute.xlu0 %644
      %v646 = vsel %vm532, %v639, 0
      %v648 = vsel %vm532, %v641, 0
      %v650 = vsel %vm532, %v643, 0
      %v652 = vsel %vm532, %v645, 0
      %654 = vmatprep.subr.mxu0 0.0
      %655 = vmatpush1.msra.mxu0 %v520
      %656 = vmatprep.subr.mxu0 0.0
      %657 = vmatpush1.msra.mxu0 %v521
      %658 = vmatprep.subr.mxu0 0.0
      %659 = vmatpush1.msra.mxu0 %v522
      %660 = vmatprep.subr.mxu0 0.0
      %661 = vmatpush1.msra.mxu0 %v523
      %662 = vmatprep.subr.mxu0 0.0
      %663 = vmatpush1.msra.mxu0 0.0
      %664 = vmatprep.subr.mxu0 0.0
      %665 = vmatpush1.msra.mxu0 0.0
      %666 = vmatprep.subr.mxu0 0.0
      %667 = vmatpush1.msra.mxu0 0.0
      %668 = vmatprep.subr.mxu0 0.0
      %669 = vmatpush1.msra.mxu0 0.0
      %670 = vmatprep.subr.mxu0 0.0
      %671 = vmatpush1.msra.mxu0 0.0
      %672 = vmatprep.subr.mxu0 0.0
      %673 = vmatpush1.msra.mxu0 0.0
      %674 = vmatprep.subr.mxu0 0.0
      %675 = vmatpush1.msra.mxu0 0.0
      %676 = vmatprep.subr.mxu0 0.0
      %677 = vmatpush1.msra.mxu0 0.0
      %678 = vmatprep.subr.mxu0 0.0
      %679 = vmatpush1.msra.mxu0 0.0
      %680 = vmatprep.subr.mxu0 0.0
      %681 = vmatpush1.msra.mxu0 0.0
      %682 = vmatprep.subr.mxu0 0.0
      %683 = vmatpush1.msra.mxu0 0.0
      %684 = vmatprep.subr.mxu0 0.0
      %685 = vmatpush1.msra.mxu0 0.0
      %686 = vmatprep.subr.mxu0 0.0
      %687 = vmatpush1.msra.mxu0 0.0
      %688 = vmatprep.subr.mxu0 0.0
      %689 = vmatpush1.msra.mxu0 0.0
      %690 = vmatprep.subr.mxu0 0.0
      %691 = vmatpush1.msra.mxu0 0.0
      %692 = vmatprep.subr.mxu0 0.0
      %693 = vmatpush1.msra.mxu0 0.0
      %694 = vmatprep.subr.mxu0 0.0
      %695 = vmatpush1.msra.mxu0 0.0
      %696 = vmatprep.subr.mxu0 0.0
      %697 = vmatpush1.msra.mxu0 0.0
      %698 = vmatprep.subr.mxu0 0.0
      %699 = vmatpush1.msra.mxu0 0.0
      %700 = vmatprep.subr.mxu0 0.0
      %701 = vmatpush1.msra.mxu0 0.0
      %702 = vmatprep.subr.mxu0 0.0
      %703 = vmatpush1.msra.mxu0 0.0
      %704 = vmatprep.subr.mxu0 0.0
      %705 = vmatpush1.msra.mxu0 0.0
      %706 = vmatprep.subr.mxu0 0.0
      %707 = vmatpush1.msra.mxu0 0.0
      %708 = vmatprep.subr.mxu0 0.0
      %709 = vmatpush1.msra.mxu0 0.0
      %710 = vmatprep.subr.mxu0 0.0
      %711 = vmatpush1.msra.mxu0 0.0
      %712 = vmatprep.subr.mxu0 0.0
      %713 = vmatpush1.msra.mxu0 0.0
      %714 = vmatprep.subr.mxu0 0.0
      %715 = vmatpush1.msra.mxu0 0.0
      %716 = vmatprep.subr.mxu0 0.0
      %717 = vmatpush1.msra.mxu0 0.0
      %718 = vmatprep.mubr.f32.mxu0 0.0
      %719 = vmatmul.mubr.f32.gmra.mrb[0].mxu0 %v646
      %v720 = vpop.f32.mrb[0].mxu0
      %v721 = vadd.f32 0.0, %v720
      %v722 = vpop.f32.mrb[0].mxu0
      %723 = vmatprep.mubr.f32.mxu0 0.0
      %724 = vmatmul.mubr.f32.gmra.mrb[0].mxu0 %v648
      %v725 = vpop.f32.mrb[0].mxu0
      %v726 = vadd.f32 0.0, %v725
      %v727 = vpop.f32.mrb[0].mxu0
      %728 = vmatprep.mubr.f32.mxu0 0.0
      %729 = vmatmul.mubr.f32.gmra.mrb[0].mxu0 %v650
      %v730 = vpop.f32.mrb[0].mxu0
      %v731 = vadd.f32 0.0, %v730
      %v732 = vpop.f32.mrb[0].mxu0
      %733 = vmatprep.mubr.f32.mxu0 0.0
      %734 = vmatmul.mubr.f32.gmra.mrb[0].mxu0 %v652
      %v735 = vpop.f32.mrb[0].mxu0
      %v736 = vadd.f32 0.0, %v735
      %v737 = vpop.f32.mrb[0].mxu0
      %738 = vdwg.mxu0
      %v739 = vmul.f32 %v721, %v721
      %v740 = vmul.f32 %v726, %v726
      %v741 = vmul.f32 %v731, %v731
      %v742 = vmul.f32 %v736, %v736
      %v743 = vadd.f32 %v634, %v739
      %v744 = vadd.f32 %v635, %v740
      %v745 = vadd.f32 %v636, %v741
      %v746 = vadd.f32 %v637, %v742
      %747 = vrot.lane.b32.xlu0 %v528, 64
      %v748 = vpop.permute.xlu0 %747
      %749 = vrot.lane.b32.xlu0 %v529, 64
      %v750 = vpop.permute.xlu0 %749
      %751 = vrot.lane.b32.xlu0 %v530, 64
      %v752 = vpop.permute.xlu0 %751
      %753 = vrot.lane.b32.xlu0 %v531, 64
      %v754 = vpop.permute.xlu0 %753
      %v755 = vsel %vm532, %v748, 0
      %v757 = vsel %vm532, %v750, 0
      %v759 = vsel %vm532, %v752, 0
      %v761 = vsel %vm532, %v754, 0
      %763 = vmatprep.subr.mxu0 0.0
      %764 = vmatpush1.msra.mxu0 %v520
      %765 = vmatprep.subr.mxu0 0.0
      %766 = vmatpush1.msra.mxu0 %v521
      %767 = vmatprep.subr.mxu0 0.0
      %768 = vmatpush1.msra.mxu0 %v522
      %769 = vmatprep.subr.mxu0 0.0
      %770 = vmatpush1.msra.mxu0 %v523
      %771 = vmatprep.subr.mxu0 0.0
      %772 = vmatpush1.msra.mxu0 0.0
      %773 = vmatprep.subr.mxu0 0.0
      %774 = vmatpush1.msra.mxu0 0.0
      %775 = vmatprep.subr.mxu0 0.0
      %776 = vmatpush1.msra.mxu0 0.0
      %777 = vmatprep.subr.mxu0 0.0
      %778 = vmatpush1.msra.mxu0 0.0
      %779 = vmatprep.subr.mxu0 0.0
      %780 = vmatpush1.msra.mxu0 0.0
      %781 = vmatprep.subr.mxu0 0.0
      %782 = vmatpush1.msra.mxu0 0.0
      %783 = vmatprep.subr.mxu0 0.0
      %784 = vmatpush1.msra.mxu0 0.0
      %785 = vmatprep.subr.mxu0 0.0
      %786 = vmatpush1.msra.mxu0 0.0
      %787 = vmatprep.subr.mxu0 0.0
      %788 = vmatpush1.msra.mxu0 0.0
      %789 = vmatprep.subr.mxu0 0.0
      %790 = vmatpush1.msra.mxu0 0.0
      %791 = vmatprep.subr.mxu0 0.0
      %792 = vmatpush1.msra.mxu0 0.0
      %793 = vmatprep.subr.mxu0 0.0
      %794 = vmatpush1.msra.mxu0 0.0
      %795 = vmatprep.subr.mxu0 0.0
      %796 = vmatpush1.msra.mxu0 0.0
      %797 = vmatprep.subr.mxu0 0.0
      %798 = vmatpush1.msra.mxu0 0.0
      %799 = vmatprep.subr.mxu0 0.0
      %800 = vmatpush1.msra.mxu0 0.0
      %801 = vmatprep.subr.mxu0 0.0
      %802 = vmatpush1.msra.mxu0 0.0
      %803 = vmatprep.subr.mxu0 0.0
      %804 = vmatpush1.msra.mxu0 0.0
      %805 = vmatprep.subr.mxu0 0.0
      %806 = vmatpush1.msra.mxu0 0.0
      %807 = vmatprep.subr.mxu0 0.0
      %808 = vmatpush1.msra.mxu0 0.0
      %809 = vmatprep.subr.mxu0 0.0
      %810 = vmatpush1.msra.mxu0 0.0
      %811 = vmatprep.subr.mxu0 0.0
      %812 = vmatpush1.msra.mxu0 0.0
      %813 = vmatprep.subr.mxu0 0.0
      %814 = vmatpush1.msra.mxu0 0.0
      %815 = vmatprep.subr.mxu0 0.0
      %816 = vmatpush1.msra.mxu0 0.0
      %817 = vmatprep.subr.mxu0 0.0
      %818 = vmatpush1.msra.mxu0 0.0
      %819 = vmatprep.subr.mxu0 0.0
      %820 = vmatpush1.msra.mxu0 0.0
      %821 = vmatprep.subr.mxu0 0.0
      %822 = vmatpush1.msra.mxu0 0.0
      %823 = vmatprep.subr.mxu0 0.0
      %824 = vmatpush1.msra.mxu0 0.0
      %825 = vmatprep.subr.mxu0 0.0
      %826 = vmatpush1.msra.mxu0 0.0
      %827 = vmatprep.mubr.f32.mxu0 0.0
      %828 = vmatmul.mubr.f32.gmra.mrb[0].mxu0 %v755
      %v829 = vpop.f32.mrb[0].mxu0
      %v830 = vadd.f32 0.0, %v829
      %v831 = vpop.f32.mrb[0].mxu0
      %832 = vmatprep.mubr.f32.mxu0 0.0
      %833 = vmatmul.mubr.f32.gmra.mrb[0].mxu0 %v757
      %v834 = vpop.f32.mrb[0].mxu0
      %v835 = vadd.f32 0.0, %v834
      %v836 = vpop.f32.mrb[0].mxu0
      %837 = vmatprep.mubr.f32.mxu0 0.0
      %838 = vmatmul.mubr.f32.gmra.mrb[0].mxu0 %v759
      %v839 = vpop.f32.mrb[0].mxu0
      %v840 = vadd.f32 0.0, %v839
      %v841 = vpop.f32.mrb[0].mxu0
      %842 = vmatprep.mubr.f32.mxu0 0.0
      %843 = vmatmul.mubr.f32.gmra.mrb[0].mxu0 %v761
      %v844 = vpop.f32.mrb[0].mxu0
      %v845 = vadd.f32 0.0, %v844
      %v846 = vpop.f32.mrb[0].mxu0
      %847 = vdwg.mxu0
      %v848 = vmul.f32 %v830, %v830
      %v849 = vmul.f32 %v835, %v835
      %v850 = vmul.f32 %v840, %v840
      %v851 = vmul.f32 %v845, %v845
      %v852 = vadd.f32 %v743, %v848
      %v853 = vadd.f32 %v744, %v849
      %v854 = vadd.f32 %v745, %v850
      %v855 = vadd.f32 %v746, %v851
      %v856 = vld [vmem:[%s499] sm:$0xff]
      %v857 = vld [vmem:[%s499 + $0x8] sm:$0xff]
      %v858 = vld [vmem:[%s499 + $0x10] sm:$0xff]
      %v859 = vld [vmem:[%s499 + $0x18] sm:$0xff]
      %v860 = vld [vmem:[%s499 + $0x20] sm:$0xff]
      %v861 = vld [vmem:[%s499 + $0x28] sm:$0xff]
      %v862 = vld [vmem:[%s499 + $0x30] sm:$0xff]
      %v863 = vld [vmem:[%s499 + $0x38] sm:$0xff]
      %v865 = vsel %vm532, %v856, 0
      %v868 = vsel %vm532, %v858, 0
      %v871 = vsel %vm532, %v860, 0
      %v874 = vsel %vm532, %v862, 0
      %876 = vmatprep.subr.mxu0 0.0
      %877 = vmatpush1.msra.mxu0 %v520
      %878 = vmatprep.subr.mxu0 0.0
      %879 = vmatpush1.msra.mxu0 %v521
      %880 = vmatprep.subr.mxu0 0.0
      %881 = vmatpush1.msra.mxu0 %v522
      %882 = vmatprep.subr.mxu0 0.0
      %883 = vmatpush1.msra.mxu0 %v523
      %884 = vmatprep.subr.mxu0 0.0
      %885 = vmatpush1.msra.mxu0 0.0
      %886 = vmatprep.subr.mxu0 0.0
      %887 = vmatpush1.msra.mxu0 0.0
      %888 = vmatprep.subr.mxu0 0.0
      %889 = vmatpush1.msra.mxu0 0.0
      %890 = vmatprep.subr.mxu0 0.0
      %891 = vmatpush1.msra.mxu0 0.0
      %892 = vmatprep.subr.mxu0 0.0
      %893 = vmatpush1.msra.mxu0 0.0
      %894 = vmatprep.subr.mxu0 0.0
      %895 = vmatpush1.msra.mxu0 0.0
      %896 = vmatprep.subr.mxu0 0.0
      %897 = vmatpush1.msra.mxu0 0.0
      %898 = vmatprep.subr.mxu0 0.0
      %899 = vmatpush1.msra.mxu0 0.0
      %900 = vmatprep.subr.mxu0 0.0
      %901 = vmatpush1.msra.mxu0 0.0
      %902 = vmatprep.subr.mxu0 0.0
      %903 = vmatpush1.msra.mxu0 0.0
      %904 = vmatprep.subr.mxu0 0.0
      %905 = vmatpush1.msra.mxu0 0.0
      %906 = vmatprep.subr.mxu0 0.0
      %907 = vmatpush1.msra.mxu0 0.0
      %908 = vmatprep.subr.mxu0 0.0
      %909 = vmatpush1.msra.mxu0 0.0
      %910 = vmatprep.subr.mxu0 0.0
      %911 = vmatpush1.msra.mxu0 0.0
      %912 = vmatprep.subr.mxu0 0.0
      %913 = vmatpush1.msra.mxu0 0.0
      %914 = vmatprep.subr.mxu0 0.0
      %915 = vmatpush1.msra.mxu0 0.0
      %916 = vmatprep.subr.mxu0 0.0
      %917 = vmatpush1.msra.mxu0 0.0
      %918 = vmatprep.subr.mxu0 0.0
      %919 = vmatpush1.msra.mxu0 0.0
      %920 = vmatprep.subr.mxu0 0.0
      %921 = vmatpush1.msra.mxu0 0.0
      %922 = vmatprep.subr.mxu0 0.0
      %923 = vmatpush1.msra.mxu0 0.0
      %924 = vmatprep.subr.mxu0 0.0
      %925 = vmatpush1.msra.mxu0 0.0
      %926 = vmatprep.subr.mxu0 0.0
      %927 = vmatpush1.msra.mxu0 0.0
      %928 = vmatprep.subr.mxu0 0.0
      %929 = vmatpush1.msra.mxu0 0.0
      %930 = vmatprep.subr.mxu0 0.0
      %931 = vmatpush1.msra.mxu0 0.0
      %932 = vmatprep.subr.mxu0 0.0
      %933 = vmatpush1.msra.mxu0 0.0
      %934 = vmatprep.subr.mxu0 0.0
      %935 = vmatpush1.msra.mxu0 0.0
      %936 = vmatprep.subr.mxu0 0.0
      %937 = vmatpush1.msra.mxu0 0.0
      %938 = vmatprep.subr.mxu0 0.0
      %939 = vmatpush1.msra.mxu0 0.0
      %940 = vmatprep.mubr.f32.mxu0 0.0
      %941 = vmatmul.mubr.f32.gmra.mrb[0].mxu0 %v865
      %v942 = vpop.f32.mrb[0].mxu0
      %v943 = vadd.f32 0.0, %v942
      %v944 = vpop.f32.mrb[0].mxu0
      %945 = vmatprep.mubr.f32.mxu0 0.0
      %946 = vmatmul.mubr.f32.gmra.mrb[0].mxu0 %v868
      %v947 = vpop.f32.mrb[0].mxu0
      %v948 = vadd.f32 0.0, %v947
      %v949 = vpop.f32.mrb[0].mxu0
      %950 = vmatprep.mubr.f32.mxu0 0.0
      %951 = vmatmul.mubr.f32.gmra.mrb[0].mxu0 %v871
      %v952 = vpop.f32.mrb[0].mxu0
      %v953 = vadd.f32 0.0, %v952
      %v954 = vpop.f32.mrb[0].mxu0
      %955 = vmatprep.mubr.f32.mxu0 0.0
      %956 = vmatmul.mubr.f32.gmra.mrb[0].mxu0 %v874
      %v957 = vpop.f32.mrb[0].mxu0
      %v958 = vadd.f32 0.0, %v957
      %v959 = vpop.f32.mrb[0].mxu0
      %960 = vdwg.mxu0
      %v961 = vmul.f32 %v943, %v943
      %v962 = vmul.f32 %v948, %v948
      %v963 = vmul.f32 %v953, %v953
      %v964 = vmul.f32 %v958, %v958
      %v965 = vadd.f32 %v852, %v961
      %v966 = vadd.f32 %v853, %v962
      %v967 = vadd.f32 %v854, %v963
      %v968 = vadd.f32 %v855, %v964
      %969 = vrot.lane.b32.xlu0 %v856, 96
      %v970 = vpop.permute.xlu0 %969
      %971 = vrot.lane.b32.xlu0 %v858, 96
      %v972 = vpop.permute.xlu0 %971
      %973 = vrot.lane.b32.xlu0 %v860, 96
      %v974 = vpop.permute.xlu0 %973
      %975 = vrot.lane.b32.xlu0 %v862, 96
      %v976 = vpop.permute.xlu0 %975
      %v977 = vsel %vm532, %v970, 0
      %v979 = vsel %vm532, %v972, 0
      %v981 = vsel %vm532, %v974, 0
      %v983 = vsel %vm532, %v976, 0
      %985 = vmatprep.subr.mxu0 0.0
      %986 = vmatpush1.msra.mxu0 %v520
      %987 = vmatprep.subr.mxu0 0.0
      %988 = vmatpush1.msra.mxu0 %v521
      %989 = vmatprep.subr.mxu0 0.0
      %990 = vmatpush1.msra.mxu0 %v522
      %991 = vmatprep.subr.mxu0 0.0
      %992 = vmatpush1.msra.mxu0 %v523
      %993 = vmatprep.subr.mxu0 0.0
      %994 = vmatpush1.msra.mxu0 0.0
      %995 = vmatprep.subr.mxu0 0.0
      %996 = vmatpush1.msra.mxu0 0.0
      %997 = vmatprep.subr.mxu0 0.0
      %998 = vmatpush1.msra.mxu0 0.0
      %999 = vmatprep.subr.mxu0 0.0
      %1000 = vmatpush1.msra.mxu0 0.0
      %1001 = vmatprep.subr.mxu0 0.0
      %1002 = vmatpush1.msra.mxu0 0.0
      %1003 = vmatprep.subr.mxu0 0.0
      %1004 = vmatpush1.msra.mxu0 0.0
      %1005 = vmatprep.subr.mxu0 0.0
      %1006 = vmatpush1.msra.mxu0 0.0
      %1007 = vmatprep.subr.mxu0 0.0
      %1008 = vmatpush1.msra.mxu0 0.0
      %1009 = vmatprep.subr.mxu0 0.0
      %1010 = vmatpush1.msra.mxu0 0.0
      %1011 = vmatprep.subr.mxu0 0.0
      %1012 = vmatpush1.msra.mxu0 0.0
      %1013 = vmatprep.subr.mxu0 0.0
      %1014 = vmatpush1.msra.mxu0 0.0
      %1015 = vmatprep.subr.mxu0 0.0
      %1016 = vmatpush1.msra.mxu0 0.0
      %1017 = vmatprep.subr.mxu0 0.0
      %1018 = vmatpush1.msra.mxu0 0.0
      %1019 = vmatprep.subr.mxu0 0.0
      %1020 = vmatpush1.msra.mxu0 0.0
      %1021 = vmatprep.subr.mxu0 0.0
      %1022 = vmatpush1.msra.mxu0 0.0
      %1023 = vmatprep.subr.mxu0 0.0
      %1024 = vmatpush1.msra.mxu0 0.0
      %1025 = vmatprep.subr.mxu0 0.0
      %1026 = vmatpush1.msra.mxu0 0.0
      %1027 = vmatprep.subr.mxu0 0.0
      %1028 = vmatpush1.msra.mxu0 0.0
      %1029 = vmatprep.subr.mxu0 0.0
      %1030 = vmatpush1.msra.mxu0 0.0
      %1031 = vmatprep.subr.mxu0 0.0
      %1032 = vmatpush1.msra.mxu0 0.0
      %1033 = vmatprep.subr.mxu0 0.0
      %1034 = vmatpush1.msra.mxu0 0.0
      %1035 = vmatprep.subr.mxu0 0.0
      %1036 = vmatpush1.msra.mxu0 0.0
      %1037 = vmatprep.subr.mxu0 0.0
      %1038 = vmatpush1.msra.mxu0 0.0
      %1039 = vmatprep.subr.mxu0 0.0
      %1040 = vmatpush1.msra.mxu0 0.0
      %1041 = vmatprep.subr.mxu0 0.0
      %1042 = vmatpush1.msra.mxu0 0.0
      %1043 = vmatprep.subr.mxu0 0.0
      %1044 = vmatpush1.msra.mxu0 0.0
      %1045 = vmatprep.subr.mxu0 0.0
      %1046 = vmatpush1.msra.mxu0 0.0
      %1047 = vmatprep.subr.mxu0 0.0
      %1048 = vmatpush1.msra.mxu0 0.0
      %1049 = vmatprep.mubr.f32.mxu0 0.0
      %1050 = vmatmul.mubr.f32.gmra.mrb[0].mxu0 %v977
      %v1051 = vpop.f32.mrb[0].mxu0
      %v1052 = vadd.f32 0.0, %v1051
      %v1053 = vpop.f32.mrb[0].mxu0
      %1054 = vmatprep.mubr.f32.mxu0 0.0
      %1055 = vmatmul.mubr.f32.gmra.mrb[0].mxu0 %v979
      %v1056 = vpop.f32.mrb[0].mxu0
      %v1057 = vadd.f32 0.0, %v1056
      %v1058 = vpop.f32.mrb[0].mxu0
      %1059 = vmatprep.mubr.f32.mxu0 0.0
      %1060 = vmatmul.mubr.f32.gmra.mrb[0].mxu0 %v981
      %v1061 = vpop.f32.mrb[0].mxu0
      %v1062 = vadd.f32 0.0, %v1061
      %v1063 = vpop.f32.mrb[0].mxu0
      %1064 = vmatprep.mubr.f32.mxu0 0.0
      %1065 = vmatmul.mubr.f32.gmra.mrb[0].mxu0 %v983
      %v1066 = vpop.f32.mrb[0].mxu0
      %v1067 = vadd.f32 0.0, %v1066
      %v1068 = vpop.f32.mrb[0].mxu0
      %1069 = vdwg.mxu0
      %v1070 = vmul.f32 %v1052, %v1052
      %v1071 = vmul.f32 %v1057, %v1057
      %v1072 = vmul.f32 %v1062, %v1062
      %v1073 = vmul.f32 %v1067, %v1067
      %v1074 = vadd.f32 %v965, %v1070
      %v1075 = vadd.f32 %v966, %v1071
      %v1076 = vadd.f32 %v967, %v1072
      %v1077 = vadd.f32 %v968, %v1073
      %1078 = vrot.lane.b32.xlu0 %v856, 64
      %v1079 = vpop.permute.xlu0 %1078
      %1080 = vrot.lane.b32.xlu0 %v858, 64
      %v1081 = vpop.permute.xlu0 %1080
      %1082 = vrot.lane.b32.xlu0 %v860, 64
      %v1083 = vpop.permute.xlu0 %1082
      %1084 = vrot.lane.b32.xlu0 %v862, 64
      %v1085 = vpop.permute.xlu0 %1084
      %v1086 = vsel %vm532, %v1079, 0
      %v1088 = vsel %vm532, %v1081, 0
      %v1090 = vsel %vm532, %v1083, 0
      %v1092 = vsel %vm532, %v1085, 0
      %1094 = vmatprep.subr.mxu0 0.0
      %1095 = vmatpush1.msra.mxu0 %v520
      %1096 = vmatprep.subr.mxu0 0.0
      %1097 = vmatpush1.msra.mxu0 %v521
      %1098 = vmatprep.subr.mxu0 0.0
      %1099 = vmatpush1.msra.mxu0 %v522
      %1100 = vmatprep.subr.mxu0 0.0
      %1101 = vmatpush1.msra.mxu0 %v523
      %1102 = vmatprep.subr.mxu0 0.0
      %1103 = vmatpush1.msra.mxu0 0.0
      %1104 = vmatprep.subr.mxu0 0.0
      %1105 = vmatpush1.msra.mxu0 0.0
      %1106 = vmatprep.subr.mxu0 0.0
      %1107 = vmatpush1.msra.mxu0 0.0
      %1108 = vmatprep.subr.mxu0 0.0
      %1109 = vmatpush1.msra.mxu0 0.0
      %1110 = vmatprep.subr.mxu0 0.0
      %1111 = vmatpush1.msra.mxu0 0.0
      %1112 = vmatprep.subr.mxu0 0.0
      %1113 = vmatpush1.msra.mxu0 0.0
      %1114 = vmatprep.subr.mxu0 0.0
      %1115 = vmatpush1.msra.mxu0 0.0
      %1116 = vmatprep.subr.mxu0 0.0
      %1117 = vmatpush1.msra.mxu0 0.0
      %1118 = vmatprep.subr.mxu0 0.0
      %1119 = vmatpush1.msra.mxu0 0.0
      %1120 = vmatprep.subr.mxu0 0.0
      %1121 = vmatpush1.msra.mxu0 0.0
      %1122 = vmatprep.subr.mxu0 0.0
      %1123 = vmatpush1.msra.mxu0 0.0
      %1124 = vmatprep.subr.mxu0 0.0
      %1125 = vmatpush1.msra.mxu0 0.0
      %1126 = vmatprep.subr.mxu0 0.0
      %1127 = vmatpush1.msra.mxu0 0.0
      %1128 = vmatprep.subr.mxu0 0.0
      %1129 = vmatpush1.msra.mxu0 0.0
      %1130 = vmatprep.subr.mxu0 0.0
      %1131 = vmatpush1.msra.mxu0 0.0
      %1132 = vmatprep.subr.mxu0 0.0
      %1133 = vmatpush1.msra.mxu0 0.0
      %1134 = vmatprep.subr.mxu0 0.0
      %1135 = vmatpush1.msra.mxu0 0.0
      %1136 = vmatprep.subr.mxu0 0.0
      %1137 = vmatpush1.msra.mxu0 0.0
      %1138 = vmatprep.subr.mxu0 0.0
      %1139 = vmatpush1.msra.mxu0 0.0
      %1140 = vmatprep.subr.mxu0 0.0
      %1141 = vmatpush1.msra.mxu0 0.0
      %1142 = vmatprep.subr.mxu0 0.0
      %1143 = vmatpush1.msra.mxu0 0.0
      %1144 = vmatprep.subr.mxu0 0.0
      %1145 = vmatpush1.msra.mxu0 0.0
      %1146 = vmatprep.subr.mxu0 0.0
      %1147 = vmatpush1.msra.mxu0 0.0
      %1148 = vmatprep.subr.mxu0 0.0
      %1149 = vmatpush1.msra.mxu0 0.0
      %1150 = vmatprep.subr.mxu0 0.0
      %1151 = vmatpush1.msra.mxu0 0.0
      %1152 = vmatprep.subr.mxu0 0.0
      %1153 = vmatpush1.msra.mxu0 0.0
      %1154 = vmatprep.subr.mxu0 0.0
      %1155 = vmatpush1.msra.mxu0 0.0
      %1156 = vmatprep.subr.mxu0 0.0
      %1157 = vmatpush1.msra.mxu0 0.0
      %1158 = vmatprep.mubr.f32.mxu0 0.0
      %1159 = vmatmul.mubr.f32.gmra.mrb[0].mxu0 %v1086
      %v1160 = vpop.f32.mrb[0].mxu0
      %v1161 = vadd.f32 0.0, %v1160
      %v1162 = vpop.f32.mrb[0].mxu0
      %1163 = vmatprep.mubr.f32.mxu0 0.0
      %1164 = vmatmul.mubr.f32.gmra.mrb[0].mxu0 %v1088
      %v1165 = vpop.f32.mrb[0].mxu0
      %v1166 = vadd.f32 0.0, %v1165
      %v1167 = vpop.f32.mrb[0].mxu0
      %1168 = vmatprep.mubr.f32.mxu0 0.0
      %1169 = vmatmul.mubr.f32.gmra.mrb[0].mxu0 %v1090
      %v1170 = vpop.f32.mrb[0].mxu0
      %v1171 = vadd.f32 0.0, %v1170
      %v1172 = vpop.f32.mrb[0].mxu0
      %1173 = vmatprep.mubr.f32.mxu0 0.0
      %1174 = vmatmul.mubr.f32.gmra.mrb[0].mxu0 %v1092
      %v1175 = vpop.f32.mrb[0].mxu0
      %v1176 = vadd.f32 0.0, %v1175
      %v1177 = vpop.f32.mrb[0].mxu0
      %1178 = vdwg.mxu0
      %v1179 = vmul.f32 %v1161, %v1161
      %v1180 = vmul.f32 %v1166, %v1166
      %v1181 = vmul.f32 %v1171, %v1171
      %v1182 = vmul.f32 %v1176, %v1176
      %v1183 = vadd.f32 %v1074, %v1179
      %v1184 = vadd.f32 %v1075, %v1180
      %v1185 = vadd.f32 %v1076, %v1181
      %v1186 = vadd.f32 %v1077, %v1182
      %1187 = vrot.lane.b32.xlu0 %v856, 32
      %v1188 = vpop.permute.xlu0 %1187
      %1189 = vrot.lane.b32.xlu0 %v858, 32
      %v1190 = vpop.permute.xlu0 %1189
      %1191 = vrot.lane.b32.xlu0 %v860, 32
      %v1192 = vpop.permute.xlu0 %1191
      %1193 = vrot.lane.b32.xlu0 %v862, 32
      %v1194 = vpop.permute.xlu0 %1193
      %v1195 = vsel %vm532, %v1188, 0
      %v1197 = vsel %vm532, %v1190, 0
      %v1199 = vsel %vm532, %v1192, 0
      %v1201 = vsel %vm532, %v1194, 0
      %1203 = vmatprep.subr.mxu0 0.0
      %1204 = vmatpush1.msra.mxu0 %v520
      %1205 = vmatprep.subr.mxu0 0.0
      %1206 = vmatpush1.msra.mxu0 %v521
      %1207 = vmatprep.subr.mxu0 0.0
      %1208 = vmatpush1.msra.mxu0 %v522
      %1209 = vmatprep.subr.mxu0 0.0
      %1210 = vmatpush1.msra.mxu0 %v523
      %1211 = vmatprep.subr.mxu0 0.0
      %1212 = vmatpush1.msra.mxu0 0.0
      %1213 = vmatprep.subr.mxu0 0.0
      %1214 = vmatpush1.msra.mxu0 0.0
      %1215 = vmatprep.subr.mxu0 0.0
      %1216 = vmatpush1.msra.mxu0 0.0
      %1217 = vmatprep.subr.mxu0 0.0
      %1218 = vmatpush1.msra.mxu0 0.0
      %1219 = vmatprep.subr.mxu0 0.0
      %1220 = vmatpush1.msra.mxu0 0.0
      %1221 = vmatprep.subr.mxu0 0.0
      %1222 = vmatpush1.msra.mxu0 0.0
      %1223 = vmatprep.subr.mxu0 0.0
      %1224 = vmatpush1.msra.mxu0 0.0
      %1225 = vmatprep.subr.mxu0 0.0
      %1226 = vmatpush1.msra.mxu0 0.0
      %1227 = vmatprep.subr.mxu0 0.0
      %1228 = vmatpush1.msra.mxu0 0.0
      %1229 = vmatprep.subr.mxu0 0.0
      %1230 = vmatpush1.msra.mxu0 0.0
      %1231 = vmatprep.subr.mxu0 0.0
      %1232 = vmatpush1.msra.mxu0 0.0
      %1233 = vmatprep.subr.mxu0 0.0
      %1234 = vmatpush1.msra.mxu0 0.0
      %1235 = vmatprep.subr.mxu0 0.0
      %1236 = vmatpush1.msra.mxu0 0.0
      %1237 = vmatprep.subr.mxu0 0.0
      %1238 = vmatpush1.msra.mxu0 0.0
      %1239 = vmatprep.subr.mxu0 0.0
      %1240 = vmatpush1.msra.mxu0 0.0
      %1241 = vmatprep.subr.mxu0 0.0
      %1242 = vmatpush1.msra.mxu0 0.0
      %1243 = vmatprep.subr.mxu0 0.0
      %1244 = vmatpush1.msra.mxu0 0.0
      %1245 = vmatprep.subr.mxu0 0.0
      %1246 = vmatpush1.msra.mxu0 0.0
      %1247 = vmatprep.subr.mxu0 0.0
      %1248 = vmatpush1.msra.mxu0 0.0
      %1249 = vmatprep.subr.mxu0 0.0
      %1250 = vmatpush1.msra.mxu0 0.0
      %1251 = vmatprep.subr.mxu0 0.0
      %1252 = vmatpush1.msra.mxu0 0.0
      %1253 = vmatprep.subr.mxu0 0.0
      %1254 = vmatpush1.msra.mxu0 0.0
      %1255 = vmatprep.subr.mxu0 0.0
      %1256 = vmatpush1.msra.mxu0 0.0
      %1257 = vmatprep.subr.mxu0 0.0
      %1258 = vmatpush1.msra.mxu0 0.0
      %1259 = vmatprep.subr.mxu0 0.0
      %1260 = vmatpush1.msra.mxu0 0.0
      %1261 = vmatprep.subr.mxu0 0.0
      %1262 = vmatpush1.msra.mxu0 0.0
      %1263 = vmatprep.subr.mxu0 0.0
      %1264 = vmatpush1.msra.mxu0 0.0
      %1265 = vmatprep.subr.mxu0 0.0
      %1266 = vmatpush1.msra.mxu0 0.0
      %1267 = vmatprep.mubr.f32.mxu0 0.0
      %1268 = vmatmul.mubr.f32.gmra.mrb[0].mxu0 %v1195
      %v1269 = vpop.f32.mrb[0].mxu0
      %v1270 = vadd.f32 0.0, %v1269
      %v1271 = vpop.f32.mrb[0].mxu0
      %1272 = vmatprep.mubr.f32.mxu0 0.0
      %1273 = vmatmul.mubr.f32.gmra.mrb[0].mxu0 %v1197
      %v1274 = vpop.f32.mrb[0].mxu0
      %v1275 = vadd.f32 0.0, %v1274
      %v1276 = vpop.f32.mrb[0].mxu0
      %1277 = vmatprep.mubr.f32.mxu0 0.0
      %1278 = vmatmul.mubr.f32.gmra.mrb[0].mxu0 %v1199
      %v1279 = vpop.f32.mrb[0].mxu0
      %v1280 = vadd.f32 0.0, %v1279
      %v1281 = vpop.f32.mrb[0].mxu0
      %1282 = vmatprep.mubr.f32.mxu0 0.0
      %1283 = vmatmul.mubr.f32.gmra.mrb[0].mxu0 %v1201
      %v1284 = vpop.f32.mrb[0].mxu0
      %v1285 = vadd.f32 0.0, %v1284
      %v1286 = vpop.f32.mrb[0].mxu0
      %1287 = vdwg.mxu0
      %v1288 = vmul.f32 %v1270, %v1270
      %v1289 = vmul.f32 %v1275, %v1275
      %v1290 = vmul.f32 %v1280, %v1280
      %v1291 = vmul.f32 %v1285, %v1285
      %v1292 = vadd.f32 %v1183, %v1288
      %v1293 = vadd.f32 %v1184, %v1289
      %v1294 = vadd.f32 %v1185, %v1290
      %v1295 = vadd.f32 %v1186, %v1291
      %v1297 = vsel %vm532, %v857, 0
      %v1300 = vsel %vm532, %v859, 0
      %v1303 = vsel %vm532, %v861, 0
      %v1306 = vsel %vm532, %v863, 0
      %1308 = vmatprep.subr.mxu0 0.0
      %1309 = vmatpush1.msra.mxu0 %v520
      %1310 = vmatprep.subr.mxu0 0.0
      %1311 = vmatpush1.msra.mxu0 %v521
      %1312 = vmatprep.subr.mxu0 0.0
      %1313 = vmatpush1.msra.mxu0 %v522
      %1314 = vmatprep.subr.mxu0 0.0
      %1315 = vmatpush1.msra.mxu0 %v523
      %1316 = vmatprep.subr.mxu0 0.0
      %1317 = vmatpush1.msra.mxu0 0.0
      %1318 = vmatprep.subr.mxu0 0.0
      %1319 = vmatpush1.msra.mxu0 0.0
      %1320 = vmatprep.subr.mxu0 0.0
      %1321 = vmatpush1.msra.mxu0 0.0
      %1322 = vmatprep.subr.mxu0 0.0
      %1323 = vmatpush1.msra.mxu0 0.0
      %1324 = vmatprep.subr.mxu0 0.0
      %1325 = vmatpush1.msra.mxu0 0.0
      %1326 = vmatprep.subr.mxu0 0.0
      %1327 = vmatpush1.msra.mxu0 0.0
      %1328 = vmatprep.subr.mxu0 0.0
      %1329 = vmatpush1.msra.mxu0 0.0
      %1330 = vmatprep.subr.mxu0 0.0
      %1331 = vmatpush1.msra.mxu0 0.0
      %1332 = vmatprep.subr.mxu0 0.0
      %1333 = vmatpush1.msra.mxu0 0.0
      %1334 = vmatprep.subr.mxu0 0.0
      %1335 = vmatpush1.msra.mxu0 0.0
      %1336 = vmatprep.subr.mxu0 0.0
      %1337 = vmatpush1.msra.mxu0 0.0
      %1338 = vmatprep.subr.mxu0 0.0
      %1339 = vmatpush1.msra.mxu0 0.0
      %1340 = vmatprep.subr.mxu0 0.0
      %1341 = vmatpush1.msra.mxu0 0.0
      %1342 = vmatprep.subr.mxu0 0.0
      %1343 = vmatpush1.msra.mxu0 0.0
      %1344 = vmatprep.subr.mxu0 0.0
      %1345 = vmatpush1.msra.mxu0 0.0
      %1346 = vmatprep.subr.mxu0 0.0
      %1347 = vmatpush1.msra.mxu0 0.0
      %1348 = vmatprep.subr.mxu0 0.0
      %1349 = vmatpush1.msra.mxu0 0.0
      %1350 = vmatprep.subr.mxu0 0.0
      %1351 = vmatpush1.msra.mxu0 0.0
      %1352 = vmatprep.subr.mxu0 0.0
      %1353 = vmatpush1.msra.mxu0 0.0
      %1354 = vmatprep.subr.mxu0 0.0
      %1355 = vmatpush1.msra.mxu0 0.0
      %1356 = vmatprep.subr.mxu0 0.0
      %1357 = vmatpush1.msra.mxu0 0.0
      %1358 = vmatprep.subr.mxu0 0.0
      %1359 = vmatpush1.msra.mxu0 0.0
      %1360 = vmatprep.subr.mxu0 0.0
      %1361 = vmatpush1.msra.mxu0 0.0
      %1362 = vmatprep.subr.mxu0 0.0
      %1363 = vmatpush1.msra.mxu0 0.0
      %1364 = vmatprep.subr.mxu0 0.0
      %1365 = vmatpush1.msra.mxu0 0.0
      %1366 = vmatprep.subr.mxu0 0.0
      %1367 = vmatpush1.msra.mxu0 0.0
      %1368 = vmatprep.subr.mxu0 0.0
      %1369 = vmatpush1.msra.mxu0 0.0
      %1370 = vmatprep.subr.mxu0 0.0
      %1371 = vmatpush1.msra.mxu0 0.0
      %1372 = vmatprep.mubr.f32.mxu0 0.0
      %1373 = vmatmul.mubr.f32.gmra.mrb[0].mxu0 %v1297
      %v1374 = vpop.f32.mrb[0].mxu0
      %v1375 = vadd.f32 0.0, %v1374
      %v1376 = vpop.f32.mrb[0].mxu0
      %1377 = vmatprep.mubr.f32.mxu0 0.0
      %1378 = vmatmul.mubr.f32.gmra.mrb[0].mxu0 %v1300
      %v1379 = vpop.f32.mrb[0].mxu0
      %v1380 = vadd.f32 0.0, %v1379
      %v1381 = vpop.f32.mrb[0].mxu0
      %1382 = vmatprep.mubr.f32.mxu0 0.0
      %1383 = vmatmul.mubr.f32.gmra.mrb[0].mxu0 %v1303
      %v1384 = vpop.f32.mrb[0].mxu0
      %v1385 = vadd.f32 0.0, %v1384
      %v1386 = vpop.f32.mrb[0].mxu0
      %1387 = vmatprep.mubr.f32.mxu0 0.0
      %1388 = vmatmul.mubr.f32.gmra.mrb[0].mxu0 %v1306
      %v1389 = vpop.f32.mrb[0].mxu0
      %v1390 = vadd.f32 0.0, %v1389
      %v1391 = vpop.f32.mrb[0].mxu0
      %1392 = vdwg.mxu0
      %v1393 = vmul.f32 %v1375, %v1375
      %v1394 = vmul.f32 %v1380, %v1380
      %v1395 = vmul.f32 %v1385, %v1385
      %v1396 = vmul.f32 %v1390, %v1390
      %v1397 = vadd.f32 %v1292, %v1393
      %v1398 = vadd.f32 %v1293, %v1394
      %v1399 = vadd.f32 %v1294, %v1395
      %v1400 = vadd.f32 %v1295, %v1396
      %v1401 = vadd.f32 %v1397, 1e-08
      %v1402 = vadd.f32 %v1398, 1e-08
      %v1403 = vadd.f32 %v1399, 1e-08
      %v1404 = vadd.f32 %v1400, 1e-08
      %v1405 = vrsqrt.pop %v1401
      %v1406 = vmul.f32 %v1401, %v1405
      %vm1407 = vcmp.eq.f32.partialorder %v1401, inf
      %v1408 = vsel %vm1407, %v1401, %v1406
      %vm1409 = vcmp.eq.f32.partialorder %v1401, 0.0
      %v1410 = vand.u32 %v1401, 2147483648
      %v1411 = vsel %vm1409, %v1410, %v1408
      %v1412 = vrsqrt.pop %v1402
      %v1413 = vmul.f32 %v1402, %v1412
      %vm1414 = vcmp.eq.f32.partialorder %v1402, inf
      %v1415 = vsel %vm1414, %v1402, %v1413
      %vm1416 = vcmp.eq.f32.partialorder %v1402, 0.0
      %v1417 = vand.u32 %v1402, 2147483648
      %v1418 = vsel %vm1416, %v1417, %v1415
      %v1419 = vrsqrt.pop %v1403
      %v1420 = vmul.f32 %v1403, %v1419
      %vm1421 = vcmp.eq.f32.partialorder %v1403, inf
      %v1422 = vsel %vm1421, %v1403, %v1420
      %vm1423 = vcmp.eq.f32.partialorder %v1403, 0.0
      %v1424 = vand.u32 %v1403, 2147483648
      %v1425 = vsel %vm1423, %v1424, %v1422
      %v1426 = vrsqrt.pop %v1404
      %v1427 = vmul.f32 %v1404, %v1426
      %vm1428 = vcmp.eq.f32.partialorder %v1404, inf
      %v1429 = vsel %vm1428, %v1404, %v1427
      %vm1430 = vcmp.eq.f32.partialorder %v1404, 0.0
      %v1431 = vand.u32 %v1404, 2147483648
      %v1432 = vsel %vm1430, %v1431, %v1429
      %v1433 = vld [vmem:[%s4] sm:$0xff]
      %v1434 = vld [vmem:[%s4 + $0x8] sm:$0xff]
      %v1435 = vld [vmem:[%s4 + $0x10] sm:$0xff]
      %v1436 = vld [vmem:[%s4 + $0x18] sm:$0xff]
      %v1437 = vld [vmem:[%s5] sm:$0xff]
      %v1438 = vld [vmem:[%s5 + $0x8] sm:$0xff]
      %v1439 = vld [vmem:[%s5 + $0x10] sm:$0xff]
      %v1440 = vld [vmem:[%s5 + $0x18] sm:$0xff]
      %v1442 = vsel %vm532, %v1411, 0
      %v1445 = vsel %vm532, %v1418, 0
      %v1448 = vsel %vm532, %v1425, 0
      %v1451 = vsel %vm532, %v1432, 0
      %1453 = vmatprep.subr.mxu0 0.0
      %1454 = vmatpush1.msra.mxu0 %v1437
      %1455 = vmatprep.subr.mxu0 0.0
      %1456 = vmatpush1.msra.mxu0 %v1438
      %1457 = vmatprep.subr.mxu0 0.0
      %1458 = vmatpush1.msra.mxu0 %v1439
      %1459 = vmatprep.subr.mxu0 0.0
      %1460 = vmatpush1.msra.mxu0 %v1440
      %1461 = vmatprep.subr.mxu0 0.0
      %1462 = vmatpush1.msra.mxu0 0.0
      %1463 = vmatprep.subr.mxu0 0.0
      %1464 = vmatpush1.msra.mxu0 0.0
      %1465 = vmatprep.subr.mxu0 0.0
      %1466 = vmatpush1.msra.mxu0 0.0
      %1467 = vmatprep.subr.mxu0 0.0
      %1468 = vmatpush1.msra.mxu0 0.0
      %1469 = vmatprep.subr.mxu0 0.0
      %1470 = vmatpush1.msra.mxu0 0.0
      %1471 = vmatprep.subr.mxu0 0.0
      %1472 = vmatpush1.msra.mxu0 0.0
      %1473 = vmatprep.subr.mxu0 0.0
      %1474 = vmatpush1.msra.mxu0 0.0
      %1475 = vmatprep.subr.mxu0 0.0
      %1476 = vmatpush1.msra.mxu0 0.0
      %1477 = vmatprep.subr.mxu0 0.0
      %1478 = vmatpush1.msra.mxu0 0.0
      %1479 = vmatprep.subr.mxu0 0.0
      %1480 = vmatpush1.msra.mxu0 0.0
      %1481 = vmatprep.subr.mxu0 0.0
      %1482 = vmatpush1.msra.mxu0 0.0
      %1483 = vmatprep.subr.mxu0 0.0
      %1484 = vmatpush1.msra.mxu0 0.0
      %1485 = vmatprep.subr.mxu0 0.0
      %1486 = vmatpush1.msra.mxu0 0.0
      %1487 = vmatprep.subr.mxu0 0.0
      %1488 = vmatpush1.msra.mxu0 0.0
      %1489 = vmatprep.subr.mxu0 0.0
      %1490 = vmatpush1.msra.mxu0 0.0
      %1491 = vmatprep.subr.mxu0 0.0
      %1492 = vmatpush1.msra.mxu0 0.0
      %1493 = vmatprep.subr.mxu0 0.0
      %1494 = vmatpush1.msra.mxu0 0.0
      %1495 = vmatprep.subr.mxu0 0.0
      %1496 = vmatpush1.msra.mxu0 0.0
      %1497 = vmatprep.subr.mxu0 0.0
      %1498 = vmatpush1.msra.mxu0 0.0
      %1499 = vmatprep.subr.mxu0 0.0
      %1500 = vmatpush1.msra.mxu0 0.0
      %1501 = vmatprep.subr.mxu0 0.0
      %1502 = vmatpush1.msra.mxu0 0.0
      %1503 = vmatprep.subr.mxu0 0.0
      %1504 = vmatpush1.msra.mxu0 0.0
      %1505 = vmatprep.subr.mxu0 0.0
      %1506 = vmatpush1.msra.mxu0 0.0
      %1507 = vmatprep.subr.mxu0 0.0
      %1508 = vmatpush1.msra.mxu0 0.0
      %1509 = vmatprep.subr.mxu0 0.0
      %1510 = vmatpush1.msra.mxu0 0.0
      %1511 = vmatprep.subr.mxu0 0.0
      %1512 = vmatpush1.msra.mxu0 0.0
      %1513 = vmatprep.subr.mxu0 0.0
      %1514 = vmatpush1.msra.mxu0 0.0
      %1515 = vmatprep.subr.mxu0 0.0
      %1516 = vmatpush1.msra.mxu0 0.0
      %1517 = vmatprep.mubr.f32.mxu0 0.0
      %1518 = vmatmul.mubr.f32.gmra.mrb[0].mxu0 %v1442
      %v1519 = vpop.f32.mrb[0].mxu0
      %v1520 = vadd.f32 0.0, %v1519
      %v1521 = vpop.f32.mrb[0].mxu0
      %1522 = vmatprep.mubr.f32.mxu0 0.0
      %1523 = vmatmul.mubr.f32.gmra.mrb[0].mxu0 %v1445
      %v1524 = vpop.f32.mrb[0].mxu0
      %v1525 = vadd.f32 0.0, %v1524
      %v1526 = vpop.f32.mrb[0].mxu0
      %1527 = vmatprep.mubr.f32.mxu0 0.0
      %1528 = vmatmul.mubr.f32.gmra.mrb[0].mxu0 %v1448
      %v1529 = vpop.f32.mrb[0].mxu0
      %v1530 = vadd.f32 0.0, %v1529
      %v1531 = vpop.f32.mrb[0].mxu0
      %1532 = vmatprep.mubr.f32.mxu0 0.0
      %1533 = vmatmul.mubr.f32.gmra.mrb[0].mxu0 %v1451
      %v1534 = vpop.f32.mrb[0].mxu0
      %v1535 = vadd.f32 0.0, %v1534
      %v1536 = vpop.f32.mrb[0].mxu0
      %1537 = vdwg.mxu0
      %v1539 = vsel %vm532, %v524, 0
      %v1542 = vsel %vm532, %v525, 0
      %v1545 = vsel %vm532, %v526, 0
      %v1548 = vsel %vm532, %v527, 0
      %1550 = vmatprep.subr.mxu0 0.0
      %1551 = vmatpush1.msra.mxu0 %v1433
      %1552 = vmatprep.subr.mxu0 0.0
      %1553 = vmatpush1.msra.mxu0 %v1434
      %1554 = vmatprep.subr.mxu0 0.0
      %1555 = vmatpush1.msra.mxu0 %v1435
      %1556 = vmatprep.subr.mxu0 0.0
      %1557 = vmatpush1.msra.mxu0 %v1436
      %1558 = vmatprep.subr.mxu0 0.0
      %1559 = vmatpush1.msra.mxu0 0.0
      %1560 = vmatprep.subr.mxu0 0.0
      %1561 = vmatpush1.msra.mxu0 0.0
      %1562 = vmatprep.subr.mxu0 0.0
      %1563 = vmatpush1.msra.mxu0 0.0
      %1564 = vmatprep.subr.mxu0 0.0
      %1565 = vmatpush1.msra.mxu0 0.0
      %1566 = vmatprep.subr.mxu0 0.0
      %1567 = vmatpush1.msra.mxu0 0.0
      %1568 = vmatprep.subr.mxu0 0.0
      %1569 = vmatpush1.msra.mxu0 0.0
      %1570 = vmatprep.subr.mxu0 0.0
      %1571 = vmatpush1.msra.mxu0 0.0
      %1572 = vmatprep.subr.mxu0 0.0
      %1573 = vmatpush1.msra.mxu0 0.0
      %1574 = vmatprep.subr.mxu0 0.0
      %1575 = vmatpush1.msra.mxu0 0.0
      %1576 = vmatprep.subr.mxu0 0.0
      %1577 = vmatpush1.msra.mxu0 0.0
      %1578 = vmatprep.subr.mxu0 0.0
      %1579 = vmatpush1.msra.mxu0 0.0
      %1580 = vmatprep.subr.mxu0 0.0
      %1581 = vmatpush1.msra.mxu0 0.0
      %1582 = vmatprep.subr.mxu0 0.0
      %1583 = vmatpush1.msra.mxu0 0.0
      %1584 = vmatprep.subr.mxu0 0.0
      %1585 = vmatpush1.msra.mxu0 0.0
      %1586 = vmatprep.subr.mxu0 0.0
      %1587 = vmatpush1.msra.mxu0 0.0
      %1588 = vmatprep.subr.mxu0 0.0
      %1589 = vmatpush1.msra.mxu0 0.0
      %1590 = vmatprep.subr.mxu0 0.0
      %1591 = vmatpush1.msra.mxu0 0.0
      %1592 = vmatprep.subr.mxu0 0.0
      %1593 = vmatpush1.msra.mxu0 0.0
      %1594 = vmatprep.subr.mxu0 0.0
      %1595 = vmatpush1.msra.mxu0 0.0
      %1596 = vmatprep.subr.mxu0 0.0
      %1597 = vmatpush1.msra.mxu0 0.0
      %1598 = vmatprep.subr.mxu0 0.0
      %1599 = vmatpush1.msra.mxu0 0.0
      %1600 = vmatprep.subr.mxu0 0.0
      %1601 = vmatpush1.msra.mxu0 0.0
      %1602 = vmatprep.subr.mxu0 0.0
      %1603 = vmatpush1.msra.mxu0 0.0
      %1604 = vmatprep.subr.mxu0 0.0
      %1605 = vmatpush1.msra.mxu0 0.0
      %1606 = vmatprep.subr.mxu0 0.0
      %1607 = vmatpush1.msra.mxu0 0.0
      %1608 = vmatprep.subr.mxu0 0.0
      %1609 = vmatpush1.msra.mxu0 0.0
      %1610 = vmatprep.subr.mxu0 0.0
      %1611 = vmatpush1.msra.mxu0 0.0
      %1612 = vmatprep.subr.mxu0 0.0
      %1613 = vmatpush1.msra.mxu0 0.0
      %1614 = vmatprep.mubr.f32.mxu0 0.0
      %1615 = vmatmul.mubr.f32.gmra.mrb[0].mxu0 %v1539
      %v1616 = vpop.f32.mrb[0].mxu0
      %v1617 = vadd.f32 %v1520, %v1616
      %v1618 = vpop.f32.mrb[0].mxu0
      %1619 = vmatprep.mubr.f32.mxu0 0.0
      %1620 = vmatmul.mubr.f32.gmra.mrb[0].mxu0 %v1542
      %v1621 = vpop.f32.mrb[0].mxu0
      %v1622 = vadd.f32 %v1525, %v1621
      %v1623 = vpop.f32.mrb[0].mxu0
      %1624 = vmatprep.mubr.f32.mxu0 0.0
      %1625 = vmatmul.mubr.f32.gmra.mrb[0].mxu0 %v1545
      %v1626 = vpop.f32.mrb[0].mxu0
      %v1627 = vadd.f32 %v1530, %v1626
      %v1628 = vpop.f32.mrb[0].mxu0
      %1629 = vmatprep.mubr.f32.mxu0 0.0
      %1630 = vmatmul.mubr.f32.gmra.mrb[0].mxu0 %v1548
      %v1631 = vpop.f32.mrb[0].mxu0
      %v1632 = vadd.f32 %v1535, %v1631
      %v1633 = vpop.f32.mrb[0].mxu0
      %1634 = vdwg.mxu0
      %v1635 = vld [vmem:[%s6] sm:$0x1]
      %v1637 = vlaneseq
      %v1638 = vshrl.u32 %v1637, 7
      %v1639 = vsub.s32 0, %v1638
      %v1640 = vrot.slane %v1635, %v1639
      %v1642 = vadd.f32 %v1617, %v1640
      %v1643 = vadd.f32 %v1622, %v1640
      %v1644 = vadd.f32 %v1627, %v1640
      %v1645 = vadd.f32 %v1632, %v1640
      %v1646 = vxor.u32 %v1642, 2147483648
      %v1647 = vxor.u32 %v1643, 2147483648
      %v1648 = vxor.u32 %v1644, 2147483648
      %v1649 = vxor.u32 %v1645, 2147483648
      %v1650 = vmul.f32 %v1646, 1.442695
      %v1651 = vpow.pop %v1650
      %v1652 = vmul.f32 %v1647, 1.442695
      %v1653 = vpow.pop %v1652
      %v1654 = vmul.f32 %v1648, 1.442695
      %v1655 = vpow.pop %v1654
      %v1656 = vmul.f32 %v1649, 1.442695
      %v1657 = vpow.pop %v1656
      %v1658 = vadd.f32 %v1651, 1.0
      %v1659 = vadd.f32 %v1653, 1.0
      %v1660 = vadd.f32 %v1655, 1.0
      %v1661 = vadd.f32 %v1657, 1.0
      %v1662 = vrcp.pop %v1658
      %v1663 = vmul.f32 1.0, %v1662
      %v1664 = vrcp.pop %v1659
      %v1665 = vmul.f32 1.0, %v1664
      %v1666 = vrcp.pop %v1660
      %v1667 = vmul.f32 1.0, %v1666
      %v1668 = vrcp.pop %v1661
      %v1669 = vmul.f32 1.0, %v1668
      %v1670 = vmul.f32 %v1642, %v1663
      %v1671 = vmul.f32 %v1643, %v1665
      %v1672 = vmul.f32 %v1644, %v1667
      %v1673 = vmul.f32 %v1645, %v1669
      %v1674 = vld [vmem:[%s7] sm:$0xff]
      %v1675 = vld [vmem:[%s7 + $0x8] sm:$0xff]
      %v1676 = vld [vmem:[%s7 + $0x10] sm:$0xff]
      %v1677 = vld [vmem:[%s7 + $0x18] sm:$0xff]
      %v1678 = vld [vmem:[%s8] sm:$0x1]
      %v1680 = vlaneseq
      %v1681 = vshrl.u32 %v1680, 7
      %v1682 = vsub.s32 0, %v1681
      %v1683 = vrot.slane %v1678, %v1682
      %v1686 = vsel %vm532, %v1670, 0
      %v1689 = vsel %vm532, %v1671, 0
      %v1692 = vsel %vm532, %v1672, 0
      %v1695 = vsel %vm532, %v1673, 0
      %1697 = vmatprep.subr.mxu0 0.0
      %1698 = vmatpush1.msra.mxu0 %v1674
      %1699 = vmatprep.subr.mxu0 0.0
      %1700 = vmatpush1.msra.mxu0 %v1675
      %1701 = vmatprep.subr.mxu0 0.0
      %1702 = vmatpush1.msra.mxu0 %v1676
      %1703 = vmatprep.subr.mxu0 0.0
      %1704 = vmatpush1.msra.mxu0 %v1677
      %1705 = vmatprep.subr.mxu0 0.0
      %1706 = vmatpush1.msra.mxu0 0.0
      %1707 = vmatprep.subr.mxu0 0.0
      %1708 = vmatpush1.msra.mxu0 0.0
      %1709 = vmatprep.subr.mxu0 0.0
      %1710 = vmatpush1.msra.mxu0 0.0
      %1711 = vmatprep.subr.mxu0 0.0
      %1712 = vmatpush1.msra.mxu0 0.0
      %1713 = vmatprep.subr.mxu0 0.0
      %1714 = vmatpush1.msra.mxu0 0.0
      %1715 = vmatprep.subr.mxu0 0.0
      %1716 = vmatpush1.msra.mxu0 0.0
      %1717 = vmatprep.subr.mxu0 0.0
      %1718 = vmatpush1.msra.mxu0 0.0
      %1719 = vmatprep.subr.mxu0 0.0
      %1720 = vmatpush1.msra.mxu0 0.0
      %1721 = vmatprep.subr.mxu0 0.0
      %1722 = vmatpush1.msra.mxu0 0.0
      %1723 = vmatprep.subr.mxu0 0.0
      %1724 = vmatpush1.msra.mxu0 0.0
      %1725 = vmatprep.subr.mxu0 0.0
      %1726 = vmatpush1.msra.mxu0 0.0
      %1727 = vmatprep.subr.mxu0 0.0
      %1728 = vmatpush1.msra.mxu0 0.0
      %1729 = vmatprep.subr.mxu0 0.0
      %1730 = vmatpush1.msra.mxu0 0.0
      %1731 = vmatprep.subr.mxu0 0.0
      %1732 = vmatpush1.msra.mxu0 0.0
      %1733 = vmatprep.subr.mxu0 0.0
      %1734 = vmatpush1.msra.mxu0 0.0
      %1735 = vmatprep.subr.mxu0 0.0
      %1736 = vmatpush1.msra.mxu0 0.0
      %1737 = vmatprep.subr.mxu0 0.0
      %1738 = vmatpush1.msra.mxu0 0.0
      %1739 = vmatprep.subr.mxu0 0.0
      %1740 = vmatpush1.msra.mxu0 0.0
      %1741 = vmatprep.subr.mxu0 0.0
      %1742 = vmatpush1.msra.mxu0 0.0
      %1743 = vmatprep.subr.mxu0 0.0
      %1744 = vmatpush1.msra.mxu0 0.0
      %1745 = vmatprep.subr.mxu0 0.0
      %1746 = vmatpush1.msra.mxu0 0.0
      %1747 = vmatprep.subr.mxu0 0.0
      %1748 = vmatpush1.msra.mxu0 0.0
      %1749 = vmatprep.subr.mxu0 0.0
      %1750 = vmatpush1.msra.mxu0 0.0
      %1751 = vmatprep.subr.mxu0 0.0
      %1752 = vmatpush1.msra.mxu0 0.0
      %1753 = vmatprep.subr.mxu0 0.0
      %1754 = vmatpush1.msra.mxu0 0.0
      %1755 = vmatprep.subr.mxu0 0.0
      %1756 = vmatpush1.msra.mxu0 0.0
      %1757 = vmatprep.subr.mxu0 0.0
      %1758 = vmatpush1.msra.mxu0 0.0
      %1759 = vmatprep.subr.mxu0 0.0
      %1760 = vmatpush1.msra.mxu0 0.0
      %1761 = vmatprep.mubr.f32.mxu0 0.0
      %1762 = vmatmul.mubr.f32.gmra.mrb[0].mxu0 %v1686
      %v1763 = vpop.f32.mrb[0].mxu0
      %v1764 = vadd.f32 %v1683, %v1763
      %v1765 = vpop.f32.mrb[0].mxu0
      %1766 = vmatprep.mubr.f32.mxu0 0.0
      %1767 = vmatmul.mubr.f32.gmra.mrb[0].mxu0 %v1689
      %v1768 = vpop.f32.mrb[0].mxu0
      %v1769 = vadd.f32 %v1683, %v1768
      %v1770 = vpop.f32.mrb[0].mxu0
      %1771 = vmatprep.mubr.f32.mxu0 0.0
      %1772 = vmatmul.mubr.f32.gmra.mrb[0].mxu0 %v1692
      %v1773 = vpop.f32.mrb[0].mxu0
      %v1774 = vadd.f32 %v1683, %v1773
      %v1775 = vpop.f32.mrb[0].mxu0
      %1776 = vmatprep.mubr.f32.mxu0 0.0
      %1777 = vmatmul.mubr.f32.gmra.mrb[0].mxu0 %v1695
      %v1778 = vpop.f32.mrb[0].mxu0
      %v1779 = vadd.f32 %v1683, %v1778
      %v1780 = vpop.f32.mrb[0].mxu0
      %1781 = vdwg.mxu0
      %v1782 = vld [vmem:[%s9] sm:$0xff]
      %v1783 = vld [vmem:[%s9 + $0x8] sm:$0xff]
      %v1784 = vld [vmem:[%s9 + $0x10] sm:$0xff]
      %v1785 = vld [vmem:[%s9 + $0x18] sm:$0xff]
      %v1786 = vld [vmem:[%s10] sm:$0x1]
      %v1788 = vlaneseq
      %v1789 = vshrl.u32 %v1788, 7
      %v1790 = vsub.s32 0, %v1789
      %v1791 = vrot.slane %v1786, %v1790
      %1793 = vmatprep.subr.mxu0 0.0
      %1794 = vmatpush1.msra.mxu0 %v1782
      %1795 = vmatprep.subr.mxu0 0.0
      %1796 = vmatpush1.msra.mxu0 %v1783
      %1797 = vmatprep.subr.mxu0 0.0
      %1798 = vmatpush1.msra.mxu0 %v1784
      %1799 = vmatprep.subr.mxu0 0.0
      %1800 = vmatpush1.msra.mxu0 %v1785
      %1801 = vmatprep.subr.mxu0 0.0
      %1802 = vmatpush1.msra.mxu0 0.0
      %1803 = vmatprep.subr.mxu0 0.0
      %1804 = vmatpush1.msra.mxu0 0.0
      %1805 = vmatprep.subr.mxu0 0.0
      %1806 = vmatpush1.msra.mxu0 0.0
      %1807 = vmatprep.subr.mxu0 0.0
      %1808 = vmatpush1.msra.mxu0 0.0
      %1809 = vmatprep.subr.mxu0 0.0
      %1810 = vmatpush1.msra.mxu0 0.0
      %1811 = vmatprep.subr.mxu0 0.0
      %1812 = vmatpush1.msra.mxu0 0.0
      %1813 = vmatprep.subr.mxu0 0.0
      %1814 = vmatpush1.msra.mxu0 0.0
      %1815 = vmatprep.subr.mxu0 0.0
      %1816 = vmatpush1.msra.mxu0 0.0
      %1817 = vmatprep.subr.mxu0 0.0
      %1818 = vmatpush1.msra.mxu0 0.0
      %1819 = vmatprep.subr.mxu0 0.0
      %1820 = vmatpush1.msra.mxu0 0.0
      %1821 = vmatprep.subr.mxu0 0.0
      %1822 = vmatpush1.msra.mxu0 0.0
      %1823 = vmatprep.subr.mxu0 0.0
      %1824 = vmatpush1.msra.mxu0 0.0
      %1825 = vmatprep.subr.mxu0 0.0
      %1826 = vmatpush1.msra.mxu0 0.0
      %1827 = vmatprep.subr.mxu0 0.0
      %1828 = vmatpush1.msra.mxu0 0.0
      %1829 = vmatprep.subr.mxu0 0.0
      %1830 = vmatpush1.msra.mxu0 0.0
      %1831 = vmatprep.subr.mxu0 0.0
      %1832 = vmatpush1.msra.mxu0 0.0
      %1833 = vmatprep.subr.mxu0 0.0
      %1834 = vmatpush1.msra.mxu0 0.0
      %1835 = vmatprep.subr.mxu0 0.0
      %1836 = vmatpush1.msra.mxu0 0.0
      %1837 = vmatprep.subr.mxu0 0.0
      %1838 = vmatpush1.msra.mxu0 0.0
      %1839 = vmatprep.subr.mxu0 0.0
      %1840 = vmatpush1.msra.mxu0 0.0
      %1841 = vmatprep.subr.mxu0 0.0
      %1842 = vmatpush1.msra.mxu0 0.0
      %1843 = vmatprep.subr.mxu0 0.0
      %1844 = vmatpush1.msra.mxu0 0.0
      %1845 = vmatprep.subr.mxu0 0.0
      %1846 = vmatpush1.msra.mxu0 0.0
      %1847 = vmatprep.subr.mxu0 0.0
      %1848 = vmatpush1.msra.mxu0 0.0
      %1849 = vmatprep.subr.mxu0 0.0
      %1850 = vmatpush1.msra.mxu0 0.0
      %1851 = vmatprep.subr.mxu0 0.0
      %1852 = vmatpush1.msra.mxu0 0.0
      %1853 = vmatprep.subr.mxu0 0.0
      %1854 = vmatpush1.msra.mxu0 0.0
      %1855 = vmatprep.subr.mxu0 0.0
      %1856 = vmatpush1.msra.mxu0 0.0
      %1857 = vmatprep.mubr.f32.mxu0 0.0
      %1858 = vmatmul.mubr.f32.gmra.mrb[0].mxu0 %v1686
      %v1859 = vpop.f32.mrb[0].mxu0
      %v1860 = vadd.f32 %v1791, %v1859
      %v1861 = vpop.f32.mrb[0].mxu0
      %1862 = vmatprep.mubr.f32.mxu0 0.0
      %1863 = vmatmul.mubr.f32.gmra.mrb[0].mxu0 %v1689
      %v1864 = vpop.f32.mrb[0].mxu0
      %v1865 = vadd.f32 %v1791, %v1864
      %v1866 = vpop.f32.mrb[0].mxu0
      %1867 = vmatprep.mubr.f32.mxu0 0.0
      %1868 = vmatmul.mubr.f32.gmra.mrb[0].mxu0 %v1692
      %v1869 = vpop.f32.mrb[0].mxu0
      %v1870 = vadd.f32 %v1791, %v1869
      %v1871 = vpop.f32.mrb[0].mxu0
      %1872 = vmatprep.mubr.f32.mxu0 0.0
      %1873 = vmatmul.mubr.f32.gmra.mrb[0].mxu0 %v1695
      %v1874 = vpop.f32.mrb[0].mxu0
      %v1875 = vadd.f32 %v1791, %v1874
      %v1876 = vpop.f32.mrb[0].mxu0
      %1877 = vdwg.mxu0
      %v1878 = vadd.f32 %v524, %v1764
      %v1879 = vadd.f32 %v525, %v1769
      %v1880 = vadd.f32 %v526, %v1774
      %v1881 = vadd.f32 %v527, %v1779
      %1882 = vst.msk [vmem:[%s505] sm:$0xff] %vm532, %v1878
      %1883 = vst.msk [vmem:[%s505 + $0x8] sm:$0xff] %vm532, %v1879
      %1884 = vst.msk [vmem:[%s505 + $0x10] sm:$0xff] %vm532, %v1880
      %1885 = vst.msk [vmem:[%s505 + $0x18] sm:$0xff] %vm532, %v1881
      %v1886 = vmul.f32 %v1860, %v612
      %v1887 = vmul.f32 %v1865, %v617
      %v1888 = vmul.f32 %v1870, %v622
      %v1889 = vmul.f32 %v1875, %v627
      %v1890 = vadd.f32 %v528, %v1886
      %v1891 = vadd.f32 %v529, %v1887
      %v1892 = vadd.f32 %v530, %v1888
      %v1893 = vadd.f32 %v531, %v1889
      %v1894 = vmul.f32 %v1860, %v721
      %v1895 = vmul.f32 %v1865, %v726
      %v1896 = vmul.f32 %v1870, %v731
      %v1897 = vmul.f32 %v1875, %v736
      %1902 = vrot.lane.b32.xlu0 %v1894, 32
      %v1903 = vpop.permute.xlu0 %1902
      %1904 = vrot.lane.b32.xlu0 %v1895, 32
      %v1905 = vpop.permute.xlu0 %1904
      %1906 = vrot.lane.b32.xlu0 %v1896, 32
      %v1907 = vpop.permute.xlu0 %1906
      %1908 = vrot.lane.b32.xlu0 %v1897, 32
      %v1909 = vpop.permute.xlu0 %1908
      %v1914 = vadd.f32 %v528, %v1903
      %v1915 = vadd.f32 %v529, %v1905
      %v1916 = vadd.f32 %v530, %v1907
      %v1917 = vadd.f32 %v531, %v1909
      %v1918 = vmul.f32 %v1860, %v830
      %v1919 = vmul.f32 %v1865, %v835
      %v1920 = vmul.f32 %v1870, %v840
      %v1921 = vmul.f32 %v1875, %v845
      %1926 = vrot.lane.b32.xlu0 %v1918, 64
      %v1927 = vpop.permute.xlu0 %1926
      %1928 = vrot.lane.b32.xlu0 %v1919, 64
      %v1929 = vpop.permute.xlu0 %1928
      %1930 = vrot.lane.b32.xlu0 %v1920, 64
      %v1931 = vpop.permute.xlu0 %1930
      %1932 = vrot.lane.b32.xlu0 %v1921, 64
      %v1933 = vpop.permute.xlu0 %1932
      %v1938 = vadd.f32 %v528, %v1927
      %v1939 = vadd.f32 %v529, %v1929
      %v1940 = vadd.f32 %v530, %v1931
      %v1941 = vadd.f32 %v531, %v1933
      %v1942 = vsel %vm532, %v1890, %v1914
      %v1943 = vsel %vm532, %v1891, %v1915
      %v1944 = vsel %vm532, %v1892, %v1916
      %v1945 = vsel %vm532, %v1893, %v1917
      %vm1946 = vcmask 523264
      %v1947 = vsel %vm1946, %v1942, %v1938
      %v1948 = vsel %vm1946, %v1943, %v1939
      %v1949 = vsel %vm1946, %v1944, %v1940
      %v1950 = vsel %vm1946, %v1945, %v1941
      %vm1951 = vcmask 785408
      %1952 = vst.msk [vmem:[%s511] sm:$0xff] %vm1951, %v1947
      %1953 = vst.msk [vmem:[%s511 + $0x8] sm:$0xff] %vm1951, %v1948
      %1954 = vst.msk [vmem:[%s511 + $0x10] sm:$0xff] %vm1951, %v1949
      %1955 = vst.msk [vmem:[%s511 + $0x18] sm:$0xff] %vm1951, %v1950
      %v1956 = vmul.f32 %v1860, %v943
      %v1957 = vmul.f32 %v1865, %v948
      %v1958 = vmul.f32 %v1870, %v953
      %v1959 = vmul.f32 %v1875, %v958
      %v1960 = vadd.f32 %v856, %v1956
      %v1961 = vadd.f32 %v858, %v1957
      %v1962 = vadd.f32 %v860, %v1958
      %v1963 = vadd.f32 %v862, %v1959
      %v1964 = vmul.f32 %v1860, %v1052
      %v1965 = vmul.f32 %v1865, %v1057
      %v1966 = vmul.f32 %v1870, %v1062
      %v1967 = vmul.f32 %v1875, %v1067
      %1972 = vrot.lane.b32.xlu0 %v1964, 32
      %v1973 = vpop.permute.xlu0 %1972
      %1974 = vrot.lane.b32.xlu0 %v1965, 32
      %v1975 = vpop.permute.xlu0 %1974
      %1976 = vrot.lane.b32.xlu0 %v1966, 32
      %v1977 = vpop.permute.xlu0 %1976
      %1978 = vrot.lane.b32.xlu0 %v1967, 32
      %v1979 = vpop.permute.xlu0 %1978
      %v1984 = vadd.f32 %v856, %v1973
      %v1985 = vadd.f32 %v858, %v1975
      %v1986 = vadd.f32 %v860, %v1977
      %v1987 = vadd.f32 %v862, %v1979
      %v1988 = vmul.f32 %v1860, %v1161
      %v1989 = vmul.f32 %v1865, %v1166
      %v1990 = vmul.f32 %v1870, %v1171
      %v1991 = vmul.f32 %v1875, %v1176
      %1996 = vrot.lane.b32.xlu0 %v1988, 64
      %v1997 = vpop.permute.xlu0 %1996
      %1998 = vrot.lane.b32.xlu0 %v1989, 64
      %v1999 = vpop.permute.xlu0 %1998
      %2000 = vrot.lane.b32.xlu0 %v1990, 64
      %v2001 = vpop.permute.xlu0 %2000
      %2002 = vrot.lane.b32.xlu0 %v1991, 64
      %v2003 = vpop.permute.xlu0 %2002
      %v2008 = vadd.f32 %v856, %v1997
      %v2009 = vadd.f32 %v858, %v1999
      %v2010 = vadd.f32 %v860, %v2001
      %v2011 = vadd.f32 %v862, %v2003
      %v2012 = vmul.f32 %v1860, %v1270
      %v2013 = vmul.f32 %v1865, %v1275
      %v2014 = vmul.f32 %v1870, %v1280
      %v2015 = vmul.f32 %v1875, %v1285
      %2020 = vrot.lane.b32.xlu0 %v2012, 96
      %v2021 = vpop.permute.xlu0 %2020
      %2022 = vrot.lane.b32.xlu0 %v2013, 96
      %v2023 = vpop.permute.xlu0 %2022
      %2024 = vrot.lane.b32.xlu0 %v2014, 96
      %v2025 = vpop.permute.xlu0 %2024
      %2026 = vrot.lane.b32.xlu0 %v2015, 96
      %v2027 = vpop.permute.xlu0 %2026
      %v2032 = vadd.f32 %v856, %v2021
      %v2033 = vadd.f32 %v858, %v2023
      %v2034 = vadd.f32 %v860, %v2025
      %v2035 = vadd.f32 %v862, %v2027
      %v2036 = vmul.f32 %v1860, %v1375
      %v2037 = vmul.f32 %v1865, %v1380
      %v2038 = vmul.f32 %v1870, %v1385
      %v2039 = vmul.f32 %v1875, %v1390
      %v2040 = vadd.f32 %v857, %v2036
      %v2041 = vadd.f32 %v859, %v2037
      %v2042 = vadd.f32 %v861, %v2038
      %v2043 = vadd.f32 %v863, %v2039
      %v2044 = vsel %vm532, %v1960, %v1984
      %v2045 = vsel %vm532, %v1961, %v1985
      %v2046 = vsel %vm532, %v1962, %v1986
      %v2047 = vsel %vm532, %v1963, %v1987
      %v2048 = vsel %vm1946, %v2044, %v2008
      %v2049 = vsel %vm1946, %v2045, %v2009
      %v2050 = vsel %vm1946, %v2046, %v2010
      %v2051 = vsel %vm1946, %v2047, %v2011
      %v2052 = vsel %vm1951, %v2048, %v2032
      %v2053 = vsel %vm1951, %v2049, %v2033
      %v2054 = vsel %vm1951, %v2050, %v2034
      %v2055 = vsel %vm1951, %v2051, %v2035
      %2056 = vst [vmem:[%s518] sm:$0xff] %v2052
      %2057 = vst.msk [vmem:[%s518 + $0x8] sm:$0xff] %vm532, %v2040
      %2058 = vst [vmem:[%s518 + $0x10] sm:$0xff] %v2053
      %2059 = vst.msk [vmem:[%s518 + $0x18] sm:$0xff] %vm532, %v2041
      %2060 = vst [vmem:[%s518 + $0x20] sm:$0xff] %v2054
      %2061 = vst.msk [vmem:[%s518 + $0x28] sm:$0xff] %vm532, %v2042
      %2062 = vst [vmem:[%s518 + $0x30] sm:$0xff] %v2055
      %2063 = vst.msk [vmem:[%s518 + $0x38] sm:$0xff] %vm532, %v2043
      %s2064 = smul.u32 4, %s25
      %p2065 = scmp.lt.s32.totalorder %s2064, 15
      %s2066 = scalar_select %p2065, %s2064, 15
      %s2067 = smul.addr %s2066, 8
      %s2068 = scalar_lea.vmem %s11, %s2067
      %s2069 = smul.u32 4, %s25
      %p2070 = scmp.lt.s32.totalorder %s2069, 15
      %s2071 = scalar_select %p2070, %s2069, 15
      %s2072 = smul.addr %s2071, 8
      %s2073 = scalar_lea.vmem %s12, %s2072
      %s2074 = smul.u32 4, %s25
      %p2075 = scmp.lt.s32.totalorder %s2074, 15
      %s2076 = scalar_select %p2075, %s2074, 15
      %s2077 = smul.addr %s2076, 2
      %s2078 = smul.addr %s2077, 8
      %s2079 = scalar_lea.vmem %s13, %s2078
      // Predicated region
      $region65: #{tpu_custom_call.1} parent=63 // pred_check
        %p2080 = pneg %p289
      $region66: #{tpu_custom_call.1} parent=63 // pred_check_branch
        %2082 = sbr.rel (%p2080) target = $region68
      $region67: #{tpu_custom_call.1} parent=63 // pred_region
        %s2083 = smul.u32 4, %s25
      $region68: #{tpu_custom_call.1} parent=63 // pred_fallthru
        _
      // Predicated region
      $region69: #{tpu_custom_call.1} parent=63 // pred_check
        %p2084 = pneg %p315
      $region70: #{tpu_custom_call.1} parent=63 // pred_check_branch
        %2086 = sbr.rel (%p2084) target = $region72
      $region71: #{tpu_custom_call.1} parent=63 // pred_region
        %s2087 = smul.u32 4, %s25
      $region72: #{tpu_custom_call.1} parent=63 // pred_fallthru
        _
      // Predicated region
      $region73: #{tpu_custom_call.1} parent=63 // pred_check
        %p2088 = pneg %p341
      $region74: #{tpu_custom_call.1} parent=63 // pred_check_branch
        %2090 = sbr.rel (%p2088) target = $region76
      $region75: #{tpu_custom_call.1} parent=63 // pred_region
        %s2091 = smul.u32 4, %s25
      $region76: #{tpu_custom_call.1} parent=63 // pred_fallthru
        _
    $region64: #{tpu_custom_call.1} parent=5 // pred_fallthru
      _
    %p2092 = scmp.le.s32.totalorder 2, %s20
    // Predicated region
    $region77: #{tpu_custom_call.1} parent=5 // pred_check
      %p2093 = pneg %p2092
    $region78: #{tpu_custom_call.1} parent=5 // pred_check_branch
      %2095 = sbr.rel (%p2093) target = $region80
    $region79: #{tpu_custom_call.1} parent=5 // pred_region
      %s2096 = ssub.s32 %s20, 2
      // Predicated region
      $region81: #{tpu_custom_call.1} parent=79 // pred_check
        %p2097 = pneg %p295
      $region82: #{tpu_custom_call.1} parent=79 // pred_check_branch
        %2099 = sbr.rel (%p2097) target = $region84
      $region83: #{tpu_custom_call.1} parent=79 // pred_region
        %s2100 = smul.u32 4, %s26
        %p2101 = scmp.lt.s32.totalorder %s2100, 15
        %s2102 = scalar_select %p2101, %s2100, 15
        %s2103 = smul.addr %s2102, 8
        %s2104 = scalar_lea.vmem %s11, %s2103
      $region84: #{tpu_custom_call.1} parent=79 // pred_fallthru
        _
      // Predicated region
      $region85: #{tpu_custom_call.1} parent=79 // pred_check
        %p2105 = pneg %p321
      $region86: #{tpu_custom_call.1} parent=79 // pred_check_branch
        %2107 = sbr.rel (%p2105) target = $region88
      $region87: #{tpu_custom_call.1} parent=79 // pred_region
        %s2108 = smul.u32 4, %s26
        %p2109 = scmp.lt.s32.totalorder %s2108, 15
        %s2110 = scalar_select %p2109, %s2108, 15
        %s2111 = smul.addr %s2110, 8
        %s2112 = scalar_lea.vmem %s12, %s2111
      $region88: #{tpu_custom_call.1} parent=79 // pred_fallthru
        _
      // Predicated region
      $region89: #{tpu_custom_call.1} parent=79 // pred_check
        %p2113 = pneg %p347
      $region90: #{tpu_custom_call.1} parent=79 // pred_check_branch
        %2115 = sbr.rel (%p2113) target = $region92
      $region91: #{tpu_custom_call.1} parent=79 // pred_region
        %s2116 = smul.u32 4, %s26
        %p2117 = scmp.lt.s32.totalorder %s2116, 15
        %s2118 = scalar_select %p2117, %s2116, 15
        %s2119 = smul.addr %s2118, 2
        %s2120 = smul.addr %s2119, 8
        %s2121 = scalar_lea.vmem %s13, %s2120
      $region92: #{tpu_custom_call.1} parent=79 // pred_fallthru
        _
    $region80: #{tpu_custom_call.1} parent=5 // pred_fallthru
      _
  $region6: #{tpu_custom_call.1} parent=0 // loop_footer
    %s24 = sadd.s32 1, %s20
  $region7: #{tpu_custom_call.1} parent=0 // loop_footer_branch
    %19 = sbr.rel target = $region3
  $region8: #{tpu_custom_call.1} parent=0 // loop_exit
    _

</llo_original>
